<compile_context>
chip_gen: v7x
topology: tpu7x:2x2x1
jax: 0.10.0
libtpu: 0.0.40
codegen_flags: <defaults>
</compile_context>

<pallas_src>
import functools

import jax
import jax.numpy as jnp
from jax import lax
from jax.experimental import pallas as pl
from jax.experimental.pallas import tpu as pltpu


# ----------------------------------------------------------------------------- tiling

def _round_up(v, m):
    return -(-v // m) * m


def _pick_tile(dim, preferred, align):
    """Largest tile <= preferred that divides dim and is a multiple of align;
    full dim if dim is small (or no aligned divisor exists)."""
    if dim <= preferred:
        return dim
    t = (preferred // align) * align
    while t >= align:
        if dim % t == 0:
            return t
        t -= align
    return dim


def _choose_group(n, pad_hw, kdim, target=256):
    """Images packed per grid step (matmul M = gp * pad_hw).

    Smallest divisor of n whose packed M reaches `target` rows (fills the MXU M
    dimension: >=128 on v5e, >=256 on v6e/v7x), capped so the double-buffered
    bf16 patch tile stays within ~12 MiB of VMEM."""
    row_cap = max(pad_hw, (12 << 20) // max(4 * kdim, 1))
    best = 1
    for g in range(1, n + 1):
        if n % g:
            continue
        if g * pad_hw > row_cap:
            break
        best = g
        if g * pad_hw >= target:
            break
    return best


# ----------------------------------------------------------------------------- kernel

def _conv_bn_kernel(*refs, relu, has_res, has_ds, reduce_mean, gp, pad_hw, hw):
    """Fused (patches @ W)*scale + bias [+ 1x1-downsample branch] [+ residual]
    [+ ReLU] [+ per-image global spatial mean].

    grid = (cout_tiles, image_groups).  There is no reduction grid axis: the whole
    K = kk*kk*Cin contraction is a single MXU matmul (bf16 operands, f32 accum),
    so there is no VMEM accumulator and no pl.when init/finalize.

    refs: x [tm, K], w [K, tn], scale [1, tn], bias [1, tn],
          [residual [tm, tn]], [ds_x [tm, Cd], wd [Cd, tn], sd [1, tn], bd [1, tn]],
          out [tm, tn]  (or [1, gp, tn] when reduce_mean).
    """
    it = iter(refs)
    x_ref, w_ref, s_ref, b_ref = next(it), next(it), next(it), next(it)
    r_ref = next(it) if has_res else None
    if has_ds:
        dsx_ref, wd_ref, sd_ref, bd_ref = next(it), next(it), next(it), next(it)
    o_ref = next(it)

    y = jnp.dot(x_ref[...], w_ref[...], preferred_element_type=jnp.float32)
    y = y * s_ref[...] + b_ref[...]
    if has_ds:  # fused 1x1 stride-2 downsample projection (+ its folded BN)
        ds = jnp.dot(dsx_ref[...], wd_ref[...], preferred_element_type=jnp.float32)
        y = y + (ds * sd_ref[...] + bd_ref[...])
    if has_res:
        y = y + r_ref[...].astype(jnp.float32)
    if relu:
        y = jnp.maximum(y, 0.0)

    if reduce_mean:
        tn = y.shape[-1]
        y = y.reshape(gp, pad_hw, tn)        # pad_hw is a multiple of 8 -> cheap
        if pad_hw != hw:                      # zero the per-image padding rows
            row = lax.broadcasted_iota(jnp.int32, (1, pad_hw, tn), 1)
            y = jnp.where(row < hw, y, 0.0)
        mean = jnp.sum(y, axis=1) * (1.0 / hw)                    # [gp, tn]
        o_ref[...] = mean.reshape(o_ref.shape).astype(o_ref.dtype)
    else:
        o_ref[...] = y.astype(o_ref.dtype)


# ----------------------------------------------------------------------------- wrapper

def _extract_patches(x, kk, stride):
    """x: [N, H, W, C] -> patches [N, Ho, Wo, kk*kk*C] ('same' padding for 3x3,
    none for 1x1).  K ordering is (kh, kw, cin), matching w.reshape(kk*kk*C, Cout)."""
    n, h, w, c = x.shape
    pad = (kk - 1) // 2
    if pad:
        x = jnp.pad(x, ((0, 0), (pad, pad), (pad, pad), (0, 0)))
    hp, wp = h + 2 * pad, w + 2 * pad
    ho = (hp - kk) // stride + 1
    wo = (wp - kk) // stride + 1
    taps = []
    for kh in range(kk):
        for kw in range(kk):
            taps.append(x[:, kh:kh + (ho - 1) * stride + 1:stride,
                          kw:kw + (wo - 1) * stride + 1:stride, :])
    return jnp.concatenate(taps, axis=-1), ho, wo


def _pad_and_flatten(a, pad_hw):
    """[N, hw, C] -> [N*pad_hw, C], zero-padding each image's rows up to pad_hw."""
    n, hw, c = a.shape
    if pad_hw != hw:
        a = jnp.pad(a, ((0, 0), (0, pad_hw - hw), (0, 0)))
    return a.reshape(n * pad_hw, c)


def conv_bn(x, w_hwio, scale, bias, *, stride=1, relu=True, residual=None,
            downsample=None, reduce_mean=False, out_dtype=jnp.bfloat16):
    """y = relu?( conv(x, w)*scale + bias [+ conv1x1(ds_x, wd)*sd + bd] [+ residual] ).

    x: [N, H, W, Cin]; w_hwio: [kk, kk, Cin, Cout]; 'same' padding for 3x3.
    downsample = (ds_x [N, Ho, Wo, Cd], wd [1, 1, Cd, Cout], sd, bd) computes the
    stride-2 1x1 projection branch inside this kernel's epilogue (no extra
    pallas_call / HBM round-trip).  reduce_mean fuses the per-image global spatial
    mean and returns [N, Cout] f32 instead of the [N, Ho, Wo, Cout] bf16 map.
    """
    n = x.shape[0]
    cin = x.shape[-1]
    kk = int(w_hwio.shape[0])
    cout = int(w_hwio.shape[-1])
    kdim = kk * kk * cin

    patches, ho, wo = _extract_patches(x.astype(jnp.bfloat16), kk, stride)
    hw = ho * wo
    pad_hw = _round_up(hw, 8)                     # sublane-aligned rows per image
    x_flat = _pad_and_flatten(patches.reshape(n, hw, kdim), pad_hw)

    w_flat = w_hwio.reshape(kdim, cout).astype(jnp.bfloat16)
    scale2 = scale.reshape(1, cout).astype(jnp.float32)
    bias2 = bias.reshape(1, cout).astype(jnp.float32)
    args = [x_flat, w_flat, scale2, bias2]

    # Tiling: M = gp*pad_hw packed images per grid step, lane-dense Cout tiles,
    # the whole K contraction in one matmul (true nk==1 for every layer4 conv).
    gp = _choose_group(n, pad_hw, kdim)
    tm = gp * pad_hw
    if reduce_mean:
        tn = _pick_tile(cout, 256, 128)   # >=2 Cout tiles at real layer4 (v7x 2 TCs)
    else:
        tn = cout if kdim * cout * 2 <= (8 << 20) else _pick_tile(cout, 256, 128)
    n_groups = n // gp
    grid = (cout // tn, n_groups)         # image axis innermost -> weights stay resident

    in_specs = [
        pl.BlockSpec((tm, kdim), lambda j, i: (i, 0)),     # patch slab
        pl.BlockSpec((kdim, tn), lambda j, i: (0, j)),     # weights (image-invariant)
        pl.BlockSpec((1, tn), lambda j, i: (0, j)),        # folded-BN scale
        pl.BlockSpec((1, tn), lambda j, i: (0, j)),        # folded-BN bias
    ]

    if residual is not None:
        args.append(_pad_and_flatten(
            residual.reshape(n, hw, cout).astype(jnp.bfloat16), pad_hw))
        in_specs.append(pl.BlockSpec((tm, tn), lambda j, i: (i, j)))

    ds_cin = 0
    if downsample is not None:
        ds_x, wd, sd, bd = downsample
        ds_cin = int(wd.shape[2])
        args += [
            _pad_and_flatten(ds_x.reshape(n, hw, ds_cin).astype(jnp.bfloat16), pad_hw),
            wd.reshape(ds_cin, cout).astype(jnp.bfloat16),
            sd.reshape(1, cout).astype(jnp.float32),
            bd.reshape(1, cout).astype(jnp.float32),
        ]
        in_specs += [
            pl.BlockSpec((tm, ds_cin), lambda j, i: (i, 0)),
            pl.BlockSpec((ds_cin, tn), lambda j, i: (0, j)),
            pl.BlockSpec((1, tn), lambda j, i: (0, j)),
            pl.BlockSpec((1, tn), lambda j, i: (0, j)),
        ]

    if reduce_mean:
        # Per-image-group output block (disjoint across the grid) -> no revisiting,
        # both grid axes stay "parallel" (v7x two-TensorCore sharding is safe).
        out_shape = jax.ShapeDtypeStruct((n_groups, gp, cout), jnp.float32)
        out_spec = pl.BlockSpec((1, gp, tn), lambda j, i: (i, 0, j))
    else:
        out_shape = jax.ShapeDtypeStruct((n * pad_hw, cout), out_dtype)
        out_spec = pl.BlockSpec((tm, tn), lambda j, i: (i, j))

    # VMEM budget: double-buffered bf16 input blocks + output blocks + f32 epilogue,
    # clamped to 48 MiB so it always fits v7x's 64 MiB physical VMEM while raising
    # the 16/32 MiB scoped defaults on v5e/v6e.
    est = 4 * (tm * kdim + kdim * tn
               + (tm * tn if residual is not None else 0)
               + tm * ds_cin + ds_cin * tn)
    est += 2 * (gp * tn * 4 if reduce_mean else tm * tn * 2)
    est += 3 * tm * tn * 4 + (4 << 20)
    vmem_limit = int(min(max(est, 32 << 20), 48 << 20))

    kernel = functools.partial(
        _conv_bn_kernel, relu=relu, has_res=residual is not None,
        has_ds=downsample is not None, reduce_mean=reduce_mean,
        gp=gp, pad_hw=pad_hw, hw=hw)

    out = pl.pallas_call(
        kernel,
        out_shape=out_shape,
        grid=grid,
        in_specs=in_specs,
        out_specs=out_spec,
        compiler_params=pltpu.CompilerParams(
            dimension_semantics=("parallel", "parallel"),
            vmem_limit_bytes=vmem_limit),
    )(*args)

    if reduce_mean:
        return out.reshape(n, cout)
    return out.reshape(n, pad_hw, cout)[:, :hw, :].reshape(n, ho, wo, cout)


# ----------------------------------------------------------------------------- module

def _fold_bn(gamma, beta, mean, var, eps=1e-5):
    scale = gamma / jnp.sqrt(var + eps)
    bias = beta - mean * scale
    return scale, bias


def _init_bn(key, c):
    k1, k2, k3, k4 = jax.random.split(key, 4)
    gamma = 1.0 + 0.1 * jax.random.normal(k1, (c,), jnp.float32)
    beta = 0.1 * jax.random.normal(k2, (c,), jnp.float32)
    mean = 0.1 * jax.random.normal(k3, (c,), jnp.float32)
    var = jax.random.uniform(k4, (c,), jnp.float32, 0.5, 1.5)
    return _fold_bn(gamma, beta, mean, var)


def init_layer4_params(key, c_in, c_out):
    keys = jax.random.split(key, 10)

    def conv_w(k, kh, kw, ci, co):
        std = (2.0 / (kh * kw * ci)) ** 0.5
        return std * jax.random.normal(k, (kh, kw, ci, co), jnp.float32)

    b1_s1, b1_b1 = _init_bn(keys[1], c_out)
    b1_s2, b1_b2 = _init_bn(keys[3], c_out)
    b1_sd, b1_bd = _init_bn(keys[5], c_out)
    b2_s1, b2_b1 = _init_bn(keys[7], c_out)
    b2_s2, b2_b2 = _init_bn(keys[9], c_out)
    return {
        "block1": {
            "w1": conv_w(keys[0], 3, 3, c_in, c_out), "s1": b1_s1, "b1": b1_b1,
            "w2": conv_w(keys[2], 3, 3, c_out, c_out), "s2": b1_s2, "b2": b1_b2,
            "wd": conv_w(keys[4], 1, 1, c_in, c_out), "sd": b1_sd, "bd": b1_bd,
        },
        "block2": {
            "w1": conv_w(keys[6], 3, 3, c_out, c_out), "s1": b2_s1, "b1": b2_b1,
            "w2": conv_w(keys[8], 3, 3, c_out, c_out), "s2": b2_s2, "b2": b2_b2,
        },
    }


def _basic_block1(x, p):
    """torchvision layer4[0]: conv3x3 s2+BN+ReLU, conv3x3+BN, downsample 1x1 s2+BN
    (fused into conv2's epilogue), add, ReLU."""
    y1 = conv_bn(x, p["w1"], p["s1"], p["b1"], stride=2, relu=True)
    ho, wo = y1.shape[1], y1.shape[2]
    x_ds = x[:, ::2, ::2, :][:, :ho, :wo, :]          # 1x1 stride-2 sampling grid
    return conv_bn(y1, p["w2"], p["s2"], p["b2"], stride=1, relu=True,
                   downsample=(x_ds, p["wd"], p["sd"], p["bd"]))


@jax.jit
def pool_to_feature_vector(rois_nchw, params):
    """Forward of PoolToFeatureVector: layer4(rois) then spatial mean -> [N, C_out]."""
    x = jnp.transpose(rois_nchw, (0, 2, 3, 1))        # NCHW -> NHWC
    y2 = _basic_block1(x, params["block1"])
    p2 = params["block2"]
    y3 = conv_bn(y2, p2["w1"], p2["s1"], p2["b1"], stride=1, relu=True)
    # block2 conv2 + BN + residual + ReLU + global spatial mean fused in one kernel:
    # the final [N, Ho, Wo, C] activation never touches HBM.
    return conv_bn(y3, p2["w2"], p2["s2"], p2["b2"], stride=1, relu=True,
                   residual=y2, reduce_mean=True)


# ----------------------------------------------------------------------------- reference

def _rt_bf16(v):
    """Round-trip through bf16 (mirrors the kernels' bf16 operands / activations)."""
    return v.astype(jnp.bfloat16).astype(jnp.float32)


def _ref_conv(x, w_hwio, stride, padding):
    return jax.lax.conv_general_dilated(
        _rt_bf16(x), _rt_bf16(w_hwio), (stride, stride), padding,
        dimension_numbers=("NHWC", "HWIO", "NHWC"),
        precision=jax.lax.Precision.HIGHEST)


def _ref_forward(rois_nchw, params):
    x = jnp.transpose(rois_nchw, (0, 2, 3, 1)).astype(jnp.float32)
    p1, p2 = params["block1"], params["block2"]

    y1 = jnp.maximum(
        _ref_conv(x, p1["w1"], 2, [(1, 1), (1, 1)]) * p1["s1"] + p1["b1"], 0.0)
    y1 = _rt_bf16(y1)
    # downsample branch is fused (kept in f32 inside the kernel epilogue)
    idn = _ref_conv(x, p1["wd"], 2, [(0, 0), (0, 0)]) * p1["sd"] + p1["bd"]
    y2 = jnp.maximum(
        _ref_conv(y1, p1["w2"], 1, [(1, 1), (1, 1)]) * p1["s2"] + p1["b2"] + idn, 0.0)
    y2 = _rt_bf16(y2)
    y3 = jnp.maximum(
        _ref_conv(y2, p2["w1"], 1, [(1, 1), (1, 1)]) * p2["s1"] + p2["b1"], 0.0)
    y3 = _rt_bf16(y3)
    y4 = jnp.maximum(
        _ref_conv(y3, p2["w2"], 1, [(1, 1), (1, 1)]) * p2["s2"] + p2["b2"] + y2, 0.0)
    return y4.mean(axis=(1, 2))


# ----------------------------------------------------------------------------- main

if __name__ == "__main__":
    key = jax.random.PRNGKey(0)
    k_x, k_p = jax.random.split(key)

    N, C_IN, H, W = 4, 32, 6, 6     # rois in NCHW, like the PyTorch module's input
    C_OUT = 128                     # layer4 output channels (small but lane-dense)
    # H=W=6 -> 3x3 feature maps (hw=9, padded to 16 rows) so the per-image row
    # padding / masked-mean path is actually exercised.

    rois = jax.random.normal(k_x, (N, C_IN, H, W), jnp.float32)
    params = init_layer4_params(k_p, C_IN, C_OUT)

    out = pool_to_feature_vector(rois, params)
    out = jax.block_until_ready(out)

    ref = _ref_forward(rois, params)
    assert out.shape == (N, C_OUT), out.shape
    max_err = float(jnp.max(jnp.abs(out - ref)))
    assert jnp.allclose(out, ref, atol=5e-3, rtol=5e-3), (
        f"mismatch vs JAX reference, max abs err = {max_err}")

    print("KERNEL_OK")
</pallas_src>

<mosaic_0001>
module attributes {stable_mosaic.version = 11 : i64} {
  func.func @_conv_bn_kernel(%arg0: i32, %arg1: i32, %arg2: memref<64x288xbf16, #tpu.memory_space<vmem>>, %arg3: memref<288x128xbf16, #tpu.memory_space<vmem>>, %arg4: memref<1x128xf32, #tpu.memory_space<vmem>>, %arg5: memref<1x128xf32, #tpu.memory_space<vmem>>, %arg6: memref<64x128xbf16, #tpu.memory_space<vmem>>) attributes {dimension_semantics = [#tpu.dimension_semantics<parallel>, #tpu.dimension_semantics<parallel>], iteration_bounds = array<i64: 1, 1>, scalar_prefetch = 0 : i64, scratch_operands = 0 : i64, tpu.core_type = #tpu.core_type<tc>, window_params = [{transform_indices = @transform_0, window_bounds = array<i64: 64, 288>}, {transform_indices = @transform_1, window_bounds = array<i64: 288, 128>}, {transform_indices = @transform_2, window_bounds = array<i64: 1, 128>}, {transform_indices = @transform_3, window_bounds = array<i64: 1, 128>}, {transform_indices = @transform_4, window_bounds = array<i64: 64, 128>}]} {
    %c0 = arith.constant 0 : index
    %c0_0 = arith.constant 0 : index
    %0 = vector.load %arg2[%c0, %c0_0] : memref<64x288xbf16, #tpu.memory_space<vmem>>, vector<64x288xbf16>
    %c0_1 = arith.constant 0 : index
    %c0_2 = arith.constant 0 : index
    %1 = vector.load %arg3[%c0_1, %c0_2] : memref<288x128xbf16, #tpu.memory_space<vmem>>, vector<288x128xbf16>
    %cst = arith.constant dense<0.000000e+00> : vector<64x128xf32>
    %2 = tpu.matmul %0, %1, %cst {dimension_numbers = #tpu.dot_dimension_numbers<[1], [0], [0], [1], [0, 0, 1, 1], [], []>} : vector<64x288xbf16>, vector<288x128xbf16>, vector<64x128xf32> -> vector<64x128xf32>
    %c0_3 = arith.constant 0 : index
    %c0_4 = arith.constant 0 : index
    %3 = vector.load %arg4[%c0_3, %c0_4] : memref<1x128xf32, #tpu.memory_space<vmem>>, vector<1x128xf32>
    %4 = vector.broadcast %3 : vector<1x128xf32> to vector<64x128xf32>
    %5 = arith.mulf %2, %4 : vector<64x128xf32>
    %c0_5 = arith.constant 0 : index
    %c0_6 = arith.constant 0 : index
    %6 = vector.load %arg5[%c0_5, %c0_6] : memref<1x128xf32, #tpu.memory_space<vmem>>, vector<1x128xf32>
    %7 = vector.broadcast %6 : vector<1x128xf32> to vector<64x128xf32>
    %8 = arith.addf %5, %7 : vector<64x128xf32>
    %cst_7 = arith.constant 0.000000e+00 : f32
    %9 = vector.broadcast %cst_7 : f32 to vector<64x128xf32>
    %10 = arith.maximumf %8, %9 : vector<64x128xf32>
    %11 = arith.truncf %10 : vector<64x128xf32> to vector<64x128xbf16>
    %c0_8 = arith.constant 0 : index
    %c0_9 = arith.constant 0 : index
    %12 = vector.load %arg6[%c0_8, %c0_9] : memref<64x128xbf16, #tpu.memory_space<vmem>>, vector<64x128xbf16>
    tpu.vector_store %arg6[%c0_8, %c0_9], %11 {strides = array<i32>} : memref<64x128xbf16, #tpu.memory_space<vmem>>, vector<64x128xbf16>,
    return
  }
  func.func @transform_0(%arg0: i32, %arg1: i32) -> (i32, i32) {
    %c0_i32 = arith.constant 0 : i32
    %c0_i32_0 = arith.constant 0 : i32
    return %arg1, %c0_i32 : i32, i32
  }
  func.func @transform_1(%arg0: i32, %arg1: i32) -> (i32, i32) {
    %c0_i32 = arith.constant 0 : i32
    %c0_i32_0 = arith.constant 0 : i32
    return %c0_i32, %arg0 : i32, i32
  }
  func.func @transform_2(%arg0: i32, %arg1: i32) -> (i32, i32) {
    %c0_i32 = arith.constant 0 : i32
    %c0_i32_0 = arith.constant 0 : i32
    return %c0_i32, %arg0 : i32, i32
  }
  func.func @transform_3(%arg0: i32, %arg1: i32) -> (i32, i32) {
    %c0_i32 = arith.constant 0 : i32
    %c0_i32_0 = arith.constant 0 : i32
    return %c0_i32, %arg0 : i32, i32
  }
  func.func @transform_4(%arg0: i32, %arg1: i32) -> (i32, i32) {
    %c0_i32 = arith.constant 0 : i32
    return %arg1, %arg0 : i32, i32
  }
}

module attributes {stable_mosaic.version = 11 : i64} {
  func.func @_conv_bn_kernel(%arg0: i32, %arg1: i32, %arg2: memref<64x1152xbf16, #tpu.memory_space<vmem>>, %arg3: memref<1152x128xbf16, #tpu.memory_space<vmem>>, %arg4: memref<1x128xf32, #tpu.memory_space<vmem>>, %arg5: memref<1x128xf32, #tpu.memory_space<vmem>>, %arg6: memref<64x32xbf16, #tpu.memory_space<vmem>>, %arg7: memref<32x128xbf16, #tpu.memory_space<vmem>>, %arg8: memref<1x128xf32, #tpu.memory_space<vmem>>, %arg9: memref<1x128xf32, #tpu.memory_space<vmem>>, %arg10: memref<64x128xbf16, #tpu.memory_space<vmem>>) attributes {dimension_semantics = [#tpu.dimension_semantics<parallel>, #tpu.dimension_semantics<parallel>], iteration_bounds = array<i64: 1, 1>, scalar_prefetch = 0 : i64, scratch_operands = 0 : i64, tpu.core_type = #tpu.core_type<tc>, window_params = [{transform_indices = @transform_0, window_bounds = array<i64: 64, 1152>}, {transform_indices = @transform_1, window_bounds = array<i64: 1152, 128>}, {transform_indices = @transform_2, window_bounds = array<i64: 1, 128>}, {transform_indices = @transform_3, window_bounds = array<i64: 1, 128>}, {transform_indices = @transform_4, window_bounds = array<i64: 64, 32>}, {transform_indices = @transform_5, window_bounds = array<i64: 32, 128>}, {transform_indices = @transform_6, window_bounds = array<i64: 1, 128>}, {transform_indices = @transform_7, window_bounds = array<i64: 1, 128>}, {transform_indices = @transform_8, window_bounds = array<i64: 64, 128>}]} {
    %c0 = arith.constant 0 : index
    %c0_0 = arith.constant 0 : index
    %0 = vector.load %arg2[%c0, %c0_0] : memref<64x1152xbf16, #tpu.memory_space<vmem>>, vector<64x1152xbf16>
    %c0_1 = arith.constant 0 : index
    %c0_2 = arith.constant 0 : index
    %1 = vector.load %arg3[%c0_1, %c0_2] : memref<1152x128xbf16, #tpu.memory_space<vmem>>, vector<1152x128xbf16>
    %cst = arith.constant dense<0.000000e+00> : vector<64x128xf32>
    %2 = tpu.matmul %0, %1, %cst {dimension_numbers = #tpu.dot_dimension_numbers<[1], [0], [0], [1], [0, 0, 1, 1], [], []>} : vector<64x1152xbf16>, vector<1152x128xbf16>, vector<64x128xf32> -> vector<64x128xf32>
    %c0_3 = arith.constant 0 : index
    %c0_4 = arith.constant 0 : index
    %3 = vector.load %arg4[%c0_3, %c0_4] : memref<1x128xf32, #tpu.memory_space<vmem>>, vector<1x128xf32>
    %4 = vector.broadcast %3 : vector<1x128xf32> to vector<64x128xf32>
    %5 = arith.mulf %2, %4 : vector<64x128xf32>
    %c0_5 = arith.constant 0 : index
    %c0_6 = arith.constant 0 : index
    %6 = vector.load %arg5[%c0_5, %c0_6] : memref<1x128xf32, #tpu.memory_space<vmem>>, vector<1x128xf32>
    %7 = vector.broadcast %6 : vector<1x128xf32> to vector<64x128xf32>
    %8 = arith.addf %5, %7 : vector<64x128xf32>
    %c0_7 = arith.constant 0 : index
    %c0_8 = arith.constant 0 : index
    %9 = vector.load %arg6[%c0_7, %c0_8] : memref<64x32xbf16, #tpu.memory_space<vmem>>, vector<64x32xbf16>
    %c0_9 = arith.constant 0 : index
    %c0_10 = arith.constant 0 : index
    %10 = vector.load %arg7[%c0_9, %c0_10] : memref<32x128xbf16, #tpu.memory_space<vmem>>, vector<32x128xbf16>
    %cst_11 = arith.constant dense<0.000000e+00> : vector<64x128xf32>
    %11 = tpu.matmul %9, %10, %cst_11 {dimension_numbers = #tpu.dot_dimension_numbers<[1], [0], [0], [1], [0, 0, 1, 1], [], []>} : vector<64x32xbf16>, vector<32x128xbf16>, vector<64x128xf32> -> vector<64x128xf32>
    %c0_12 = arith.constant 0 : index
    %c0_13 = arith.constant 0 : index
    %12 = vector.load %arg8[%c0_12, %c0_13] : memref<1x128xf32, #tpu.memory_space<vmem>>, vector<1x128xf32>
    %13 = vector.broadcast %12 : vector<1x128xf32> to vector<64x128xf32>
    %14 = arith.mulf %11, %13 : vector<64x128xf32>
    %c0_14 = arith.constant 0 : index
    %c0_15 = arith.constant 0 : index
    %15 = vector.load %arg9[%c0_14, %c0_15] : memref<1x128xf32, #tpu.memory_space<vmem>>, vector<1x128xf32>
    %16 = vector.broadcast %15 : vector<1x128xf32> to vector<64x128xf32>
    %17 = arith.addf %14, %16 : vector<64x128xf32>
    %18 = arith.addf %8, %17 : vector<64x128xf32>
    %cst_16 = arith.constant 0.000000e+00 : f32
    %19 = vector.broadcast %cst_16 : f32 to vector<64x128xf32>
    %20 = arith.maximumf %18, %19 : vector<64x128xf32>
    %21 = arith.truncf %20 : vector<64x128xf32> to vector<64x128xbf16>
    %c0_17 = arith.constant 0 : index
    %c0_18 = arith.constant 0 : index
    %22 = vector.load %arg10[%c0_17, %c0_18] : memref<64x128xbf16, #tpu.memory_space<vmem>>, vector<64x128xbf16>
    tpu.vector_store %arg10[%c0_17, %c0_18], %21 {strides = array<i32>} : memref<64x128xbf16, #tpu.memory_space<vmem>>, vector<64x128xbf16>,
    return
  }
  func.func @transform_0(%arg0: i32, %arg1: i32) -> (i32, i32) {
    %c0_i32 = arith.constant 0 : i32
    %c0_i32_0 = arith.constant 0 : i32
    return %arg1, %c0_i32 : i32, i32
  }
  func.func @transform_1(%arg0: i32, %arg1: i32) -> (i32, i32) {
    %c0_i32 = arith.constant 0 : i32
    %c0_i32_0 = arith.constant 0 : i32
    return %c0_i32, %arg0 : i32, i32
  }
  func.func @transform_2(%arg0: i32, %arg1: i32) -> (i32, i32) {
    %c0_i32 = arith.constant 0 : i32
    %c0_i32_0 = arith.constant 0 : i32
    return %c0_i32, %arg0 : i32, i32
  }
  func.func @transform_3(%arg0: i32, %arg1: i32) -> (i32, i32) {
    %c0_i32 = arith.constant 0 : i32
    %c0_i32_0 = arith.constant 0 : i32
    return %c0_i32, %arg0 : i32, i32
  }
  func.func @transform_4(%arg0: i32, %arg1: i32) -> (i32, i32) {
    %c0_i32 = arith.constant 0 : i32
    %c0_i32_0 = arith.constant 0 : i32
    return %arg1, %c0_i32 : i32, i32
  }
  func.func @transform_5(%arg0: i32, %arg1: i32) -> (i32, i32) {
    %c0_i32 = arith.constant 0 : i32
    %c0_i32_0 = arith.constant 0 : i32
    return %c0_i32, %arg0 : i32, i32
  }
  func.func @transform_6(%arg0: i32, %arg1: i32) -> (i32, i32) {
    %c0_i32 = arith.constant 0 : i32
    %c0_i32_0 = arith.constant 0 : i32
    return %c0_i32, %arg0 : i32, i32
  }
  func.func @transform_7(%arg0: i32, %arg1: i32) -> (i32, i32) {
    %c0_i32 = arith.constant 0 : i32
    %c0_i32_0 = arith.constant 0 : i32
    return %c0_i32, %arg0 : i32, i32
  }
  func.func @transform_8(%arg0: i32, %arg1: i32) -> (i32, i32) {
    %c0_i32 = arith.constant 0 : i32
    return %arg1, %arg0 : i32, i32
  }
}

module attributes {stable_mosaic.version = 11 : i64} {
  func.func @_conv_bn_kernel(%arg0: i32, %arg1: i32, %arg2: memref<64x1152xbf16, #tpu.memory_space<vmem>>, %arg3: memref<1152x128xbf16, #tpu.memory_space<vmem>>, %arg4: memref<1x128xf32, #tpu.memory_space<vmem>>, %arg5: memref<1x128xf32, #tpu.memory_space<vmem>>, %arg6: memref<64x128xbf16, #tpu.memory_space<vmem>>) attributes {dimension_semantics = [#tpu.dimension_semantics<parallel>, #tpu.dimension_semantics<parallel>], iteration_bounds = array<i64: 1, 1>, scalar_prefetch = 0 : i64, scratch_operands = 0 : i64, tpu.core_type = #tpu.core_type<tc>, window_params = [{transform_indices = @transform_0, window_bounds = array<i64: 64, 1152>}, {transform_indices = @transform_1, window_bounds = array<i64: 1152, 128>}, {transform_indices = @transform_2, window_bounds = array<i64: 1, 128>}, {transform_indices = @transform_3, window_bounds = array<i64: 1, 128>}, {transform_indices = @transform_4, window_bounds = array<i64: 64, 128>}]} {
    %c0 = arith.constant 0 : index
    %c0_0 = arith.constant 0 : index
    %0 = vector.load %arg2[%c0, %c0_0] : memref<64x1152xbf16, #tpu.memory_space<vmem>>, vector<64x1152xbf16>
    %c0_1 = arith.constant 0 : index
    %c0_2 = arith.constant 0 : index
    %1 = vector.load %arg3[%c0_1, %c0_2] : memref<1152x128xbf16, #tpu.memory_space<vmem>>, vector<1152x128xbf16>
    %cst = arith.constant dense<0.000000e+00> : vector<64x128xf32>
    %2 = tpu.matmul %0, %1, %cst {dimension_numbers = #tpu.dot_dimension_numbers<[1], [0], [0], [1], [0, 0, 1, 1], [], []>} : vector<64x1152xbf16>, vector<1152x128xbf16>, vector<64x128xf32> -> vector<64x128xf32>
    %c0_3 = arith.constant 0 : index
    %c0_4 = arith.constant 0 : index
    %3 = vector.load %arg4[%c0_3, %c0_4] : memref<1x128xf32, #tpu.memory_space<vmem>>, vector<1x128xf32>
    %4 = vector.broadcast %3 : vector<1x128xf32> to vector<64x128xf32>
    %5 = arith.mulf %2, %4 : vector<64x128xf32>
    %c0_5 = arith.constant 0 : index
    %c0_6 = arith.constant 0 : index
    %6 = vector.load %arg5[%c0_5, %c0_6] : memref<1x128xf32, #tpu.memory_space<vmem>>, vector<1x128xf32>
    %7 = vector.broadcast %6 : vector<1x128xf32> to vector<64x128xf32>
    %8 = arith.addf %5, %7 : vector<64x128xf32>
    %cst_7 = arith.constant 0.000000e+00 : f32
    %9 = vector.broadcast %cst_7 : f32 to vector<64x128xf32>
    %10 = arith.maximumf %8, %9 : vector<64x128xf32>
    %11 = arith.truncf %10 : vector<64x128xf32> to vector<64x128xbf16>
    %c0_8 = arith.constant 0 : index
    %c0_9 = arith.constant 0 : index
    %12 = vector.load %arg6[%c0_8, %c0_9] : memref<64x128xbf16, #tpu.memory_space<vmem>>, vector<64x128xbf16>
    tpu.vector_store %arg6[%c0_8, %c0_9], %11 {strides = array<i32>} : memref<64x128xbf16, #tpu.memory_space<vmem>>, vector<64x128xbf16>,
    return
  }
  func.func @transform_0(%arg0: i32, %arg1: i32) -> (i32, i32) {
    %c0_i32 = arith.constant 0 : i32
    %c0_i32_0 = arith.constant 0 : i32
    return %arg1, %c0_i32 : i32, i32
  }
  func.func @transform_1(%arg0: i32, %arg1: i32) -> (i32, i32) {
    %c0_i32 = arith.constant 0 : i32
    %c0_i32_0 = arith.constant 0 : i32
    return %c0_i32, %arg0 : i32, i32
  }
  func.func @transform_2(%arg0: i32, %arg1: i32) -> (i32, i32) {
    %c0_i32 = arith.constant 0 : i32
    %c0_i32_0 = arith.constant 0 : i32
    return %c0_i32, %arg0 : i32, i32
  }
  func.func @transform_3(%arg0: i32, %arg1: i32) -> (i32, i32) {
    %c0_i32 = arith.constant 0 : i32
    %c0_i32_0 = arith.constant 0 : i32
    return %c0_i32, %arg0 : i32, i32
  }
  func.func @transform_4(%arg0: i32, %arg1: i32) -> (i32, i32) {
    %c0_i32 = arith.constant 0 : i32
    return %arg1, %arg0 : i32, i32
  }
}

module attributes {stable_mosaic.version = 11 : i64} {
  func.func @_conv_bn_kernel(%arg0: i32, %arg1: i32, %arg2: memref<64x1152xbf16, #tpu.memory_space<vmem>>, %arg3: memref<1152x128xbf16, #tpu.memory_space<vmem>>, %arg4: memref<1x128xf32, #tpu.memory_space<vmem>>, %arg5: memref<1x128xf32, #tpu.memory_space<vmem>>, %arg6: memref<64x128xbf16, #tpu.memory_space<vmem>>, %arg7: memref<1x4x128xf32, #tpu.memory_space<vmem>>) attributes {dimension_semantics = [#tpu.dimension_semantics<parallel>, #tpu.dimension_semantics<parallel>], iteration_bounds = array<i64: 1, 1>, scalar_prefetch = 0 : i64, scratch_operands = 0 : i64, tpu.core_type = #tpu.core_type<tc>, window_params = [{transform_indices = @transform_0, window_bounds = array<i64: 64, 1152>}, {transform_indices = @transform_1, window_bounds = array<i64: 1152, 128>}, {transform_indices = @transform_2, window_bounds = array<i64: 1, 128>}, {transform_indices = @transform_3, window_bounds = array<i64: 1, 128>}, {transform_indices = @transform_4, window_bounds = array<i64: 64, 128>}, {transform_indices = @transform_5, window_bounds = array<i64: 1, 4, 128>}]} {
    %c0 = arith.constant 0 : index
    %c0_0 = arith.constant 0 : index
    %0 = vector.load %arg2[%c0, %c0_0] : memref<64x1152xbf16, #tpu.memory_space<vmem>>, vector<64x1152xbf16>
    %c0_1 = arith.constant 0 : index
    %c0_2 = arith.constant 0 : index
    %1 = vector.load %arg3[%c0_1, %c0_2] : memref<1152x128xbf16, #tpu.memory_space<vmem>>, vector<1152x128xbf16>
    %cst = arith.constant dense<0.000000e+00> : vector<64x128xf32>
    %2 = tpu.matmul %0, %1, %cst {dimension_numbers = #tpu.dot_dimension_numbers<[1], [0], [0], [1], [0, 0, 1, 1], [], []>} : vector<64x1152xbf16>, vector<1152x128xbf16>, vector<64x128xf32> -> vector<64x128xf32>
    %c0_3 = arith.constant 0 : index
    %c0_4 = arith.constant 0 : index
    %3 = vector.load %arg4[%c0_3, %c0_4] : memref<1x128xf32, #tpu.memory_space<vmem>>, vector<1x128xf32>
    %4 = vector.broadcast %3 : vector<1x128xf32> to vector<64x128xf32>
    %5 = arith.mulf %2, %4 : vector<64x128xf32>
    %c0_5 = arith.constant 0 : index
    %c0_6 = arith.constant 0 : index
    %6 = vector.load %arg5[%c0_5, %c0_6] : memref<1x128xf32, #tpu.memory_space<vmem>>, vector<1x128xf32>
    %7 = vector.broadcast %6 : vector<1x128xf32> to vector<64x128xf32>
    %8 = arith.addf %5, %7 : vector<64x128xf32>
    %c0_7 = arith.constant 0 : index
    %c0_8 = arith.constant 0 : index
    %9 = vector.load %arg6[%c0_7, %c0_8] : memref<64x128xbf16, #tpu.memory_space<vmem>>, vector<64x128xbf16>
    %10 = arith.extf %9 : vector<64x128xbf16> to vector<64x128xf32>
    %11 = arith.addf %8, %10 : vector<64x128xf32>
    %cst_9 = arith.constant 0.000000e+00 : f32
    %12 = vector.broadcast %cst_9 : f32 to vector<64x128xf32>
    %13 = arith.maximumf %11, %12 : vector<64x128xf32>
    %14 = vector.shape_cast %13 : vector<64x128xf32> to vector<4x16x128xf32>
    %15 = tpu.iota {dimensions = array<i32: 1>} : vector<1x16x128xi32>
    %c9_i32 = arith.constant 9 : i32
    %16 = vector.broadcast %c9_i32 : i32 to vector<1x16x128xi32>
    %17 = arith.cmpi slt, %15, %16 : vector<1x16x128xi32>
    %cst_10 = arith.constant 0.000000e+00 : f32
    %18 = vector.shape_cast %17 : vector<1x16x128xi1> to vector<1x16x128xi1>
    %19 = vector.broadcast %18 : vector<1x16x128xi1> to vector<4x16x128xi1>
    %20 = vector.broadcast %cst_10 : f32 to vector<4x16x128xf32>
    %21 = arith.select %19, %14, %20 : vector<4x16x128xi1>, vector<4x16x128xf32>
    %cst_11 = arith.constant dense<0.000000e+00> : vector<4x128xf32>
    %22 = vector.multi_reduction <add>, %21, %cst_11 [1] : vector<4x16x128xf32> to vector<4x128xf32>
    %cst_12 = arith.constant 0.111111112 : f32
    %23 = vector.broadcast %cst_12 : f32 to vector<4x128xf32>
    %24 = arith.mulf %22, %23 : vector<4x128xf32>
    %25 = vector.shape_cast %24 : vector<4x128xf32> to vector<1x4x128xf32>
    %c0_13 = arith.constant 0 : index
    %c0_14 = arith.constant 0 : index
    %c0_15 = arith.constant 0 : index
    %26 = vector.load %arg7[%c0_13, %c0_14, %c0_15] : memref<1x4x128xf32, #tpu.memory_space<vmem>>, vector<1x4x128xf32>
    tpu.vector_store %arg7[%c0_13, %c0_14, %c0_15], %25 {strides = array<i32>} : memref<1x4x128xf32, #tpu.memory_space<vmem>>, vector<1x4x128xf32>,
    return
  }
  func.func @transform_0(%arg0: i32, %arg1: i32) -> (i32, i32) {
    %c0_i32 = arith.constant 0 : i32
    %c0_i32_0 = arith.constant 0 : i32
    return %arg1, %c0_i32 : i32, i32
  }
  func.func @transform_1(%arg0: i32, %arg1: i32) -> (i32, i32) {
    %c0_i32 = arith.constant 0 : i32
    %c0_i32_0 = arith.constant 0 : i32
    return %c0_i32, %arg0 : i32, i32
  }
  func.func @transform_2(%arg0: i32, %arg1: i32) -> (i32, i32) {
    %c0_i32 = arith.constant 0 : i32
    %c0_i32_0 = arith.constant 0 : i32
    return %c0_i32, %arg0 : i32, i32
  }
  func.func @transform_3(%arg0: i32, %arg1: i32) -> (i32, i32) {
    %c0_i32 = arith.constant 0 : i32
    %c0_i32_0 = arith.constant 0 : i32
    return %c0_i32, %arg0 : i32, i32
  }
  func.func @transform_4(%arg0: i32, %arg1: i32) -> (i32, i32) {
    %c0_i32 = arith.constant 0 : i32
    return %arg1, %arg0 : i32, i32
  }
  func.func @transform_5(%arg0: i32, %arg1: i32) -> (i32, i32, i32) {
    %c0_i32 = arith.constant 0 : i32
    %c0_i32_0 = arith.constant 0 : i32
    return %arg1, %c0_i32, %arg0 : i32, i32, i32
  }
}

</mosaic_0001>

<llo_original>
// kernel: pool_to_feature_vector.4
$region0: #{pool_to_feature_vector.4}
  #allocation0 [shape = 'u32[]', space=smem, size = 0x4, offset = 0x4, fixed_abs, tag = 'smem constant byte address 0x4 - core index']
  #allocation1 [shape = 'u32[144,128]{1,0:T(1,128)}', space=vmem, size = 0x12000, scoped, tag = 'internal scratch']
  %s0 = inlined_call_operand.vmem [shape: bf16[64,288], index: 0, kind: input, shape index: {}]
  %s1 = inlined_call_operand.vmem [shape: bf16[288,128], index: 1, kind: input, shape index: {}]
  %s2 = inlined_call_operand.vmem [shape: f32[1,128], index: 2, kind: input, shape index: {}]
  %s3 = inlined_call_operand.vmem [shape: f32[1,128], index: 3, kind: input, shape index: {}]
  %s4 = inlined_call_operand.vmem [shape: bf16[64,128], index: 4, kind: output, shape index: {}]
  %s5 = sld [smem:[#allocation0]]
  $region26: #{pool_to_feature_vector.4} parent=0
    _
  %s7 = ssub.s32 1, %s5
  %s8 = scalar_select 0, %s7, %s5
  // Predicated region
  $region2: #{pool_to_feature_vector.4} parent=0 // pred_check
    _
  $region3: #{pool_to_feature_vector.4} parent=0 // pred_check_branch
    %10 = sbr.rel (0) target = $region5
  $region4: #{pool_to_feature_vector.4} parent=0 // pred_region
    _
  $region5: #{pool_to_feature_vector.4} parent=0 // pred_fallthru
    _
  // Predicated region
  $region6: #{pool_to_feature_vector.4} parent=0 // pred_check
    _
  $region7: #{pool_to_feature_vector.4} parent=0 // pred_check_branch
    %12 = sbr.rel (0) target = $region9
  $region8: #{pool_to_feature_vector.4} parent=0 // pred_region
    _
  $region9: #{pool_to_feature_vector.4} parent=0 // pred_fallthru
    _
  // Predicated region
  $region10: #{pool_to_feature_vector.4} parent=0 // pred_check
    _
  $region11: #{pool_to_feature_vector.4} parent=0 // pred_check_branch
    %14 = sbr.rel (0) target = $region13
  $region12: #{pool_to_feature_vector.4} parent=0 // pred_region
    _
  $region13: #{pool_to_feature_vector.4} parent=0 // pred_fallthru
    _
  // Predicated region
  $region14: #{pool_to_feature_vector.4} parent=0 // pred_check
    _
  $region15: #{pool_to_feature_vector.4} parent=0 // pred_check_branch
    %16 = sbr.rel (0) target = $region17
  $region16: #{pool_to_feature_vector.4} parent=0 // pred_region
    _
  $region17: #{pool_to_feature_vector.4} parent=0 // pred_fallthru
    _
  %v18 = vld [vmem:[%s0] sm:$0xff]
  %v19 = vld [vmem:[%s0 + $0x8] sm:$0xf]
  %v20 = vld [vmem:[%s0 + $0xc] sm:$0xff]
  %v21 = vld [vmem:[%s0 + $0x14] sm:$0xf]
  %v22 = vld [vmem:[%s0 + $0x18] sm:$0xff]
  %v23 = vld [vmem:[%s0 + $0x20] sm:$0xf]
  %v24 = vld [vmem:[%s0 + $0x24] sm:$0xff]
  %v25 = vld [vmem:[%s0 + $0x2c] sm:$0xf]
  %v26 = vld [vmem:[%s0 + $0x30] sm:$0xff]
  %v27 = vld [vmem:[%s0 + $0x38] sm:$0xf]
  %v28 = vld [vmem:[%s0 + $0x3c] sm:$0xff]
  %v29 = vld [vmem:[%s0 + $0x44] sm:$0xf]
  %v30 = vld [vmem:[%s0 + $0x48] sm:$0xff]
  %v31 = vld [vmem:[%s0 + $0x50] sm:$0xf]
  %v32 = vld [vmem:[%s0 + $0x54] sm:$0xff]
  %v33 = vld [vmem:[%s0 + $0x5c] sm:$0xf]
  %v34 = vld [vmem:[%s1] sm:$0xf]
  %v35 = vld [vmem:[%s1 + $0x4] sm:$0xf]
  %v36 = vld [vmem:[%s1 + $0x8] sm:$0xf]
  %v37 = vld [vmem:[%s1 + $0xc] sm:$0xf]
  %v38 = vld [vmem:[%s1 + $0x10] sm:$0xf]
  %v39 = vld [vmem:[%s1 + $0x14] sm:$0xf]
  %v40 = vld [vmem:[%s1 + $0x18] sm:$0xf]
  %v41 = vld [vmem:[%s1 + $0x1c] sm:$0xf]
  %v42 = vld [vmem:[%s1 + $0x20] sm:$0xf]
  %v43 = vld [vmem:[%s1 + $0x24] sm:$0xf]
  %v44 = vld [vmem:[%s1 + $0x28] sm:$0xf]
  %v45 = vld [vmem:[%s1 + $0x2c] sm:$0xf]
  %v46 = vld [vmem:[%s1 + $0x30] sm:$0xf]
  %v47 = vld [vmem:[%s1 + $0x34] sm:$0xf]
  %v48 = vld [vmem:[%s1 + $0x38] sm:$0xf]
  %v49 = vld [vmem:[%s1 + $0x3c] sm:$0xf]
  %v50 = vld [vmem:[%s1 + $0x40] sm:$0xf]
  %v51 = vld [vmem:[%s1 + $0x44] sm:$0xf]
  %v52 = vld [vmem:[%s1 + $0x48] sm:$0xf]
  %v53 = vld [vmem:[%s1 + $0x4c] sm:$0xf]
  %v54 = vld [vmem:[%s1 + $0x50] sm:$0xf]
  %v55 = vld [vmem:[%s1 + $0x54] sm:$0xf]
  %v56 = vld [vmem:[%s1 + $0x58] sm:$0xf]
  %v57 = vld [vmem:[%s1 + $0x5c] sm:$0xf]
  %v58 = vld [vmem:[%s1 + $0x60] sm:$0xf]
  %v59 = vld [vmem:[%s1 + $0x64] sm:$0xf]
  %v60 = vld [vmem:[%s1 + $0x68] sm:$0xf]
  %v61 = vld [vmem:[%s1 + $0x6c] sm:$0xf]
  %v62 = vld [vmem:[%s1 + $0x70] sm:$0xf]
  %v63 = vld [vmem:[%s1 + $0x74] sm:$0xf]
  %v64 = vld [vmem:[%s1 + $0x78] sm:$0xf]
  %v65 = vld [vmem:[%s1 + $0x7c] sm:$0xf]
  %v66 = vld [vmem:[%s1 + $0x80] sm:$0xf]
  %v67 = vld [vmem:[%s1 + $0x84] sm:$0xf]
  %v68 = vld [vmem:[%s1 + $0x88] sm:$0xf]
  %v69 = vld [vmem:[%s1 + $0x8c] sm:$0xf]
  %v86 = vunpack.c.l.b16 %v18
  %v87 = vunpack.c.h.b16 %v18
  %v88 = vunpack.c.l.b16 %v19
  %v89 = vunpack.c.l.b16 %v20
  %v90 = vunpack.c.h.b16 %v20
  %v91 = vunpack.c.l.b16 %v21
  %v92 = vunpack.c.l.b16 %v22
  %v93 = vunpack.c.h.b16 %v22
  %v94 = vunpack.c.l.b16 %v23
  %v95 = vunpack.c.l.b16 %v24
  %v96 = vunpack.c.h.b16 %v24
  %v97 = vunpack.c.l.b16 %v25
  %v98 = vunpack.c.l.b16 %v26
  %v99 = vunpack.c.h.b16 %v26
  %v100 = vunpack.c.l.b16 %v27
  %v101 = vunpack.c.l.b16 %v28
  %v102 = vunpack.c.h.b16 %v28
  %v103 = vunpack.c.l.b16 %v29
  %v104 = vunpack.c.l.b16 %v30
  %v105 = vunpack.c.h.b16 %v30
  %v106 = vunpack.c.l.b16 %v31
  %v107 = vunpack.c.l.b16 %v32
  %v108 = vunpack.c.h.b16 %v32
  %v109 = vunpack.c.l.b16 %v33
  %v110 = vpack.c.b16 %v89, %v86
  %v111 = vpack.c.b16 %v90, %v87
  %v112 = vpack.c.b16 %v91, %v88
  %v113 = vpack.c.b16 %v95, %v92
  %v114 = vpack.c.b16 %v96, %v93
  %v115 = vpack.c.b16 %v97, %v94
  %v116 = vpack.c.b16 %v101, %v98
  %v117 = vpack.c.b16 %v102, %v99
  %v118 = vpack.c.b16 %v103, %v100
  %v119 = vpack.c.b16 %v107, %v104
  %v120 = vpack.c.b16 %v108, %v105
  %v121 = vpack.c.b16 %v109, %v106
  %v166 = vunpack.c.l.b16 %v34
  %v167 = vunpack.c.l.b16 %v35
  %v168 = vunpack.c.l.b16 %v36
  %v169 = vunpack.c.l.b16 %v37
  %v170 = vunpack.c.l.b16 %v38
  %v171 = vunpack.c.l.b16 %v39
  %v172 = vunpack.c.l.b16 %v40
  %v173 = vunpack.c.l.b16 %v41
  %v174 = vunpack.c.l.b16 %v42
  %v175 = vunpack.c.l.b16 %v43
  %v176 = vunpack.c.l.b16 %v44
  %v177 = vunpack.c.l.b16 %v45
  %v178 = vunpack.c.l.b16 %v46
  %v179 = vunpack.c.l.b16 %v47
  %v180 = vunpack.c.l.b16 %v48
  %v181 = vunpack.c.l.b16 %v49
  %v182 = vunpack.c.l.b16 %v50
  %v183 = vunpack.c.l.b16 %v51
  %v184 = vunpack.c.l.b16 %v52
  %v185 = vunpack.c.l.b16 %v53
  %v186 = vunpack.c.l.b16 %v54
  %v187 = vunpack.c.l.b16 %v55
  %v188 = vunpack.c.l.b16 %v56
  %v189 = vunpack.c.l.b16 %v57
  %v190 = vunpack.c.l.b16 %v58
  %v191 = vunpack.c.l.b16 %v59
  %v192 = vunpack.c.l.b16 %v60
  %v193 = vunpack.c.l.b16 %v61
  %v194 = vunpack.c.l.b16 %v62
  %v195 = vunpack.c.l.b16 %v63
  %v196 = vunpack.c.l.b16 %v64
  %v197 = vunpack.c.l.b16 %v65
  %v198 = vunpack.c.l.b16 %v66
  %v199 = vunpack.c.l.b16 %v67
  %v200 = vunpack.c.l.b16 %v68
  %v201 = vunpack.c.l.b16 %v69
  %v202 = vpack.c.b16 %v167, %v166
  %v203 = vpack.c.b16 %v169, %v168
  %v204 = vpack.c.b16 %v171, %v170
  %v205 = vpack.c.b16 %v173, %v172
  %v206 = vpack.c.b16 %v175, %v174
  %v207 = vpack.c.b16 %v177, %v176
  %v208 = vpack.c.b16 %v179, %v178
  %v209 = vpack.c.b16 %v181, %v180
  %v210 = vpack.c.b16 %v183, %v182
  %v211 = vpack.c.b16 %v185, %v184
  %v212 = vpack.c.b16 %v187, %v186
  %v213 = vpack.c.b16 %v189, %v188
  %v214 = vpack.c.b16 %v191, %v190
  %v215 = vpack.c.b16 %v193, %v192
  %v216 = vpack.c.b16 %v195, %v194
  %v217 = vpack.c.b16 %v197, %v196
  %v218 = vpack.c.b16 %v199, %v198
  %v219 = vpack.c.b16 %v201, %v200
  %vm238 = vcmask 261120
  %v240 = vsel %vm238, %v112, 0
  %v243 = vsel %vm238, %v115, 0
  %v246 = vsel %vm238, %v118, 0
  %v249 = vsel %vm238, %v121, 0
  %251 = vmatprep.subr.bf16.mxu0 0
  %252 = vmatpush1.bf16.msra.mxu0 %v202
  %253 = vmatprep.subr.bf16.mxu0 0
  %254 = vmatpush1.bf16.msra.mxu0 %v203
  %255 = vmatprep.subr.bf16.mxu0 0
  %256 = vmatpush1.bf16.msra.mxu0 %v204
  %257 = vmatprep.subr.bf16.mxu0 0
  %258 = vmatpush1.bf16.msra.mxu0 %v205
  %259 = vmatprep.subr.bf16.mxu0 0
  %260 = vmatpush1.bf16.msra.mxu0 %v206
  %261 = vmatprep.subr.bf16.mxu0 0
  %262 = vmatpush1.bf16.msra.mxu0 %v207
  %263 = vmatprep.subr.bf16.mxu0 0
  %264 = vmatpush1.bf16.msra.mxu0 %v208
  %265 = vmatprep.subr.bf16.mxu0 0
  %266 = vmatpush1.bf16.msra.mxu0 %v209
  %267 = vmatprep.subr.bf16.mxu0 0
  %268 = vmatpush1.bf16.msra.mxu0 %v210
  %269 = vmatprep.subr.bf16.mxu0 0
  %270 = vmatpush1.bf16.msra.mxu0 %v211
  %271 = vmatprep.subr.bf16.mxu0 0
  %272 = vmatpush1.bf16.msra.mxu0 %v212
  %273 = vmatprep.subr.bf16.mxu0 0
  %274 = vmatpush1.bf16.msra.mxu0 %v213
  %275 = vmatprep.subr.bf16.mxu0 0
  %276 = vmatpush1.bf16.msra.mxu0 %v214
  %277 = vmatprep.subr.bf16.mxu0 0
  %278 = vmatpush1.bf16.msra.mxu0 %v215
  %279 = vmatprep.subr.bf16.mxu0 0
  %280 = vmatpush1.bf16.msra.mxu0 %v216
  %281 = vmatprep.subr.bf16.mxu0 0
  %282 = vmatpush1.bf16.msra.mxu0 %v217
  %283 = vmatprep.mubr.bf16.mxu0 %v111
  %284 = vmatmul.mubr.bf16.gmra.mrb[0].mxu0 %v110
  %v285 = vpop.f32.mrb[0].mxu0
  %v286 = vadd.f32 0.0, %v285
  %v287 = vpop.f32.mrb[0].mxu0
  %v288 = vpop.f32.mrb[0].mxu0
  %v289 = vadd.f32 0.0, %v288
  %v290 = vpop.f32.mrb[0].mxu0
  %291 = vmatprep.mubr.bf16.mxu0 %v114
  %292 = vmatmul.mubr.bf16.gmra.mrb[0].mxu0 %v113
  %v293 = vpop.f32.mrb[0].mxu0
  %v294 = vadd.f32 0.0, %v293
  %v295 = vpop.f32.mrb[0].mxu0
  %v296 = vpop.f32.mrb[0].mxu0
  %v297 = vadd.f32 0.0, %v296
  %v298 = vpop.f32.mrb[0].mxu0
  %299 = vmatprep.mubr.bf16.mxu0 %v117
  %300 = vmatmul.mubr.bf16.gmra.mrb[0].mxu0 %v116
  %v301 = vpop.f32.mrb[0].mxu0
  %v302 = vadd.f32 0.0, %v301
  %v303 = vpop.f32.mrb[0].mxu0
  %v304 = vpop.f32.mrb[0].mxu0
  %v305 = vadd.f32 0.0, %v304
  %v306 = vpop.f32.mrb[0].mxu0
  %307 = vmatprep.mubr.bf16.mxu0 %v120
  %308 = vmatmul.mubr.bf16.gmra.mrb[0].mxu0 %v119
  %v309 = vpop.f32.mrb[0].mxu0
  %v310 = vadd.f32 0.0, %v309
  %v311 = vpop.f32.mrb[0].mxu0
  %v312 = vpop.f32.mrb[0].mxu0
  %v313 = vadd.f32 0.0, %v312
  %v314 = vpop.f32.mrb[0].mxu0
  %315 = vdwg.mxu0
  %316 = vmatprep.subr.bf16.mxu0 0
  %317 = vmatpush1.bf16.msra.mxu0 %v218
  %318 = vmatprep.subr.bf16.mxu0 0
  %319 = vmatpush1.bf16.msra.mxu0 %v219
  %320 = vmatprep.subr.bf16.mxu0 0
  %321 = vmatpush1.bf16.msra.mxu0 0
  %322 = vmatprep.subr.bf16.mxu0 0
  %323 = vmatpush1.bf16.msra.mxu0 0
  %324 = vmatprep.subr.bf16.mxu0 0
  %325 = vmatpush1.bf16.msra.mxu0 0
  %326 = vmatprep.subr.bf16.mxu0 0
  %327 = vmatpush1.bf16.msra.mxu0 0
  %328 = vmatprep.subr.bf16.mxu0 0
  %329 = vmatpush1.bf16.msra.mxu0 0
  %330 = vmatprep.subr.bf16.mxu0 0
  %331 = vmatpush1.bf16.msra.mxu0 0
  %332 = vmatprep.subr.bf16.mxu0 0
  %333 = vmatpush1.bf16.msra.mxu0 0
  %334 = vmatprep.subr.bf16.mxu0 0
  %335 = vmatpush1.bf16.msra.mxu0 0
  %336 = vmatprep.subr.bf16.mxu0 0
  %337 = vmatpush1.bf16.msra.mxu0 0
  %338 = vmatprep.subr.bf16.mxu0 0
  %339 = vmatpush1.bf16.msra.mxu0 0
  %340 = vmatprep.subr.bf16.mxu0 0
  %341 = vmatpush1.bf16.msra.mxu0 0
  %342 = vmatprep.subr.bf16.mxu0 0
  %343 = vmatpush1.bf16.msra.mxu0 0
  %344 = vmatprep.subr.bf16.mxu0 0
  %345 = vmatpush1.bf16.msra.mxu0 0
  %346 = vmatprep.subr.bf16.mxu0 0
  %347 = vmatpush1.bf16.msra.mxu0 0
  %348 = vmatprep.mubr.bf16.mxu0 0
  %349 = vmatmul.mubr.bf16.gmra.mrb[0].mxu0 %v240
  %v350 = vpop.f32.mrb[0].mxu0
  %v351 = vadd.f32 %v286, %v350
  %v352 = vpop.f32.mrb[0].mxu0
  %v353 = vpop.f32.mrb[0].mxu0
  %v354 = vadd.f32 %v289, %v353
  %v355 = vpop.f32.mrb[0].mxu0
  %356 = vmatprep.mubr.bf16.mxu0 0
  %357 = vmatmul.mubr.bf16.gmra.mrb[0].mxu0 %v243
  %v358 = vpop.f32.mrb[0].mxu0
  %v359 = vadd.f32 %v294, %v358
  %v360 = vpop.f32.mrb[0].mxu0
  %v361 = vpop.f32.mrb[0].mxu0
  %v362 = vadd.f32 %v297, %v361
  %v363 = vpop.f32.mrb[0].mxu0
  %364 = vmatprep.mubr.bf16.mxu0 0
  %365 = vmatmul.mubr.bf16.gmra.mrb[0].mxu0 %v246
  %v366 = vpop.f32.mrb[0].mxu0
  %v367 = vadd.f32 %v302, %v366
  %v368 = vpop.f32.mrb[0].mxu0
  %v369 = vpop.f32.mrb[0].mxu0
  %v370 = vadd.f32 %v305, %v369
  %v371 = vpop.f32.mrb[0].mxu0
  %372 = vmatprep.mubr.bf16.mxu0 0
  %373 = vmatmul.mubr.bf16.gmra.mrb[0].mxu0 %v249
  %v374 = vpop.f32.mrb[0].mxu0
  %v375 = vadd.f32 %v310, %v374
  %v376 = vpop.f32.mrb[0].mxu0
  %v377 = vpop.f32.mrb[0].mxu0
  %v378 = vadd.f32 %v313, %v377
  %v379 = vpop.f32.mrb[0].mxu0
  %380 = vdwg.mxu0
  %v381 = vld [vmem:[%s2] sm:$0x1]
  %v383 = vlaneseq
  %v384 = vshrl.u32 %v383, 7
  %v385 = vsub.s32 0, %v384
  %v386 = vrot.slane %v381, %v385
  %v388 = vmul.f32 %v351, %v386
  %v389 = vmul.f32 %v354, %v386
  %v390 = vmul.f32 %v359, %v386
  %v391 = vmul.f32 %v362, %v386
  %v392 = vmul.f32 %v367, %v386
  %v393 = vmul.f32 %v370, %v386
  %v394 = vmul.f32 %v375, %v386
  %v395 = vmul.f32 %v378, %v386
  %v396 = vld [vmem:[%s3] sm:$0x1]
  %v398 = vlaneseq
  %v399 = vshrl.u32 %v398, 7
  %v400 = vsub.s32 0, %v399
  %v401 = vrot.slane %v396, %v400
  %v403 = vadd.f32 %v388, %v401
  %v404 = vadd.f32 %v389, %v401
  %v405 = vadd.f32 %v390, %v401
  %v406 = vadd.f32 %v391, %v401
  %v407 = vadd.f32 %v392, %v401
  %v408 = vadd.f32 %v393, %v401
  %v409 = vadd.f32 %v394, %v401
  %v410 = vadd.f32 %v395, %v401
  %v411 = vmax.f32 %v403, 0.0
  %v412 = vmax.f32 %v404, 0.0
  %v413 = vmax.f32 %v405, 0.0
  %v414 = vmax.f32 %v406, 0.0
  %v415 = vmax.f32 %v407, 0.0
  %v416 = vmax.f32 %v408, 0.0
  %v417 = vmax.f32 %v409, 0.0
  %v418 = vmax.f32 %v410, 0.0
  %v419 = vpack.c.bf16 %v412, %v411
  %v420 = vpack.c.bf16 %v414, %v413
  %v421 = vpack.c.bf16 %v416, %v415
  %v422 = vpack.c.bf16 %v418, %v417
  %v427 = vunpack.c.l.b16 %v419
  %v428 = vunpack.c.h.b16 %v419
  %v429 = vunpack.c.l.b16 %v420
  %v430 = vunpack.c.h.b16 %v420
  %v431 = vunpack.c.l.b16 %v421
  %v432 = vunpack.c.h.b16 %v421
  %v433 = vunpack.c.l.b16 %v422
  %v434 = vunpack.c.h.b16 %v422
  %v435 = vpack.c.b16 %v427, %v427
  %v436 = vpack.c.b16 %v428, %v428
  %v437 = vpack.c.b16 %v429, %v429
  %v438 = vpack.c.b16 %v430, %v430
  %v439 = vpack.c.b16 %v431, %v431
  %v440 = vpack.c.b16 %v432, %v432
  %v441 = vpack.c.b16 %v433, %v433
  %v442 = vpack.c.b16 %v434, %v434
  %451 = vst [vmem:[%s4] sm:$0xf] %v435
  %452 = vst [vmem:[%s4 + $0x4] sm:$0xf] %v436
  %453 = vst [vmem:[%s4 + $0x8] sm:$0xf] %v437
  %454 = vst [vmem:[%s4 + $0xc] sm:$0xf] %v438
  %455 = vst [vmem:[%s4 + $0x10] sm:$0xf] %v439
  %456 = vst [vmem:[%s4 + $0x14] sm:$0xf] %v440
  %457 = vst [vmem:[%s4 + $0x18] sm:$0xf] %v441
  %458 = vst [vmem:[%s4 + $0x1c] sm:$0xf] %v442
  // Predicated region
  $region18: #{pool_to_feature_vector.4} parent=0 // pred_check
    _
  $region19: #{pool_to_feature_vector.4} parent=0 // pred_check_branch
    %460 = sbr.rel (0) target = $region21
  $region20: #{pool_to_feature_vector.4} parent=0 // pred_region
    _
  $region21: #{pool_to_feature_vector.4} parent=0 // pred_fallthru
    _
  // Predicated region
  $region22: #{pool_to_feature_vector.4} parent=0 // pred_check
    _
  $region23: #{pool_to_feature_vector.4} parent=0 // pred_check_branch
    %462 = sbr.rel (0) target = $region25
  $region24: #{pool_to_feature_vector.4} parent=0 // pred_region
    _
  $region25: #{pool_to_feature_vector.4} parent=0 // pred_fallthru
    _

// kernel: pool_to_feature_vector.6
$region0: #{pool_to_feature_vector.6}
  #allocation0 [shape = 'u32[]', space=smem, size = 0x4, offset = 0x4, fixed_abs, tag = 'smem constant byte address 0x4 - core index']
  #allocation1 [shape = 'u32[144,128]{1,0:T(1,128)}', space=vmem, size = 0x12000, scoped, tag = 'internal scratch']
  %s0 = inlined_call_operand.vmem [shape: bf16[64,1152], index: 0, kind: input, shape index: {}]
  %s1 = inlined_call_operand.vmem [shape: bf16[1152,128], index: 1, kind: input, shape index: {}]
  %s2 = inlined_call_operand.vmem [shape: f32[1,128], index: 2, kind: input, shape index: {}]
  %s3 = inlined_call_operand.vmem [shape: f32[1,128], index: 3, kind: input, shape index: {}]
  %s4 = inlined_call_operand.vmem [shape: bf16[64,128], index: 4, kind: output, shape index: {}]
  %s5 = sld [smem:[#allocation0]]
  $region26: #{pool_to_feature_vector.6} parent=0
    _
  %s7 = ssub.s32 1, %s5
  %s8 = scalar_select 0, %s7, %s5
  // Predicated region
  $region2: #{pool_to_feature_vector.6} parent=0 // pred_check
    _
  $region3: #{pool_to_feature_vector.6} parent=0 // pred_check_branch
    %10 = sbr.rel (0) target = $region5
  $region4: #{pool_to_feature_vector.6} parent=0 // pred_region
    _
  $region5: #{pool_to_feature_vector.6} parent=0 // pred_fallthru
    _
  // Predicated region
  $region6: #{pool_to_feature_vector.6} parent=0 // pred_check
    _
  $region7: #{pool_to_feature_vector.6} parent=0 // pred_check_branch
    %12 = sbr.rel (0) target = $region9
  $region8: #{pool_to_feature_vector.6} parent=0 // pred_region
    _
  $region9: #{pool_to_feature_vector.6} parent=0 // pred_fallthru
    _
  // Predicated region
  $region10: #{pool_to_feature_vector.6} parent=0 // pred_check
    _
  $region11: #{pool_to_feature_vector.6} parent=0 // pred_check_branch
    %14 = sbr.rel (0) target = $region13
  $region12: #{pool_to_feature_vector.6} parent=0 // pred_region
    _
  $region13: #{pool_to_feature_vector.6} parent=0 // pred_fallthru
    _
  // Predicated region
  $region14: #{pool_to_feature_vector.6} parent=0 // pred_check
    _
  $region15: #{pool_to_feature_vector.6} parent=0 // pred_check_branch
    %16 = sbr.rel (0) target = $region17
  $region16: #{pool_to_feature_vector.6} parent=0 // pred_region
    _
  $region17: #{pool_to_feature_vector.6} parent=0 // pred_fallthru
    _
  %v18 = vld [vmem:[%s0] sm:$0xff]
  %v19 = vld [vmem:[%s0 + $0x8] sm:$0xff]
  %v20 = vld [vmem:[%s0 + $0x10] sm:$0xff]
  %v21 = vld [vmem:[%s0 + $0x18] sm:$0xff]
  %v22 = vld [vmem:[%s0 + $0x20] sm:$0xf]
  %v23 = vld [vmem:[%s0 + $0x24] sm:$0xff]
  %v24 = vld [vmem:[%s0 + $0x2c] sm:$0xff]
  %v25 = vld [vmem:[%s0 + $0x34] sm:$0xff]
  %v26 = vld [vmem:[%s0 + $0x3c] sm:$0xff]
  %v27 = vld [vmem:[%s0 + $0x44] sm:$0xf]
  %v28 = vld [vmem:[%s0 + $0x48] sm:$0xff]
  %v29 = vld [vmem:[%s0 + $0x50] sm:$0xff]
  %v30 = vld [vmem:[%s0 + $0x58] sm:$0xff]
  %v31 = vld [vmem:[%s0 + $0x60] sm:$0xff]
  %v32 = vld [vmem:[%s0 + $0x68] sm:$0xf]
  %v33 = vld [vmem:[%s0 + $0x6c] sm:$0xff]
  %v34 = vld [vmem:[%s0 + $0x74] sm:$0xff]
  %v35 = vld [vmem:[%s0 + $0x7c] sm:$0xff]
  %v36 = vld [vmem:[%s0 + $0x84] sm:$0xff]
  %v37 = vld [vmem:[%s0 + $0x8c] sm:$0xf]
  %v38 = vld [vmem:[%s0 + $0x90] sm:$0xff]
  %v39 = vld [vmem:[%s0 + $0x98] sm:$0xff]
  %v40 = vld [vmem:[%s0 + $0xa0] sm:$0xff]
  %v41 = vld [vmem:[%s0 + $0xa8] sm:$0xff]
  %v42 = vld [vmem:[%s0 + $0xb0] sm:$0xf]
  %v43 = vld [vmem:[%s0 + $0xb4] sm:$0xff]
  %v44 = vld [vmem:[%s0 + $0xbc] sm:$0xff]
  %v45 = vld [vmem:[%s0 + $0xc4] sm:$0xff]
  %v46 = vld [vmem:[%s0 + $0xcc] sm:$0xff]
  %v47 = vld [vmem:[%s0 + $0xd4] sm:$0xf]
  %v48 = vld [vmem:[%s0 + $0xd8] sm:$0xff]
  %v49 = vld [vmem:[%s0 + $0xe0] sm:$0xff]
  %v50 = vld [vmem:[%s0 + $0xe8] sm:$0xff]
  %v51 = vld [vmem:[%s0 + $0xf0] sm:$0xff]
  %v52 = vld [vmem:[%s0 + $0xf8] sm:$0xf]
  %v53 = vld [vmem:[%s0 + $0xfc] sm:$0xff]
  %v54 = vld [vmem:[%s0 + $0x104] sm:$0xff]
  %v55 = vld [vmem:[%s0 + $0x10c] sm:$0xff]
  %v56 = vld [vmem:[%s0 + $0x114] sm:$0xff]
  %v57 = vld [vmem:[%s0 + $0x11c] sm:$0xf]
  %v58 = vld [vmem:[%s1] sm:$0xf]
  %v59 = vld [vmem:[%s1 + $0x4] sm:$0xf]
  %v60 = vld [vmem:[%s1 + $0x8] sm:$0xf]
  %v61 = vld [vmem:[%s1 + $0xc] sm:$0xf]
  %v62 = vld [vmem:[%s1 + $0x10] sm:$0xf]
  %v63 = vld [vmem:[%s1 + $0x14] sm:$0xf]
  %v64 = vld [vmem:[%s1 + $0x18] sm:$0xf]
  %v65 = vld [vmem:[%s1 + $0x1c] sm:$0xf]
  %v66 = vld [vmem:[%s1 + $0x20] sm:$0xf]
  %v67 = vld [vmem:[%s1 + $0x24] sm:$0xf]
  %v68 = vld [vmem:[%s1 + $0x28] sm:$0xf]
  %v69 = vld [vmem:[%s1 + $0x2c] sm:$0xf]
  %v70 = vld [vmem:[%s1 + $0x30] sm:$0xf]
  %v71 = vld [vmem:[%s1 + $0x34] sm:$0xf]
  %v72 = vld [vmem:[%s1 + $0x38] sm:$0xf]
  %v73 = vld [vmem:[%s1 + $0x3c] sm:$0xf]
  %v74 = vld [vmem:[%s1 + $0x40] sm:$0xf]
  %v75 = vld [vmem:[%s1 + $0x44] sm:$0xf]
  %v76 = vld [vmem:[%s1 + $0x48] sm:$0xf]
  %v77 = vld [vmem:[%s1 + $0x4c] sm:$0xf]
  %v78 = vld [vmem:[%s1 + $0x50] sm:$0xf]
  %v79 = vld [vmem:[%s1 + $0x54] sm:$0xf]
  %v80 = vld [vmem:[%s1 + $0x58] sm:$0xf]
  %v81 = vld [vmem:[%s1 + $0x5c] sm:$0xf]
  %v82 = vld [vmem:[%s1 + $0x60] sm:$0xf]
  %v83 = vld [vmem:[%s1 + $0x64] sm:$0xf]
  %v84 = vld [vmem:[%s1 + $0x68] sm:$0xf]
  %v85 = vld [vmem:[%s1 + $0x6c] sm:$0xf]
  %v86 = vld [vmem:[%s1 + $0x70] sm:$0xf]
  %v87 = vld [vmem:[%s1 + $0x74] sm:$0xf]
  %v88 = vld [vmem:[%s1 + $0x78] sm:$0xf]
  %v89 = vld [vmem:[%s1 + $0x7c] sm:$0xf]
  %v90 = vld [vmem:[%s1 + $0x80] sm:$0xf]
  %v91 = vld [vmem:[%s1 + $0x84] sm:$0xf]
  %v92 = vld [vmem:[%s1 + $0x88] sm:$0xf]
  %v93 = vld [vmem:[%s1 + $0x8c] sm:$0xf]
  %v94 = vld [vmem:[%s1 + $0x90] sm:$0xf]
  %v95 = vld [vmem:[%s1 + $0x94] sm:$0xf]
  %v96 = vld [vmem:[%s1 + $0x98] sm:$0xf]
  %v97 = vld [vmem:[%s1 + $0x9c] sm:$0xf]
  %v98 = vld [vmem:[%s1 + $0xa0] sm:$0xf]
  %v99 = vld [vmem:[%s1 + $0xa4] sm:$0xf]
  %v100 = vld [vmem:[%s1 + $0xa8] sm:$0xf]
  %v101 = vld [vmem:[%s1 + $0xac] sm:$0xf]
  %v102 = vld [vmem:[%s1 + $0xb0] sm:$0xf]
  %v103 = vld [vmem:[%s1 + $0xb4] sm:$0xf]
  %v104 = vld [vmem:[%s1 + $0xb8] sm:$0xf]
  %v105 = vld [vmem:[%s1 + $0xbc] sm:$0xf]
  %v106 = vld [vmem:[%s1 + $0xc0] sm:$0xf]
  %v107 = vld [vmem:[%s1 + $0xc4] sm:$0xf]
  %v108 = vld [vmem:[%s1 + $0xc8] sm:$0xf]
  %v109 = vld [vmem:[%s1 + $0xcc] sm:$0xf]
  %v110 = vld [vmem:[%s1 + $0xd0] sm:$0xf]
  %v111 = vld [vmem:[%s1 + $0xd4] sm:$0xf]
  %v112 = vld [vmem:[%s1 + $0xd8] sm:$0xf]
  %v113 = vld [vmem:[%s1 + $0xdc] sm:$0xf]
  %v114 = vld [vmem:[%s1 + $0xe0] sm:$0xf]
  %v115 = vld [vmem:[%s1 + $0xe4] sm:$0xf]
  %v116 = vld [vmem:[%s1 + $0xe8] sm:$0xf]
  %v117 = vld [vmem:[%s1 + $0xec] sm:$0xf]
  %v118 = vld [vmem:[%s1 + $0xf0] sm:$0xf]
  %v119 = vld [vmem:[%s1 + $0xf4] sm:$0xf]
  %v120 = vld [vmem:[%s1 + $0xf8] sm:$0xf]
  %v121 = vld [vmem:[%s1 + $0xfc] sm:$0xf]
  %v122 = vld [vmem:[%s1 + $0x100] sm:$0xf]
  %v123 = vld [vmem:[%s1 + $0x104] sm:$0xf]
  %v124 = vld [vmem:[%s1 + $0x108] sm:$0xf]
  %v125 = vld [vmem:[%s1 + $0x10c] sm:$0xf]
  %v126 = vld [vmem:[%s1 + $0x110] sm:$0xf]
  %v127 = vld [vmem:[%s1 + $0x114] sm:$0xf]
  %v128 = vld [vmem:[%s1 + $0x118] sm:$0xf]
  %v129 = vld [vmem:[%s1 + $0x11c] sm:$0xf]
  %v130 = vld [vmem:[%s1 + $0x120] sm:$0xf]
  %v131 = vld [vmem:[%s1 + $0x124] sm:$0xf]
  %v132 = vld [vmem:[%s1 + $0x128] sm:$0xf]
  %v133 = vld [vmem:[%s1 + $0x12c] sm:$0xf]
  %v134 = vld [vmem:[%s1 + $0x130] sm:$0xf]
  %v135 = vld [vmem:[%s1 + $0x134] sm:$0xf]
  %v136 = vld [vmem:[%s1 + $0x138] sm:$0xf]
  %v137 = vld [vmem:[%s1 + $0x13c] sm:$0xf]
  %v138 = vld [vmem:[%s1 + $0x140] sm:$0xf]
  %v139 = vld [vmem:[%s1 + $0x144] sm:$0xf]
  %v140 = vld [vmem:[%s1 + $0x148] sm:$0xf]
  %v141 = vld [vmem:[%s1 + $0x14c] sm:$0xf]
  %v142 = vld [vmem:[%s1 + $0x150] sm:$0xf]
  %v143 = vld [vmem:[%s1 + $0x154] sm:$0xf]
  %v144 = vld [vmem:[%s1 + $0x158] sm:$0xf]
  %v145 = vld [vmem:[%s1 + $0x15c] sm:$0xf]
  %v146 = vld [vmem:[%s1 + $0x160] sm:$0xf]
  %v147 = vld [vmem:[%s1 + $0x164] sm:$0xf]
  %v148 = vld [vmem:[%s1 + $0x168] sm:$0xf]
  %v149 = vld [vmem:[%s1 + $0x16c] sm:$0xf]
  %v150 = vld [vmem:[%s1 + $0x170] sm:$0xf]
  %v151 = vld [vmem:[%s1 + $0x174] sm:$0xf]
  %v152 = vld [vmem:[%s1 + $0x178] sm:$0xf]
  %v153 = vld [vmem:[%s1 + $0x17c] sm:$0xf]
  %v154 = vld [vmem:[%s1 + $0x180] sm:$0xf]
  %v155 = vld [vmem:[%s1 + $0x184] sm:$0xf]
  %v156 = vld [vmem:[%s1 + $0x188] sm:$0xf]
  %v157 = vld [vmem:[%s1 + $0x18c] sm:$0xf]
  %v158 = vld [vmem:[%s1 + $0x190] sm:$0xf]
  %v159 = vld [vmem:[%s1 + $0x194] sm:$0xf]
  %v160 = vld [vmem:[%s1 + $0x198] sm:$0xf]
  %v161 = vld [vmem:[%s1 + $0x19c] sm:$0xf]
  %v162 = vld [vmem:[%s1 + $0x1a0] sm:$0xf]
  %v163 = vld [vmem:[%s1 + $0x1a4] sm:$0xf]
  %v164 = vld [vmem:[%s1 + $0x1a8] sm:$0xf]
  %v165 = vld [vmem:[%s1 + $0x1ac] sm:$0xf]
  %v166 = vld [vmem:[%s1 + $0x1b0] sm:$0xf]
  %v167 = vld [vmem:[%s1 + $0x1b4] sm:$0xf]
  %v168 = vld [vmem:[%s1 + $0x1b8] sm:$0xf]
  %v169 = vld [vmem:[%s1 + $0x1bc] sm:$0xf]
  %v170 = vld [vmem:[%s1 + $0x1c0] sm:$0xf]
  %v171 = vld [vmem:[%s1 + $0x1c4] sm:$0xf]
  %v172 = vld [vmem:[%s1 + $0x1c8] sm:$0xf]
  %v173 = vld [vmem:[%s1 + $0x1cc] sm:$0xf]
  %v174 = vld [vmem:[%s1 + $0x1d0] sm:$0xf]
  %v175 = vld [vmem:[%s1 + $0x1d4] sm:$0xf]
  %v176 = vld [vmem:[%s1 + $0x1d8] sm:$0xf]
  %v177 = vld [vmem:[%s1 + $0x1dc] sm:$0xf]
  %v178 = vld [vmem:[%s1 + $0x1e0] sm:$0xf]
  %v179 = vld [vmem:[%s1 + $0x1e4] sm:$0xf]
  %v180 = vld [vmem:[%s1 + $0x1e8] sm:$0xf]
  %v181 = vld [vmem:[%s1 + $0x1ec] sm:$0xf]
  %v182 = vld [vmem:[%s1 + $0x1f0] sm:$0xf]
  %v183 = vld [vmem:[%s1 + $0x1f4] sm:$0xf]
  %v184 = vld [vmem:[%s1 + $0x1f8] sm:$0xf]
  %v185 = vld [vmem:[%s1 + $0x1fc] sm:$0xf]
  %v186 = vld [vmem:[%s1 + $0x200] sm:$0xf]
  %v187 = vld [vmem:[%s1 + $0x204] sm:$0xf]
  %v188 = vld [vmem:[%s1 + $0x208] sm:$0xf]
  %v189 = vld [vmem:[%s1 + $0x20c] sm:$0xf]
  %v190 = vld [vmem:[%s1 + $0x210] sm:$0xf]
  %v191 = vld [vmem:[%s1 + $0x214] sm:$0xf]
  %v192 = vld [vmem:[%s1 + $0x218] sm:$0xf]
  %v193 = vld [vmem:[%s1 + $0x21c] sm:$0xf]
  %v194 = vld [vmem:[%s1 + $0x220] sm:$0xf]
  %v195 = vld [vmem:[%s1 + $0x224] sm:$0xf]
  %v196 = vld [vmem:[%s1 + $0x228] sm:$0xf]
  %v197 = vld [vmem:[%s1 + $0x22c] sm:$0xf]
  %v198 = vld [vmem:[%s1 + $0x230] sm:$0xf]
  %v199 = vld [vmem:[%s1 + $0x234] sm:$0xf]
  %v200 = vld [vmem:[%s1 + $0x238] sm:$0xf]
  %v201 = vld [vmem:[%s1 + $0x23c] sm:$0xf]
  %v242 = vunpack.c.l.b16 %v18
  %v243 = vunpack.c.h.b16 %v18
  %v244 = vunpack.c.l.b16 %v19
  %v245 = vunpack.c.h.b16 %v19
  %v246 = vunpack.c.l.b16 %v20
  %v247 = vunpack.c.h.b16 %v20
  %v248 = vunpack.c.l.b16 %v21
  %v249 = vunpack.c.h.b16 %v21
  %v250 = vunpack.c.l.b16 %v22
  %v251 = vunpack.c.l.b16 %v23
  %v252 = vunpack.c.h.b16 %v23
  %v253 = vunpack.c.l.b16 %v24
  %v254 = vunpack.c.h.b16 %v24
  %v255 = vunpack.c.l.b16 %v25
  %v256 = vunpack.c.h.b16 %v25
  %v257 = vunpack.c.l.b16 %v26
  %v258 = vunpack.c.h.b16 %v26
  %v259 = vunpack.c.l.b16 %v27
  %v260 = vunpack.c.l.b16 %v28
  %v261 = vunpack.c.h.b16 %v28
  %v262 = vunpack.c.l.b16 %v29
  %v263 = vunpack.c.h.b16 %v29
  %v264 = vunpack.c.l.b16 %v30
  %v265 = vunpack.c.h.b16 %v30
  %v266 = vunpack.c.l.b16 %v31
  %v267 = vunpack.c.h.b16 %v31
  %v268 = vunpack.c.l.b16 %v32
  %v269 = vunpack.c.l.b16 %v33
  %v270 = vunpack.c.h.b16 %v33
  %v271 = vunpack.c.l.b16 %v34
  %v272 = vunpack.c.h.b16 %v34
  %v273 = vunpack.c.l.b16 %v35
  %v274 = vunpack.c.h.b16 %v35
  %v275 = vunpack.c.l.b16 %v36
  %v276 = vunpack.c.h.b16 %v36
  %v277 = vunpack.c.l.b16 %v37
  %v278 = vunpack.c.l.b16 %v38
  %v279 = vunpack.c.h.b16 %v38
  %v280 = vunpack.c.l.b16 %v39
  %v281 = vunpack.c.h.b16 %v39
  %v282 = vunpack.c.l.b16 %v40
  %v283 = vunpack.c.h.b16 %v40
  %v284 = vunpack.c.l.b16 %v41
  %v285 = vunpack.c.h.b16 %v41
  %v286 = vunpack.c.l.b16 %v42
  %v287 = vunpack.c.l.b16 %v43
  %v288 = vunpack.c.h.b16 %v43
  %v289 = vunpack.c.l.b16 %v44
  %v290 = vunpack.c.h.b16 %v44
  %v291 = vunpack.c.l.b16 %v45
  %v292 = vunpack.c.h.b16 %v45
  %v293 = vunpack.c.l.b16 %v46
  %v294 = vunpack.c.h.b16 %v46
  %v295 = vunpack.c.l.b16 %v47
  %v296 = vunpack.c.l.b16 %v48
  %v297 = vunpack.c.h.b16 %v48
  %v298 = vunpack.c.l.b16 %v49
  %v299 = vunpack.c.h.b16 %v49
  %v300 = vunpack.c.l.b16 %v50
  %v301 = vunpack.c.h.b16 %v50
  %v302 = vunpack.c.l.b16 %v51
  %v303 = vunpack.c.h.b16 %v51
  %v304 = vunpack.c.l.b16 %v52
  %v305 = vunpack.c.l.b16 %v53
  %v306 = vunpack.c.h.b16 %v53
  %v307 = vunpack.c.l.b16 %v54
  %v308 = vunpack.c.h.b16 %v54
  %v309 = vunpack.c.l.b16 %v55
  %v310 = vunpack.c.h.b16 %v55
  %v311 = vunpack.c.l.b16 %v56
  %v312 = vunpack.c.h.b16 %v56
  %v313 = vunpack.c.l.b16 %v57
  %v314 = vpack.c.b16 %v251, %v242
  %v315 = vpack.c.b16 %v252, %v243
  %v316 = vpack.c.b16 %v253, %v244
  %v317 = vpack.c.b16 %v254, %v245
  %v318 = vpack.c.b16 %v255, %v246
  %v319 = vpack.c.b16 %v256, %v247
  %v320 = vpack.c.b16 %v257, %v248
  %v321 = vpack.c.b16 %v258, %v249
  %v322 = vpack.c.b16 %v259, %v250
  %v323 = vpack.c.b16 %v269, %v260
  %v324 = vpack.c.b16 %v270, %v261
  %v325 = vpack.c.b16 %v271, %v262
  %v326 = vpack.c.b16 %v272, %v263
  %v327 = vpack.c.b16 %v273, %v264
  %v328 = vpack.c.b16 %v274, %v265
  %v329 = vpack.c.b16 %v275, %v266
  %v330 = vpack.c.b16 %v276, %v267
  %v331 = vpack.c.b16 %v277, %v268
  %v332 = vpack.c.b16 %v287, %v278
  %v333 = vpack.c.b16 %v288, %v279
  %v334 = vpack.c.b16 %v289, %v280
  %v335 = vpack.c.b16 %v290, %v281
  %v336 = vpack.c.b16 %v291, %v282
  %v337 = vpack.c.b16 %v292, %v283
  %v338 = vpack.c.b16 %v293, %v284
  %v339 = vpack.c.b16 %v294, %v285
  %v340 = vpack.c.b16 %v295, %v286
  %v341 = vpack.c.b16 %v305, %v296
  %v342 = vpack.c.b16 %v306, %v297
  %v343 = vpack.c.b16 %v307, %v298
  %v344 = vpack.c.b16 %v308, %v299
  %v345 = vpack.c.b16 %v309, %v300
  %v346 = vpack.c.b16 %v310, %v301
  %v347 = vpack.c.b16 %v311, %v302
  %v348 = vpack.c.b16 %v312, %v303
  %v349 = vpack.c.b16 %v313, %v304
  %v530 = vunpack.c.l.b16 %v58
  %v531 = vunpack.c.l.b16 %v59
  %v532 = vunpack.c.l.b16 %v60
  %v533 = vunpack.c.l.b16 %v61
  %v534 = vunpack.c.l.b16 %v62
  %v535 = vunpack.c.l.b16 %v63
  %v536 = vunpack.c.l.b16 %v64
  %v537 = vunpack.c.l.b16 %v65
  %v538 = vunpack.c.l.b16 %v66
  %v539 = vunpack.c.l.b16 %v67
  %v540 = vunpack.c.l.b16 %v68
  %v541 = vunpack.c.l.b16 %v69
  %v542 = vunpack.c.l.b16 %v70
  %v543 = vunpack.c.l.b16 %v71
  %v544 = vunpack.c.l.b16 %v72
  %v545 = vunpack.c.l.b16 %v73
  %v546 = vunpack.c.l.b16 %v74
  %v547 = vunpack.c.l.b16 %v75
  %v548 = vunpack.c.l.b16 %v76
  %v549 = vunpack.c.l.b16 %v77
  %v550 = vunpack.c.l.b16 %v78
  %v551 = vunpack.c.l.b16 %v79
  %v552 = vunpack.c.l.b16 %v80
  %v553 = vunpack.c.l.b16 %v81
  %v554 = vunpack.c.l.b16 %v82
  %v555 = vunpack.c.l.b16 %v83
  %v556 = vunpack.c.l.b16 %v84
  %v557 = vunpack.c.l.b16 %v85
  %v558 = vunpack.c.l.b16 %v86
  %v559 = vunpack.c.l.b16 %v87
  %v560 = vunpack.c.l.b16 %v88
  %v561 = vunpack.c.l.b16 %v89
  %v562 = vunpack.c.l.b16 %v90
  %v563 = vunpack.c.l.b16 %v91
  %v564 = vunpack.c.l.b16 %v92
  %v565 = vunpack.c.l.b16 %v93
  %v566 = vunpack.c.l.b16 %v94
  %v567 = vunpack.c.l.b16 %v95
  %v568 = vunpack.c.l.b16 %v96
  %v569 = vunpack.c.l.b16 %v97
  %v570 = vunpack.c.l.b16 %v98
  %v571 = vunpack.c.l.b16 %v99
  %v572 = vunpack.c.l.b16 %v100
  %v573 = vunpack.c.l.b16 %v101
  %v574 = vunpack.c.l.b16 %v102
  %v575 = vunpack.c.l.b16 %v103
  %v576 = vunpack.c.l.b16 %v104
  %v577 = vunpack.c.l.b16 %v105
  %v578 = vunpack.c.l.b16 %v106
  %v579 = vunpack.c.l.b16 %v107
  %v580 = vunpack.c.l.b16 %v108
  %v581 = vunpack.c.l.b16 %v109
  %v582 = vunpack.c.l.b16 %v110
  %v583 = vunpack.c.l.b16 %v111
  %v584 = vunpack.c.l.b16 %v112
  %v585 = vunpack.c.l.b16 %v113
  %v586 = vunpack.c.l.b16 %v114
  %v587 = vunpack.c.l.b16 %v115
  %v588 = vunpack.c.l.b16 %v116
  %v589 = vunpack.c.l.b16 %v117
  %v590 = vunpack.c.l.b16 %v118
  %v591 = vunpack.c.l.b16 %v119
  %v592 = vunpack.c.l.b16 %v120
  %v593 = vunpack.c.l.b16 %v121
  %v594 = vunpack.c.l.b16 %v122
  %v595 = vunpack.c.l.b16 %v123
  %v596 = vunpack.c.l.b16 %v124
  %v597 = vunpack.c.l.b16 %v125
  %v598 = vunpack.c.l.b16 %v126
  %v599 = vunpack.c.l.b16 %v127
  %v600 = vunpack.c.l.b16 %v128
  %v601 = vunpack.c.l.b16 %v129
  %v602 = vunpack.c.l.b16 %v130
  %v603 = vunpack.c.l.b16 %v131
  %v604 = vunpack.c.l.b16 %v132
  %v605 = vunpack.c.l.b16 %v133
  %v606 = vunpack.c.l.b16 %v134
  %v607 = vunpack.c.l.b16 %v135
  %v608 = vunpack.c.l.b16 %v136
  %v609 = vunpack.c.l.b16 %v137
  %v610 = vunpack.c.l.b16 %v138
  %v611 = vunpack.c.l.b16 %v139
  %v612 = vunpack.c.l.b16 %v140
  %v613 = vunpack.c.l.b16 %v141
  %v614 = vunpack.c.l.b16 %v142
  %v615 = vunpack.c.l.b16 %v143
  %v616 = vunpack.c.l.b16 %v144
  %v617 = vunpack.c.l.b16 %v145
  %v618 = vunpack.c.l.b16 %v146
  %v619 = vunpack.c.l.b16 %v147
  %v620 = vunpack.c.l.b16 %v148
  %v621 = vunpack.c.l.b16 %v149
  %v622 = vunpack.c.l.b16 %v150
  %v623 = vunpack.c.l.b16 %v151
  %v624 = vunpack.c.l.b16 %v152
  %v625 = vunpack.c.l.b16 %v153
  %v626 = vunpack.c.l.b16 %v154
  %v627 = vunpack.c.l.b16 %v155
  %v628 = vunpack.c.l.b16 %v156
  %v629 = vunpack.c.l.b16 %v157
  %v630 = vunpack.c.l.b16 %v158
  %v631 = vunpack.c.l.b16 %v159
  %v632 = vunpack.c.l.b16 %v160
  %v633 = vunpack.c.l.b16 %v161
  %v634 = vunpack.c.l.b16 %v162
  %v635 = vunpack.c.l.b16 %v163
  %v636 = vunpack.c.l.b16 %v164
  %v637 = vunpack.c.l.b16 %v165
  %v638 = vunpack.c.l.b16 %v166
  %v639 = vunpack.c.l.b16 %v167
  %v640 = vunpack.c.l.b16 %v168
  %v641 = vunpack.c.l.b16 %v169
  %v642 = vunpack.c.l.b16 %v170
  %v643 = vunpack.c.l.b16 %v171
  %v644 = vunpack.c.l.b16 %v172
  %v645 = vunpack.c.l.b16 %v173
  %v646 = vunpack.c.l.b16 %v174
  %v647 = vunpack.c.l.b16 %v175
  %v648 = vunpack.c.l.b16 %v176
  %v649 = vunpack.c.l.b16 %v177
  %v650 = vunpack.c.l.b16 %v178
  %v651 = vunpack.c.l.b16 %v179
  %v652 = vunpack.c.l.b16 %v180
  %v653 = vunpack.c.l.b16 %v181
  %v654 = vunpack.c.l.b16 %v182
  %v655 = vunpack.c.l.b16 %v183
  %v656 = vunpack.c.l.b16 %v184
  %v657 = vunpack.c.l.b16 %v185
  %v658 = vunpack.c.l.b16 %v186
  %v659 = vunpack.c.l.b16 %v187
  %v660 = vunpack.c.l.b16 %v188
  %v661 = vunpack.c.l.b16 %v189
  %v662 = vunpack.c.l.b16 %v190
  %v663 = vunpack.c.l.b16 %v191
  %v664 = vunpack.c.l.b16 %v192
  %v665 = vunpack.c.l.b16 %v193
  %v666 = vunpack.c.l.b16 %v194
  %v667 = vunpack.c.l.b16 %v195
  %v668 = vunpack.c.l.b16 %v196
  %v669 = vunpack.c.l.b16 %v197
  %v670 = vunpack.c.l.b16 %v198
  %v671 = vunpack.c.l.b16 %v199
  %v672 = vunpack.c.l.b16 %v200
  %v673 = vunpack.c.l.b16 %v201
  %v674 = vpack.c.b16 %v531, %v530
  %v675 = vpack.c.b16 %v533, %v532
  %v676 = vpack.c.b16 %v535, %v534
  %v677 = vpack.c.b16 %v537, %v536
  %v678 = vpack.c.b16 %v539, %v538
  %v679 = vpack.c.b16 %v541, %v540
  %v680 = vpack.c.b16 %v543, %v542
  %v681 = vpack.c.b16 %v545, %v544
  %v682 = vpack.c.b16 %v547, %v546
  %v683 = vpack.c.b16 %v549, %v548
  %v684 = vpack.c.b16 %v551, %v550
  %v685 = vpack.c.b16 %v553, %v552
  %v686 = vpack.c.b16 %v555, %v554
  %v687 = vpack.c.b16 %v557, %v556
  %v688 = vpack.c.b16 %v559, %v558
  %v689 = vpack.c.b16 %v561, %v560
  %v690 = vpack.c.b16 %v563, %v562
  %v691 = vpack.c.b16 %v565, %v564
  %v692 = vpack.c.b16 %v567, %v566
  %v693 = vpack.c.b16 %v569, %v568
  %v694 = vpack.c.b16 %v571, %v570
  %v695 = vpack.c.b16 %v573, %v572
  %v696 = vpack.c.b16 %v575, %v574
  %v697 = vpack.c.b16 %v577, %v576
  %v698 = vpack.c.b16 %v579, %v578
  %v699 = vpack.c.b16 %v581, %v580
  %v700 = vpack.c.b16 %v583, %v582
  %v701 = vpack.c.b16 %v585, %v584
  %v702 = vpack.c.b16 %v587, %v586
  %v703 = vpack.c.b16 %v589, %v588
  %v704 = vpack.c.b16 %v591, %v590
  %v705 = vpack.c.b16 %v593, %v592
  %v706 = vpack.c.b16 %v595, %v594
  %v707 = vpack.c.b16 %v597, %v596
  %v708 = vpack.c.b16 %v599, %v598
  %v709 = vpack.c.b16 %v601, %v600
  %v710 = vpack.c.b16 %v603, %v602
  %v711 = vpack.c.b16 %v605, %v604
  %v712 = vpack.c.b16 %v607, %v606
  %v713 = vpack.c.b16 %v609, %v608
  %v714 = vpack.c.b16 %v611, %v610
  %v715 = vpack.c.b16 %v613, %v612
  %v716 = vpack.c.b16 %v615, %v614
  %v717 = vpack.c.b16 %v617, %v616
  %v718 = vpack.c.b16 %v619, %v618
  %v719 = vpack.c.b16 %v621, %v620
  %v720 = vpack.c.b16 %v623, %v622
  %v721 = vpack.c.b16 %v625, %v624
  %v722 = vpack.c.b16 %v627, %v626
  %v723 = vpack.c.b16 %v629, %v628
  %v724 = vpack.c.b16 %v631, %v630
  %v725 = vpack.c.b16 %v633, %v632
  %v726 = vpack.c.b16 %v635, %v634
  %v727 = vpack.c.b16 %v637, %v636
  %v728 = vpack.c.b16 %v639, %v638
  %v729 = vpack.c.b16 %v641, %v640
  %v730 = vpack.c.b16 %v643, %v642
  %v731 = vpack.c.b16 %v645, %v644
  %v732 = vpack.c.b16 %v647, %v646
  %v733 = vpack.c.b16 %v649, %v648
  %v734 = vpack.c.b16 %v651, %v650
  %v735 = vpack.c.b16 %v653, %v652
  %v736 = vpack.c.b16 %v655, %v654
  %v737 = vpack.c.b16 %v657, %v656
  %v738 = vpack.c.b16 %v659, %v658
  %v739 = vpack.c.b16 %v661, %v660
  %v740 = vpack.c.b16 %v663, %v662
  %v741 = vpack.c.b16 %v665, %v664
  %v742 = vpack.c.b16 %v667, %v666
  %v743 = vpack.c.b16 %v669, %v668
  %v744 = vpack.c.b16 %v671, %v670
  %v745 = vpack.c.b16 %v673, %v672
  %818 = vmatprep.subr.bf16.mxu0 0
  %819 = vmatpush1.bf16.msra.mxu0 %v674
  %820 = vmatprep.subr.bf16.mxu0 0
  %821 = vmatpush1.bf16.msra.mxu0 %v675
  %822 = vmatprep.subr.bf16.mxu0 0
  %823 = vmatpush1.bf16.msra.mxu0 %v676
  %824 = vmatprep.subr.bf16.mxu0 0
  %825 = vmatpush1.bf16.msra.mxu0 %v677
  %826 = vmatprep.subr.bf16.mxu0 0
  %827 = vmatpush1.bf16.msra.mxu0 %v678
  %828 = vmatprep.subr.bf16.mxu0 0
  %829 = vmatpush1.bf16.msra.mxu0 %v679
  %830 = vmatprep.subr.bf16.mxu0 0
  %831 = vmatpush1.bf16.msra.mxu0 %v680
  %832 = vmatprep.subr.bf16.mxu0 0
  %833 = vmatpush1.bf16.msra.mxu0 %v681
  %834 = vmatprep.subr.bf16.mxu0 0
  %835 = vmatpush1.bf16.msra.mxu0 %v682
  %836 = vmatprep.subr.bf16.mxu0 0
  %837 = vmatpush1.bf16.msra.mxu0 %v683
  %838 = vmatprep.subr.bf16.mxu0 0
  %839 = vmatpush1.bf16.msra.mxu0 %v684
  %840 = vmatprep.subr.bf16.mxu0 0
  %841 = vmatpush1.bf16.msra.mxu0 %v685
  %842 = vmatprep.subr.bf16.mxu0 0
  %843 = vmatpush1.bf16.msra.mxu0 %v686
  %844 = vmatprep.subr.bf16.mxu0 0
  %845 = vmatpush1.bf16.msra.mxu0 %v687
  %846 = vmatprep.subr.bf16.mxu0 0
  %847 = vmatpush1.bf16.msra.mxu0 %v688
  %848 = vmatprep.subr.bf16.mxu0 0
  %849 = vmatpush1.bf16.msra.mxu0 %v689
  %850 = vmatprep.mubr.bf16.mxu0 %v315
  %851 = vmatmul.mubr.bf16.gmra.mrb[0].mxu0 %v314
  %v852 = vpop.f32.mrb[0].mxu0
  %v853 = vadd.f32 0.0, %v852
  %v854 = vpop.f32.mrb[0].mxu0
  %v855 = vpop.f32.mrb[0].mxu0
  %v856 = vadd.f32 0.0, %v855
  %v857 = vpop.f32.mrb[0].mxu0
  %858 = vmatprep.mubr.bf16.mxu0 %v324
  %859 = vmatmul.mubr.bf16.gmra.mrb[0].mxu0 %v323
  %v860 = vpop.f32.mrb[0].mxu0
  %v861 = vadd.f32 0.0, %v860
  %v862 = vpop.f32.mrb[0].mxu0
  %v863 = vpop.f32.mrb[0].mxu0
  %v864 = vadd.f32 0.0, %v863
  %v865 = vpop.f32.mrb[0].mxu0
  %866 = vmatprep.mubr.bf16.mxu0 %v333
  %867 = vmatmul.mubr.bf16.gmra.mrb[0].mxu0 %v332
  %v868 = vpop.f32.mrb[0].mxu0
  %v869 = vadd.f32 0.0, %v868
  %v870 = vpop.f32.mrb[0].mxu0
  %v871 = vpop.f32.mrb[0].mxu0
  %v872 = vadd.f32 0.0, %v871
  %v873 = vpop.f32.mrb[0].mxu0
  %874 = vmatprep.mubr.bf16.mxu0 %v342
  %875 = vmatmul.mubr.bf16.gmra.mrb[0].mxu0 %v341
  %v876 = vpop.f32.mrb[0].mxu0
  %v877 = vadd.f32 0.0, %v876
  %v878 = vpop.f32.mrb[0].mxu0
  %v879 = vpop.f32.mrb[0].mxu0
  %v880 = vadd.f32 0.0, %v879
  %v881 = vpop.f32.mrb[0].mxu0
  %882 = vdwg.mxu0
  %883 = vmatprep.subr.bf16.mxu0 0
  %884 = vmatpush1.bf16.msra.mxu0 %v690
  %885 = vmatprep.subr.bf16.mxu0 0
  %886 = vmatpush1.bf16.msra.mxu0 %v691
  %887 = vmatprep.subr.bf16.mxu0 0
  %888 = vmatpush1.bf16.msra.mxu0 %v692
  %889 = vmatprep.subr.bf16.mxu0 0
  %890 = vmatpush1.bf16.msra.mxu0 %v693
  %891 = vmatprep.subr.bf16.mxu0 0
  %892 = vmatpush1.bf16.msra.mxu0 %v694
  %893 = vmatprep.subr.bf16.mxu0 0
  %894 = vmatpush1.bf16.msra.mxu0 %v695
  %895 = vmatprep.subr.bf16.mxu0 0
  %896 = vmatpush1.bf16.msra.mxu0 %v696
  %897 = vmatprep.subr.bf16.mxu0 0
  %898 = vmatpush1.bf16.msra.mxu0 %v697
  %899 = vmatprep.subr.bf16.mxu0 0
  %900 = vmatpush1.bf16.msra.mxu0 %v698
  %901 = vmatprep.subr.bf16.mxu0 0
  %902 = vmatpush1.bf16.msra.mxu0 %v699
  %903 = vmatprep.subr.bf16.mxu0 0
  %904 = vmatpush1.bf16.msra.mxu0 %v700
  %905 = vmatprep.subr.bf16.mxu0 0
  %906 = vmatpush1.bf16.msra.mxu0 %v701
  %907 = vmatprep.subr.bf16.mxu0 0
  %908 = vmatpush1.bf16.msra.mxu0 %v702
  %909 = vmatprep.subr.bf16.mxu0 0
  %910 = vmatpush1.bf16.msra.mxu0 %v703
  %911 = vmatprep.subr.bf16.mxu0 0
  %912 = vmatpush1.bf16.msra.mxu0 %v704
  %913 = vmatprep.subr.bf16.mxu0 0
  %914 = vmatpush1.bf16.msra.mxu0 %v705
  %915 = vmatprep.mubr.bf16.mxu0 %v317
  %916 = vmatmul.mubr.bf16.gmra.mrb[0].mxu0 %v316
  %v917 = vpop.f32.mrb[0].mxu0
  %v918 = vadd.f32 %v853, %v917
  %v919 = vpop.f32.mrb[0].mxu0
  %v920 = vpop.f32.mrb[0].mxu0
  %v921 = vadd.f32 %v856, %v920
  %v922 = vpop.f32.mrb[0].mxu0
  %923 = vmatprep.mubr.bf16.mxu0 %v326
  %924 = vmatmul.mubr.bf16.gmra.mrb[0].mxu0 %v325
  %v925 = vpop.f32.mrb[0].mxu0
  %v926 = vadd.f32 %v861, %v925
  %v927 = vpop.f32.mrb[0].mxu0
  %v928 = vpop.f32.mrb[0].mxu0
  %v929 = vadd.f32 %v864, %v928
  %v930 = vpop.f32.mrb[0].mxu0
  %931 = vmatprep.mubr.bf16.mxu0 %v335
  %932 = vmatmul.mubr.bf16.gmra.mrb[0].mxu0 %v334
  %v933 = vpop.f32.mrb[0].mxu0
  %v934 = vadd.f32 %v869, %v933
  %v935 = vpop.f32.mrb[0].mxu0
  %v936 = vpop.f32.mrb[0].mxu0
  %v937 = vadd.f32 %v872, %v936
  %v938 = vpop.f32.mrb[0].mxu0
  %939 = vmatprep.mubr.bf16.mxu0 %v344
  %940 = vmatmul.mubr.bf16.gmra.mrb[0].mxu0 %v343
  %v941 = vpop.f32.mrb[0].mxu0
  %v942 = vadd.f32 %v877, %v941
  %v943 = vpop.f32.mrb[0].mxu0
  %v944 = vpop.f32.mrb[0].mxu0
  %v945 = vadd.f32 %v880, %v944
  %v946 = vpop.f32.mrb[0].mxu0
  %947 = vdwg.mxu0
  %948 = vmatprep.subr.bf16.mxu0 0
  %949 = vmatpush1.bf16.msra.mxu0 %v706
  %950 = vmatprep.subr.bf16.mxu0 0
  %951 = vmatpush1.bf16.msra.mxu0 %v707
  %952 = vmatprep.subr.bf16.mxu0 0
  %953 = vmatpush1.bf16.msra.mxu0 %v708
  %954 = vmatprep.subr.bf16.mxu0 0
  %955 = vmatpush1.bf16.msra.mxu0 %v709
  %956 = vmatprep.subr.bf16.mxu0 0
  %957 = vmatpush1.bf16.msra.mxu0 %v710
  %958 = vmatprep.subr.bf16.mxu0 0
  %959 = vmatpush1.bf16.msra.mxu0 %v711
  %960 = vmatprep.subr.bf16.mxu0 0
  %961 = vmatpush1.bf16.msra.mxu0 %v712
  %962 = vmatprep.subr.bf16.mxu0 0
  %963 = vmatpush1.bf16.msra.mxu0 %v713
  %964 = vmatprep.subr.bf16.mxu0 0
  %965 = vmatpush1.bf16.msra.mxu0 %v714
  %966 = vmatprep.subr.bf16.mxu0 0
  %967 = vmatpush1.bf16.msra.mxu0 %v715
  %968 = vmatprep.subr.bf16.mxu0 0
  %969 = vmatpush1.bf16.msra.mxu0 %v716
  %970 = vmatprep.subr.bf16.mxu0 0
  %971 = vmatpush1.bf16.msra.mxu0 %v717
  %972 = vmatprep.subr.bf16.mxu0 0
  %973 = vmatpush1.bf16.msra.mxu0 %v718
  %974 = vmatprep.subr.bf16.mxu0 0
  %975 = vmatpush1.bf16.msra.mxu0 %v719
  %976 = vmatprep.subr.bf16.mxu0 0
  %977 = vmatpush1.bf16.msra.mxu0 %v720
  %978 = vmatprep.subr.bf16.mxu0 0
  %979 = vmatpush1.bf16.msra.mxu0 %v721
  %980 = vmatprep.mubr.bf16.mxu0 %v319
  %981 = vmatmul.mubr.bf16.gmra.mrb[0].mxu0 %v318
  %v982 = vpop.f32.mrb[0].mxu0
  %v983 = vadd.f32 %v918, %v982
  %v984 = vpop.f32.mrb[0].mxu0
  %v985 = vpop.f32.mrb[0].mxu0
  %v986 = vadd.f32 %v921, %v985
  %v987 = vpop.f32.mrb[0].mxu0
  %988 = vmatprep.mubr.bf16.mxu0 %v328
  %989 = vmatmul.mubr.bf16.gmra.mrb[0].mxu0 %v327
  %v990 = vpop.f32.mrb[0].mxu0
  %v991 = vadd.f32 %v926, %v990
  %v992 = vpop.f32.mrb[0].mxu0
  %v993 = vpop.f32.mrb[0].mxu0
  %v994 = vadd.f32 %v929, %v993
  %v995 = vpop.f32.mrb[0].mxu0
  %996 = vmatprep.mubr.bf16.mxu0 %v337
  %997 = vmatmul.mubr.bf16.gmra.mrb[0].mxu0 %v336
  %v998 = vpop.f32.mrb[0].mxu0
  %v999 = vadd.f32 %v934, %v998
  %v1000 = vpop.f32.mrb[0].mxu0
  %v1001 = vpop.f32.mrb[0].mxu0
  %v1002 = vadd.f32 %v937, %v1001
  %v1003 = vpop.f32.mrb[0].mxu0
  %1004 = vmatprep.mubr.bf16.mxu0 %v346
  %1005 = vmatmul.mubr.bf16.gmra.mrb[0].mxu0 %v345
  %v1006 = vpop.f32.mrb[0].mxu0
  %v1007 = vadd.f32 %v942, %v1006
  %v1008 = vpop.f32.mrb[0].mxu0
  %v1009 = vpop.f32.mrb[0].mxu0
  %v1010 = vadd.f32 %v945, %v1009
  %v1011 = vpop.f32.mrb[0].mxu0
  %1012 = vdwg.mxu0
  %1013 = vmatprep.subr.bf16.mxu0 0
  %1014 = vmatpush1.bf16.msra.mxu0 %v722
  %1015 = vmatprep.subr.bf16.mxu0 0
  %1016 = vmatpush1.bf16.msra.mxu0 %v723
  %1017 = vmatprep.subr.bf16.mxu0 0
  %1018 = vmatpush1.bf16.msra.mxu0 %v724
  %1019 = vmatprep.subr.bf16.mxu0 0
  %1020 = vmatpush1.bf16.msra.mxu0 %v725
  %1021 = vmatprep.subr.bf16.mxu0 0
  %1022 = vmatpush1.bf16.msra.mxu0 %v726
  %1023 = vmatprep.subr.bf16.mxu0 0
  %1024 = vmatpush1.bf16.msra.mxu0 %v727
  %1025 = vmatprep.subr.bf16.mxu0 0
  %1026 = vmatpush1.bf16.msra.mxu0 %v728
  %1027 = vmatprep.subr.bf16.mxu0 0
  %1028 = vmatpush1.bf16.msra.mxu0 %v729
  %1029 = vmatprep.subr.bf16.mxu0 0
  %1030 = vmatpush1.bf16.msra.mxu0 %v730
  %1031 = vmatprep.subr.bf16.mxu0 0
  %1032 = vmatpush1.bf16.msra.mxu0 %v731
  %1033 = vmatprep.subr.bf16.mxu0 0
  %1034 = vmatpush1.bf16.msra.mxu0 %v732
  %1035 = vmatprep.subr.bf16.mxu0 0
  %1036 = vmatpush1.bf16.msra.mxu0 %v733
  %1037 = vmatprep.subr.bf16.mxu0 0
  %1038 = vmatpush1.bf16.msra.mxu0 %v734
  %1039 = vmatprep.subr.bf16.mxu0 0
  %1040 = vmatpush1.bf16.msra.mxu0 %v735
  %1041 = vmatprep.subr.bf16.mxu0 0
  %1042 = vmatpush1.bf16.msra.mxu0 %v736
  %1043 = vmatprep.subr.bf16.mxu0 0
  %1044 = vmatpush1.bf16.msra.mxu0 %v737
  %1045 = vmatprep.mubr.bf16.mxu0 %v321
  %1046 = vmatmul.mubr.bf16.gmra.mrb[0].mxu0 %v320
  %v1047 = vpop.f32.mrb[0].mxu0
  %v1048 = vadd.f32 %v983, %v1047
  %v1049 = vpop.f32.mrb[0].mxu0
  %v1050 = vpop.f32.mrb[0].mxu0
  %v1051 = vadd.f32 %v986, %v1050
  %v1052 = vpop.f32.mrb[0].mxu0
  %1053 = vmatprep.mubr.bf16.mxu0 %v330
  %1054 = vmatmul.mubr.bf16.gmra.mrb[0].mxu0 %v329
  %v1055 = vpop.f32.mrb[0].mxu0
  %v1056 = vadd.f32 %v991, %v1055
  %v1057 = vpop.f32.mrb[0].mxu0
  %v1058 = vpop.f32.mrb[0].mxu0
  %v1059 = vadd.f32 %v994, %v1058
  %v1060 = vpop.f32.mrb[0].mxu0
  %1061 = vmatprep.mubr.bf16.mxu0 %v339
  %1062 = vmatmul.mubr.bf16.gmra.mrb[0].mxu0 %v338
  %v1063 = vpop.f32.mrb[0].mxu0
  %v1064 = vadd.f32 %v999, %v1063
  %v1065 = vpop.f32.mrb[0].mxu0
  %v1066 = vpop.f32.mrb[0].mxu0
  %v1067 = vadd.f32 %v1002, %v1066
  %v1068 = vpop.f32.mrb[0].mxu0
  %1069 = vmatprep.mubr.bf16.mxu0 %v348
  %1070 = vmatmul.mubr.bf16.gmra.mrb[0].mxu0 %v347
  %v1071 = vpop.f32.mrb[0].mxu0
  %v1072 = vadd.f32 %v1007, %v1071
  %v1073 = vpop.f32.mrb[0].mxu0
  %v1074 = vpop.f32.mrb[0].mxu0
  %v1075 = vadd.f32 %v1010, %v1074
  %v1076 = vpop.f32.mrb[0].mxu0
  %1077 = vdwg.mxu0
  %1078 = vmatprep.subr.bf16.mxu0 0
  %1079 = vmatpush1.bf16.msra.mxu0 %v738
  %1080 = vmatprep.subr.bf16.mxu0 0
  %1081 = vmatpush1.bf16.msra.mxu0 %v739
  %1082 = vmatprep.subr.bf16.mxu0 0
  %1083 = vmatpush1.bf16.msra.mxu0 %v740
  %1084 = vmatprep.subr.bf16.mxu0 0
  %1085 = vmatpush1.bf16.msra.mxu0 %v741
  %1086 = vmatprep.subr.bf16.mxu0 0
  %1087 = vmatpush1.bf16.msra.mxu0 %v742
  %1088 = vmatprep.subr.bf16.mxu0 0
  %1089 = vmatpush1.bf16.msra.mxu0 %v743
  %1090 = vmatprep.subr.bf16.mxu0 0
  %1091 = vmatpush1.bf16.msra.mxu0 %v744
  %1092 = vmatprep.subr.bf16.mxu0 0
  %1093 = vmatpush1.bf16.msra.mxu0 %v745
  %1094 = vmatprep.subr.bf16.mxu0 0
  %1095 = vmatpush1.bf16.msra.mxu0 0
  %1096 = vmatprep.subr.bf16.mxu0 0
  %1097 = vmatpush1.bf16.msra.mxu0 0
  %1098 = vmatprep.subr.bf16.mxu0 0
  %1099 = vmatpush1.bf16.msra.mxu0 0
  %1100 = vmatprep.subr.bf16.mxu0 0
  %1101 = vmatpush1.bf16.msra.mxu0 0
  %1102 = vmatprep.subr.bf16.mxu0 0
  %1103 = vmatpush1.bf16.msra.mxu0 0
  %1104 = vmatprep.subr.bf16.mxu0 0
  %1105 = vmatpush1.bf16.msra.mxu0 0
  %1106 = vmatprep.subr.bf16.mxu0 0
  %1107 = vmatpush1.bf16.msra.mxu0 0
  %1108 = vmatprep.subr.bf16.mxu0 0
  %1109 = vmatpush1.bf16.msra.mxu0 0
  %1110 = vmatprep.mubr.bf16.mxu0 0
  %1111 = vmatmul.mubr.bf16.gmra.mrb[0].mxu0 %v322
  %v1112 = vpop.f32.mrb[0].mxu0
  %v1113 = vadd.f32 %v1048, %v1112
  %v1114 = vpop.f32.mrb[0].mxu0
  %v1115 = vpop.f32.mrb[0].mxu0
  %v1116 = vadd.f32 %v1051, %v1115
  %v1117 = vpop.f32.mrb[0].mxu0
  %1118 = vmatprep.mubr.bf16.mxu0 0
  %1119 = vmatmul.mubr.bf16.gmra.mrb[0].mxu0 %v331
  %v1120 = vpop.f32.mrb[0].mxu0
  %v1121 = vadd.f32 %v1056, %v1120
  %v1122 = vpop.f32.mrb[0].mxu0
  %v1123 = vpop.f32.mrb[0].mxu0
  %v1124 = vadd.f32 %v1059, %v1123
  %v1125 = vpop.f32.mrb[0].mxu0
  %1126 = vmatprep.mubr.bf16.mxu0 0
  %1127 = vmatmul.mubr.bf16.gmra.mrb[0].mxu0 %v340
  %v1128 = vpop.f32.mrb[0].mxu0
  %v1129 = vadd.f32 %v1064, %v1128
  %v1130 = vpop.f32.mrb[0].mxu0
  %v1131 = vpop.f32.mrb[0].mxu0
  %v1132 = vadd.f32 %v1067, %v1131
  %v1133 = vpop.f32.mrb[0].mxu0
  %1134 = vmatprep.mubr.bf16.mxu0 0
  %1135 = vmatmul.mubr.bf16.gmra.mrb[0].mxu0 %v349
  %v1136 = vpop.f32.mrb[0].mxu0
  %v1137 = vadd.f32 %v1072, %v1136
  %v1138 = vpop.f32.mrb[0].mxu0
  %v1139 = vpop.f32.mrb[0].mxu0
  %v1140 = vadd.f32 %v1075, %v1139
  %v1141 = vpop.f32.mrb[0].mxu0
  %1142 = vdwg.mxu0
  %v1143 = vld [vmem:[%s2] sm:$0x1]
  %v1145 = vlaneseq
  %v1146 = vshrl.u32 %v1145, 7
  %v1147 = vsub.s32 0, %v1146
  %v1148 = vrot.slane %v1143, %v1147
  %v1150 = vmul.f32 %v1113, %v1148
  %v1151 = vmul.f32 %v1116, %v1148
  %v1152 = vmul.f32 %v1121, %v1148
  %v1153 = vmul.f32 %v1124, %v1148
  %v1154 = vmul.f32 %v1129, %v1148
  %v1155 = vmul.f32 %v1132, %v1148
  %v1156 = vmul.f32 %v1137, %v1148
  %v1157 = vmul.f32 %v1140, %v1148
  %v1158 = vld [vmem:[%s3] sm:$0x1]
  %v1160 = vlaneseq
  %v1161 = vshrl.u32 %v1160, 7
  %v1162 = vsub.s32 0, %v1161
  %v1163 = vrot.slane %v1158, %v1162
  %v1165 = vadd.f32 %v1150, %v1163
  %v1166 = vadd.f32 %v1151, %v1163
  %v1167 = vadd.f32 %v1152, %v1163
  %v1168 = vadd.f32 %v1153, %v1163
  %v1169 = vadd.f32 %v1154, %v1163
  %v1170 = vadd.f32 %v1155, %v1163
  %v1171 = vadd.f32 %v1156, %v1163
  %v1172 = vadd.f32 %v1157, %v1163
  %v1173 = vmax.f32 %v1165, 0.0
  %v1174 = vmax.f32 %v1166, 0.0
  %v1175 = vmax.f32 %v1167, 0.0
  %v1176 = vmax.f32 %v1168, 0.0
  %v1177 = vmax.f32 %v1169, 0.0
  %v1178 = vmax.f32 %v1170, 0.0
  %v1179 = vmax.f32 %v1171, 0.0
  %v1180 = vmax.f32 %v1172, 0.0
  %v1181 = vpack.c.bf16 %v1174, %v1173
  %v1182 = vpack.c.bf16 %v1176, %v1175
  %v1183 = vpack.c.bf16 %v1178, %v1177
  %v1184 = vpack.c.bf16 %v1180, %v1179
  %v1189 = vunpack.c.l.b16 %v1181
  %v1190 = vunpack.c.h.b16 %v1181
  %v1191 = vunpack.c.l.b16 %v1182
  %v1192 = vunpack.c.h.b16 %v1182
  %v1193 = vunpack.c.l.b16 %v1183
  %v1194 = vunpack.c.h.b16 %v1183
  %v1195 = vunpack.c.l.b16 %v1184
  %v1196 = vunpack.c.h.b16 %v1184
  %v1197 = vpack.c.b16 %v1189, %v1189
  %v1198 = vpack.c.b16 %v1190, %v1190
  %v1199 = vpack.c.b16 %v1191, %v1191
  %v1200 = vpack.c.b16 %v1192, %v1192
  %v1201 = vpack.c.b16 %v1193, %v1193
  %v1202 = vpack.c.b16 %v1194, %v1194
  %v1203 = vpack.c.b16 %v1195, %v1195
  %v1204 = vpack.c.b16 %v1196, %v1196
  %1213 = vst [vmem:[%s4] sm:$0xf] %v1197
  %1214 = vst [vmem:[%s4 + $0x4] sm:$0xf] %v1198
  %1215 = vst [vmem:[%s4 + $0x8] sm:$0xf] %v1199
  %1216 = vst [vmem:[%s4 + $0xc] sm:$0xf] %v1200
  %1217 = vst [vmem:[%s4 + $0x10] sm:$0xf] %v1201
  %1218 = vst [vmem:[%s4 + $0x14] sm:$0xf] %v1202
  %1219 = vst [vmem:[%s4 + $0x18] sm:$0xf] %v1203
  %1220 = vst [vmem:[%s4 + $0x1c] sm:$0xf] %v1204
  // Predicated region
  $region18: #{pool_to_feature_vector.6} parent=0 // pred_check
    _
  $region19: #{pool_to_feature_vector.6} parent=0 // pred_check_branch
    %1222 = sbr.rel (0) target = $region21
  $region20: #{pool_to_feature_vector.6} parent=0 // pred_region
    _
  $region21: #{pool_to_feature_vector.6} parent=0 // pred_fallthru
    _
  // Predicated region
  $region22: #{pool_to_feature_vector.6} parent=0 // pred_check
    _
  $region23: #{pool_to_feature_vector.6} parent=0 // pred_check_branch
    %1224 = sbr.rel (0) target = $region25
  $region24: #{pool_to_feature_vector.6} parent=0 // pred_region
    _
  $region25: #{pool_to_feature_vector.6} parent=0 // pred_fallthru
    _

// kernel: pool_to_feature_vector.5
$region0: #{pool_to_feature_vector.5}
  #allocation0 [shape = 'u32[]', space=smem, size = 0x4, offset = 0x4, fixed_abs, tag = 'smem constant byte address 0x4 - core index']
  #allocation1 [shape = 'u32[144,128]{1,0:T(1,128)}', space=vmem, size = 0x12000, scoped, tag = 'internal scratch']
  %s0 = inlined_call_operand.vmem [shape: bf16[64,1152], index: 0, kind: input, shape index: {}]
  %s1 = inlined_call_operand.vmem [shape: bf16[1152,128], index: 1, kind: input, shape index: {}]
  %s2 = inlined_call_operand.vmem [shape: f32[1,128], index: 2, kind: input, shape index: {}]
  %s3 = inlined_call_operand.vmem [shape: f32[1,128], index: 3, kind: input, shape index: {}]
  %s4 = inlined_call_operand.vmem [shape: bf16[64,32], index: 4, kind: input, shape index: {}]
  %s5 = inlined_call_operand.vmem [shape: bf16[32,128], index: 5, kind: input, shape index: {}]
  %s6 = inlined_call_operand.vmem [shape: f32[1,128], index: 6, kind: input, shape index: {}]
  %s7 = inlined_call_operand.vmem [shape: f32[1,128], index: 7, kind: input, shape index: {}]
  %s8 = inlined_call_operand.vmem [shape: bf16[64,128], index: 8, kind: output, shape index: {}]
  %s9 = sld [smem:[#allocation0]]
  $region42: #{pool_to_feature_vector.5} parent=0
    _
  %s11 = ssub.s32 1, %s9
  %s12 = scalar_select 0, %s11, %s9
  // Predicated region
  $region2: #{pool_to_feature_vector.5} parent=0 // pred_check
    _
  $region3: #{pool_to_feature_vector.5} parent=0 // pred_check_branch
    %14 = sbr.rel (0) target = $region5
  $region4: #{pool_to_feature_vector.5} parent=0 // pred_region
    _
  $region5: #{pool_to_feature_vector.5} parent=0 // pred_fallthru
    _
  // Predicated region
  $region6: #{pool_to_feature_vector.5} parent=0 // pred_check
    _
  $region7: #{pool_to_feature_vector.5} parent=0 // pred_check_branch
    %16 = sbr.rel (0) target = $region9
  $region8: #{pool_to_feature_vector.5} parent=0 // pred_region
    _
  $region9: #{pool_to_feature_vector.5} parent=0 // pred_fallthru
    _
  // Predicated region
  $region10: #{pool_to_feature_vector.5} parent=0 // pred_check
    _
  $region11: #{pool_to_feature_vector.5} parent=0 // pred_check_branch
    %18 = sbr.rel (0) target = $region13
  $region12: #{pool_to_feature_vector.5} parent=0 // pred_region
    _
  $region13: #{pool_to_feature_vector.5} parent=0 // pred_fallthru
    _
  // Predicated region
  $region14: #{pool_to_feature_vector.5} parent=0 // pred_check
    _
  $region15: #{pool_to_feature_vector.5} parent=0 // pred_check_branch
    %20 = sbr.rel (0) target = $region17
  $region16: #{pool_to_feature_vector.5} parent=0 // pred_region
    _
  $region17: #{pool_to_feature_vector.5} parent=0 // pred_fallthru
    _
  // Predicated region
  $region18: #{pool_to_feature_vector.5} parent=0 // pred_check
    _
  $region19: #{pool_to_feature_vector.5} parent=0 // pred_check_branch
    %22 = sbr.rel (0) target = $region21
  $region20: #{pool_to_feature_vector.5} parent=0 // pred_region
    _
  $region21: #{pool_to_feature_vector.5} parent=0 // pred_fallthru
    _
  // Predicated region
  $region22: #{pool_to_feature_vector.5} parent=0 // pred_check
    _
  $region23: #{pool_to_feature_vector.5} parent=0 // pred_check_branch
    %24 = sbr.rel (0) target = $region25
  $region24: #{pool_to_feature_vector.5} parent=0 // pred_region
    _
  $region25: #{pool_to_feature_vector.5} parent=0 // pred_fallthru
    _
  // Predicated region
  $region26: #{pool_to_feature_vector.5} parent=0 // pred_check
    _
  $region27: #{pool_to_feature_vector.5} parent=0 // pred_check_branch
    %26 = sbr.rel (0) target = $region29
  $region28: #{pool_to_feature_vector.5} parent=0 // pred_region
    _
  $region29: #{pool_to_feature_vector.5} parent=0 // pred_fallthru
    _
  // Predicated region
  $region30: #{pool_to_feature_vector.5} parent=0 // pred_check
    _
  $region31: #{pool_to_feature_vector.5} parent=0 // pred_check_branch
    %28 = sbr.rel (0) target = $region33
  $region32: #{pool_to_feature_vector.5} parent=0 // pred_region
    _
  $region33: #{pool_to_feature_vector.5} parent=0 // pred_fallthru
    _
  %v30 = vld [vmem:[%s0] sm:$0xff]
  %v31 = vld [vmem:[%s0 + $0x8] sm:$0xff]
  %v32 = vld [vmem:[%s0 + $0x10] sm:$0xff]
  %v33 = vld [vmem:[%s0 + $0x18] sm:$0xff]
  %v34 = vld [vmem:[%s0 + $0x20] sm:$0xf]
  %v35 = vld [vmem:[%s0 + $0x24] sm:$0xff]
  %v36 = vld [vmem:[%s0 + $0x2c] sm:$0xff]
  %v37 = vld [vmem:[%s0 + $0x34] sm:$0xff]
  %v38 = vld [vmem:[%s0 + $0x3c] sm:$0xff]
  %v39 = vld [vmem:[%s0 + $0x44] sm:$0xf]
  %v40 = vld [vmem:[%s0 + $0x48] sm:$0xff]
  %v41 = vld [vmem:[%s0 + $0x50] sm:$0xff]
  %v42 = vld [vmem:[%s0 + $0x58] sm:$0xff]
  %v43 = vld [vmem:[%s0 + $0x60] sm:$0xff]
  %v44 = vld [vmem:[%s0 + $0x68] sm:$0xf]
  %v45 = vld [vmem:[%s0 + $0x6c] sm:$0xff]
  %v46 = vld [vmem:[%s0 + $0x74] sm:$0xff]
  %v47 = vld [vmem:[%s0 + $0x7c] sm:$0xff]
  %v48 = vld [vmem:[%s0 + $0x84] sm:$0xff]
  %v49 = vld [vmem:[%s0 + $0x8c] sm:$0xf]
  %v50 = vld [vmem:[%s0 + $0x90] sm:$0xff]
  %v51 = vld [vmem:[%s0 + $0x98] sm:$0xff]
  %v52 = vld [vmem:[%s0 + $0xa0] sm:$0xff]
  %v53 = vld [vmem:[%s0 + $0xa8] sm:$0xff]
  %v54 = vld [vmem:[%s0 + $0xb0] sm:$0xf]
  %v55 = vld [vmem:[%s0 + $0xb4] sm:$0xff]
  %v56 = vld [vmem:[%s0 + $0xbc] sm:$0xff]
  %v57 = vld [vmem:[%s0 + $0xc4] sm:$0xff]
  %v58 = vld [vmem:[%s0 + $0xcc] sm:$0xff]
  %v59 = vld [vmem:[%s0 + $0xd4] sm:$0xf]
  %v60 = vld [vmem:[%s0 + $0xd8] sm:$0xff]
  %v61 = vld [vmem:[%s0 + $0xe0] sm:$0xff]
  %v62 = vld [vmem:[%s0 + $0xe8] sm:$0xff]
  %v63 = vld [vmem:[%s0 + $0xf0] sm:$0xff]
  %v64 = vld [vmem:[%s0 + $0xf8] sm:$0xf]
  %v65 = vld [vmem:[%s0 + $0xfc] sm:$0xff]
  %v66 = vld [vmem:[%s0 + $0x104] sm:$0xff]
  %v67 = vld [vmem:[%s0 + $0x10c] sm:$0xff]
  %v68 = vld [vmem:[%s0 + $0x114] sm:$0xff]
  %v69 = vld [vmem:[%s0 + $0x11c] sm:$0xf]
  %v70 = vld [vmem:[%s1] sm:$0xf]
  %v71 = vld [vmem:[%s1 + $0x4] sm:$0xf]
  %v72 = vld [vmem:[%s1 + $0x8] sm:$0xf]
  %v73 = vld [vmem:[%s1 + $0xc] sm:$0xf]
  %v74 = vld [vmem:[%s1 + $0x10] sm:$0xf]
  %v75 = vld [vmem:[%s1 + $0x14] sm:$0xf]
  %v76 = vld [vmem:[%s1 + $0x18] sm:$0xf]
  %v77 = vld [vmem:[%s1 + $0x1c] sm:$0xf]
  %v78 = vld [vmem:[%s1 + $0x20] sm:$0xf]
  %v79 = vld [vmem:[%s1 + $0x24] sm:$0xf]
  %v80 = vld [vmem:[%s1 + $0x28] sm:$0xf]
  %v81 = vld [vmem:[%s1 + $0x2c] sm:$0xf]
  %v82 = vld [vmem:[%s1 + $0x30] sm:$0xf]
  %v83 = vld [vmem:[%s1 + $0x34] sm:$0xf]
  %v84 = vld [vmem:[%s1 + $0x38] sm:$0xf]
  %v85 = vld [vmem:[%s1 + $0x3c] sm:$0xf]
  %v86 = vld [vmem:[%s1 + $0x40] sm:$0xf]
  %v87 = vld [vmem:[%s1 + $0x44] sm:$0xf]
  %v88 = vld [vmem:[%s1 + $0x48] sm:$0xf]
  %v89 = vld [vmem:[%s1 + $0x4c] sm:$0xf]
  %v90 = vld [vmem:[%s1 + $0x50] sm:$0xf]
  %v91 = vld [vmem:[%s1 + $0x54] sm:$0xf]
  %v92 = vld [vmem:[%s1 + $0x58] sm:$0xf]
  %v93 = vld [vmem:[%s1 + $0x5c] sm:$0xf]
  %v94 = vld [vmem:[%s1 + $0x60] sm:$0xf]
  %v95 = vld [vmem:[%s1 + $0x64] sm:$0xf]
  %v96 = vld [vmem:[%s1 + $0x68] sm:$0xf]
  %v97 = vld [vmem:[%s1 + $0x6c] sm:$0xf]
  %v98 = vld [vmem:[%s1 + $0x70] sm:$0xf]
  %v99 = vld [vmem:[%s1 + $0x74] sm:$0xf]
  %v100 = vld [vmem:[%s1 + $0x78] sm:$0xf]
  %v101 = vld [vmem:[%s1 + $0x7c] sm:$0xf]
  %v102 = vld [vmem:[%s1 + $0x80] sm:$0xf]
  %v103 = vld [vmem:[%s1 + $0x84] sm:$0xf]
  %v104 = vld [vmem:[%s1 + $0x88] sm:$0xf]
  %v105 = vld [vmem:[%s1 + $0x8c] sm:$0xf]
  %v106 = vld [vmem:[%s1 + $0x90] sm:$0xf]
  %v107 = vld [vmem:[%s1 + $0x94] sm:$0xf]
  %v108 = vld [vmem:[%s1 + $0x98] sm:$0xf]
  %v109 = vld [vmem:[%s1 + $0x9c] sm:$0xf]
  %v110 = vld [vmem:[%s1 + $0xa0] sm:$0xf]
  %v111 = vld [vmem:[%s1 + $0xa4] sm:$0xf]
  %v112 = vld [vmem:[%s1 + $0xa8] sm:$0xf]
  %v113 = vld [vmem:[%s1 + $0xac] sm:$0xf]
  %v114 = vld [vmem:[%s1 + $0xb0] sm:$0xf]
  %v115 = vld [vmem:[%s1 + $0xb4] sm:$0xf]
  %v116 = vld [vmem:[%s1 + $0xb8] sm:$0xf]
  %v117 = vld [vmem:[%s1 + $0xbc] sm:$0xf]
  %v118 = vld [vmem:[%s1 + $0xc0] sm:$0xf]
  %v119 = vld [vmem:[%s1 + $0xc4] sm:$0xf]
  %v120 = vld [vmem:[%s1 + $0xc8] sm:$0xf]
  %v121 = vld [vmem:[%s1 + $0xcc] sm:$0xf]
  %v122 = vld [vmem:[%s1 + $0xd0] sm:$0xf]
  %v123 = vld [vmem:[%s1 + $0xd4] sm:$0xf]
  %v124 = vld [vmem:[%s1 + $0xd8] sm:$0xf]
  %v125 = vld [vmem:[%s1 + $0xdc] sm:$0xf]
  %v126 = vld [vmem:[%s1 + $0xe0] sm:$0xf]
  %v127 = vld [vmem:[%s1 + $0xe4] sm:$0xf]
  %v128 = vld [vmem:[%s1 + $0xe8] sm:$0xf]
  %v129 = vld [vmem:[%s1 + $0xec] sm:$0xf]
  %v130 = vld [vmem:[%s1 + $0xf0] sm:$0xf]
  %v131 = vld [vmem:[%s1 + $0xf4] sm:$0xf]
  %v132 = vld [vmem:[%s1 + $0xf8] sm:$0xf]
  %v133 = vld [vmem:[%s1 + $0xfc] sm:$0xf]
  %v134 = vld [vmem:[%s1 + $0x100] sm:$0xf]
  %v135 = vld [vmem:[%s1 + $0x104] sm:$0xf]
  %v136 = vld [vmem:[%s1 + $0x108] sm:$0xf]
  %v137 = vld [vmem:[%s1 + $0x10c] sm:$0xf]
  %v138 = vld [vmem:[%s1 + $0x110] sm:$0xf]
  %v139 = vld [vmem:[%s1 + $0x114] sm:$0xf]
  %v140 = vld [vmem:[%s1 + $0x118] sm:$0xf]
  %v141 = vld [vmem:[%s1 + $0x11c] sm:$0xf]
  %v142 = vld [vmem:[%s1 + $0x120] sm:$0xf]
  %v143 = vld [vmem:[%s1 + $0x124] sm:$0xf]
  %v144 = vld [vmem:[%s1 + $0x128] sm:$0xf]
  %v145 = vld [vmem:[%s1 + $0x12c] sm:$0xf]
  %v146 = vld [vmem:[%s1 + $0x130] sm:$0xf]
  %v147 = vld [vmem:[%s1 + $0x134] sm:$0xf]
  %v148 = vld [vmem:[%s1 + $0x138] sm:$0xf]
  %v149 = vld [vmem:[%s1 + $0x13c] sm:$0xf]
  %v150 = vld [vmem:[%s1 + $0x140] sm:$0xf]
  %v151 = vld [vmem:[%s1 + $0x144] sm:$0xf]
  %v152 = vld [vmem:[%s1 + $0x148] sm:$0xf]
  %v153 = vld [vmem:[%s1 + $0x14c] sm:$0xf]
  %v154 = vld [vmem:[%s1 + $0x150] sm:$0xf]
  %v155 = vld [vmem:[%s1 + $0x154] sm:$0xf]
  %v156 = vld [vmem:[%s1 + $0x158] sm:$0xf]
  %v157 = vld [vmem:[%s1 + $0x15c] sm:$0xf]
  %v158 = vld [vmem:[%s1 + $0x160] sm:$0xf]
  %v159 = vld [vmem:[%s1 + $0x164] sm:$0xf]
  %v160 = vld [vmem:[%s1 + $0x168] sm:$0xf]
  %v161 = vld [vmem:[%s1 + $0x16c] sm:$0xf]
  %v162 = vld [vmem:[%s1 + $0x170] sm:$0xf]
  %v163 = vld [vmem:[%s1 + $0x174] sm:$0xf]
  %v164 = vld [vmem:[%s1 + $0x178] sm:$0xf]
  %v165 = vld [vmem:[%s1 + $0x17c] sm:$0xf]
  %v166 = vld [vmem:[%s1 + $0x180] sm:$0xf]
  %v167 = vld [vmem:[%s1 + $0x184] sm:$0xf]
  %v168 = vld [vmem:[%s1 + $0x188] sm:$0xf]
  %v169 = vld [vmem:[%s1 + $0x18c] sm:$0xf]
  %v170 = vld [vmem:[%s1 + $0x190] sm:$0xf]
  %v171 = vld [vmem:[%s1 + $0x194] sm:$0xf]
  %v172 = vld [vmem:[%s1 + $0x198] sm:$0xf]
  %v173 = vld [vmem:[%s1 + $0x19c] sm:$0xf]
  %v174 = vld [vmem:[%s1 + $0x1a0] sm:$0xf]
  %v175 = vld [vmem:[%s1 + $0x1a4] sm:$0xf]
  %v176 = vld [vmem:[%s1 + $0x1a8] sm:$0xf]
  %v177 = vld [vmem:[%s1 + $0x1ac] sm:$0xf]
  %v178 = vld [vmem:[%s1 + $0x1b0] sm:$0xf]
  %v179 = vld [vmem:[%s1 + $0x1b4] sm:$0xf]
  %v180 = vld [vmem:[%s1 + $0x1b8] sm:$0xf]
  %v181 = vld [vmem:[%s1 + $0x1bc] sm:$0xf]
  %v182 = vld [vmem:[%s1 + $0x1c0] sm:$0xf]
  %v183 = vld [vmem:[%s1 + $0x1c4] sm:$0xf]
  %v184 = vld [vmem:[%s1 + $0x1c8] sm:$0xf]
  %v185 = vld [vmem:[%s1 + $0x1cc] sm:$0xf]
  %v186 = vld [vmem:[%s1 + $0x1d0] sm:$0xf]
  %v187 = vld [vmem:[%s1 + $0x1d4] sm:$0xf]
  %v188 = vld [vmem:[%s1 + $0x1d8] sm:$0xf]
  %v189 = vld [vmem:[%s1 + $0x1dc] sm:$0xf]
  %v190 = vld [vmem:[%s1 + $0x1e0] sm:$0xf]
  %v191 = vld [vmem:[%s1 + $0x1e4] sm:$0xf]
  %v192 = vld [vmem:[%s1 + $0x1e8] sm:$0xf]
  %v193 = vld [vmem:[%s1 + $0x1ec] sm:$0xf]
  %v194 = vld [vmem:[%s1 + $0x1f0] sm:$0xf]
  %v195 = vld [vmem:[%s1 + $0x1f4] sm:$0xf]
  %v196 = vld [vmem:[%s1 + $0x1f8] sm:$0xf]
  %v197 = vld [vmem:[%s1 + $0x1fc] sm:$0xf]
  %v198 = vld [vmem:[%s1 + $0x200] sm:$0xf]
  %v199 = vld [vmem:[%s1 + $0x204] sm:$0xf]
  %v200 = vld [vmem:[%s1 + $0x208] sm:$0xf]
  %v201 = vld [vmem:[%s1 + $0x20c] sm:$0xf]
  %v202 = vld [vmem:[%s1 + $0x210] sm:$0xf]
  %v203 = vld [vmem:[%s1 + $0x214] sm:$0xf]
  %v204 = vld [vmem:[%s1 + $0x218] sm:$0xf]
  %v205 = vld [vmem:[%s1 + $0x21c] sm:$0xf]
  %v206 = vld [vmem:[%s1 + $0x220] sm:$0xf]
  %v207 = vld [vmem:[%s1 + $0x224] sm:$0xf]
  %v208 = vld [vmem:[%s1 + $0x228] sm:$0xf]
  %v209 = vld [vmem:[%s1 + $0x22c] sm:$0xf]
  %v210 = vld [vmem:[%s1 + $0x230] sm:$0xf]
  %v211 = vld [vmem:[%s1 + $0x234] sm:$0xf]
  %v212 = vld [vmem:[%s1 + $0x238] sm:$0xf]
  %v213 = vld [vmem:[%s1 + $0x23c] sm:$0xf]
  %v254 = vunpack.c.l.b16 %v30
  %v255 = vunpack.c.h.b16 %v30
  %v256 = vunpack.c.l.b16 %v31
  %v257 = vunpack.c.h.b16 %v31
  %v258 = vunpack.c.l.b16 %v32
  %v259 = vunpack.c.h.b16 %v32
  %v260 = vunpack.c.l.b16 %v33
  %v261 = vunpack.c.h.b16 %v33
  %v262 = vunpack.c.l.b16 %v34
  %v263 = vunpack.c.l.b16 %v35
  %v264 = vunpack.c.h.b16 %v35
  %v265 = vunpack.c.l.b16 %v36
  %v266 = vunpack.c.h.b16 %v36
  %v267 = vunpack.c.l.b16 %v37
  %v268 = vunpack.c.h.b16 %v37
  %v269 = vunpack.c.l.b16 %v38
  %v270 = vunpack.c.h.b16 %v38
  %v271 = vunpack.c.l.b16 %v39
  %v272 = vunpack.c.l.b16 %v40
  %v273 = vunpack.c.h.b16 %v40
  %v274 = vunpack.c.l.b16 %v41
  %v275 = vunpack.c.h.b16 %v41
  %v276 = vunpack.c.l.b16 %v42
  %v277 = vunpack.c.h.b16 %v42
  %v278 = vunpack.c.l.b16 %v43
  %v279 = vunpack.c.h.b16 %v43
  %v280 = vunpack.c.l.b16 %v44
  %v281 = vunpack.c.l.b16 %v45
  %v282 = vunpack.c.h.b16 %v45
  %v283 = vunpack.c.l.b16 %v46
  %v284 = vunpack.c.h.b16 %v46
  %v285 = vunpack.c.l.b16 %v47
  %v286 = vunpack.c.h.b16 %v47
  %v287 = vunpack.c.l.b16 %v48
  %v288 = vunpack.c.h.b16 %v48
  %v289 = vunpack.c.l.b16 %v49
  %v290 = vunpack.c.l.b16 %v50
  %v291 = vunpack.c.h.b16 %v50
  %v292 = vunpack.c.l.b16 %v51
  %v293 = vunpack.c.h.b16 %v51
  %v294 = vunpack.c.l.b16 %v52
  %v295 = vunpack.c.h.b16 %v52
  %v296 = vunpack.c.l.b16 %v53
  %v297 = vunpack.c.h.b16 %v53
  %v298 = vunpack.c.l.b16 %v54
  %v299 = vunpack.c.l.b16 %v55
  %v300 = vunpack.c.h.b16 %v55
  %v301 = vunpack.c.l.b16 %v56
  %v302 = vunpack.c.h.b16 %v56
  %v303 = vunpack.c.l.b16 %v57
  %v304 = vunpack.c.h.b16 %v57
  %v305 = vunpack.c.l.b16 %v58
  %v306 = vunpack.c.h.b16 %v58
  %v307 = vunpack.c.l.b16 %v59
  %v308 = vunpack.c.l.b16 %v60
  %v309 = vunpack.c.h.b16 %v60
  %v310 = vunpack.c.l.b16 %v61
  %v311 = vunpack.c.h.b16 %v61
  %v312 = vunpack.c.l.b16 %v62
  %v313 = vunpack.c.h.b16 %v62
  %v314 = vunpack.c.l.b16 %v63
  %v315 = vunpack.c.h.b16 %v63
  %v316 = vunpack.c.l.b16 %v64
  %v317 = vunpack.c.l.b16 %v65
  %v318 = vunpack.c.h.b16 %v65
  %v319 = vunpack.c.l.b16 %v66
  %v320 = vunpack.c.h.b16 %v66
  %v321 = vunpack.c.l.b16 %v67
  %v322 = vunpack.c.h.b16 %v67
  %v323 = vunpack.c.l.b16 %v68
  %v324 = vunpack.c.h.b16 %v68
  %v325 = vunpack.c.l.b16 %v69
  %v326 = vpack.c.b16 %v263, %v254
  %v327 = vpack.c.b16 %v264, %v255
  %v328 = vpack.c.b16 %v265, %v256
  %v329 = vpack.c.b16 %v266, %v257
  %v330 = vpack.c.b16 %v267, %v258
  %v331 = vpack.c.b16 %v268, %v259
  %v332 = vpack.c.b16 %v269, %v260
  %v333 = vpack.c.b16 %v270, %v261
  %v334 = vpack.c.b16 %v271, %v262
  %v335 = vpack.c.b16 %v281, %v272
  %v336 = vpack.c.b16 %v282, %v273
  %v337 = vpack.c.b16 %v283, %v274
  %v338 = vpack.c.b16 %v284, %v275
  %v339 = vpack.c.b16 %v285, %v276
  %v340 = vpack.c.b16 %v286, %v277
  %v341 = vpack.c.b16 %v287, %v278
  %v342 = vpack.c.b16 %v288, %v279
  %v343 = vpack.c.b16 %v289, %v280
  %v344 = vpack.c.b16 %v299, %v290
  %v345 = vpack.c.b16 %v300, %v291
  %v346 = vpack.c.b16 %v301, %v292
  %v347 = vpack.c.b16 %v302, %v293
  %v348 = vpack.c.b16 %v303, %v294
  %v349 = vpack.c.b16 %v304, %v295
  %v350 = vpack.c.b16 %v305, %v296
  %v351 = vpack.c.b16 %v306, %v297
  %v352 = vpack.c.b16 %v307, %v298
  %v353 = vpack.c.b16 %v317, %v308
  %v354 = vpack.c.b16 %v318, %v309
  %v355 = vpack.c.b16 %v319, %v310
  %v356 = vpack.c.b16 %v320, %v311
  %v357 = vpack.c.b16 %v321, %v312
  %v358 = vpack.c.b16 %v322, %v313
  %v359 = vpack.c.b16 %v323, %v314
  %v360 = vpack.c.b16 %v324, %v315
  %v361 = vpack.c.b16 %v325, %v316
  %v542 = vunpack.c.l.b16 %v70
  %v543 = vunpack.c.l.b16 %v71
  %v544 = vunpack.c.l.b16 %v72
  %v545 = vunpack.c.l.b16 %v73
  %v546 = vunpack.c.l.b16 %v74
  %v547 = vunpack.c.l.b16 %v75
  %v548 = vunpack.c.l.b16 %v76
  %v549 = vunpack.c.l.b16 %v77
  %v550 = vunpack.c.l.b16 %v78
  %v551 = vunpack.c.l.b16 %v79
  %v552 = vunpack.c.l.b16 %v80
  %v553 = vunpack.c.l.b16 %v81
  %v554 = vunpack.c.l.b16 %v82
  %v555 = vunpack.c.l.b16 %v83
  %v556 = vunpack.c.l.b16 %v84
  %v557 = vunpack.c.l.b16 %v85
  %v558 = vunpack.c.l.b16 %v86
  %v559 = vunpack.c.l.b16 %v87
  %v560 = vunpack.c.l.b16 %v88
  %v561 = vunpack.c.l.b16 %v89
  %v562 = vunpack.c.l.b16 %v90
  %v563 = vunpack.c.l.b16 %v91
  %v564 = vunpack.c.l.b16 %v92
  %v565 = vunpack.c.l.b16 %v93
  %v566 = vunpack.c.l.b16 %v94
  %v567 = vunpack.c.l.b16 %v95
  %v568 = vunpack.c.l.b16 %v96
  %v569 = vunpack.c.l.b16 %v97
  %v570 = vunpack.c.l.b16 %v98
  %v571 = vunpack.c.l.b16 %v99
  %v572 = vunpack.c.l.b16 %v100
  %v573 = vunpack.c.l.b16 %v101
  %v574 = vunpack.c.l.b16 %v102
  %v575 = vunpack.c.l.b16 %v103
  %v576 = vunpack.c.l.b16 %v104
  %v577 = vunpack.c.l.b16 %v105
  %v578 = vunpack.c.l.b16 %v106
  %v579 = vunpack.c.l.b16 %v107
  %v580 = vunpack.c.l.b16 %v108
  %v581 = vunpack.c.l.b16 %v109
  %v582 = vunpack.c.l.b16 %v110
  %v583 = vunpack.c.l.b16 %v111
  %v584 = vunpack.c.l.b16 %v112
  %v585 = vunpack.c.l.b16 %v113
  %v586 = vunpack.c.l.b16 %v114
  %v587 = vunpack.c.l.b16 %v115
  %v588 = vunpack.c.l.b16 %v116
  %v589 = vunpack.c.l.b16 %v117
  %v590 = vunpack.c.l.b16 %v118
  %v591 = vunpack.c.l.b16 %v119
  %v592 = vunpack.c.l.b16 %v120
  %v593 = vunpack.c.l.b16 %v121
  %v594 = vunpack.c.l.b16 %v122
  %v595 = vunpack.c.l.b16 %v123
  %v596 = vunpack.c.l.b16 %v124
  %v597 = vunpack.c.l.b16 %v125
  %v598 = vunpack.c.l.b16 %v126
  %v599 = vunpack.c.l.b16 %v127
  %v600 = vunpack.c.l.b16 %v128
  %v601 = vunpack.c.l.b16 %v129
  %v602 = vunpack.c.l.b16 %v130
  %v603 = vunpack.c.l.b16 %v131
  %v604 = vunpack.c.l.b16 %v132
  %v605 = vunpack.c.l.b16 %v133
  %v606 = vunpack.c.l.b16 %v134
  %v607 = vunpack.c.l.b16 %v135
  %v608 = vunpack.c.l.b16 %v136
  %v609 = vunpack.c.l.b16 %v137
  %v610 = vunpack.c.l.b16 %v138
  %v611 = vunpack.c.l.b16 %v139
  %v612 = vunpack.c.l.b16 %v140
  %v613 = vunpack.c.l.b16 %v141
  %v614 = vunpack.c.l.b16 %v142
  %v615 = vunpack.c.l.b16 %v143
  %v616 = vunpack.c.l.b16 %v144
  %v617 = vunpack.c.l.b16 %v145
  %v618 = vunpack.c.l.b16 %v146
  %v619 = vunpack.c.l.b16 %v147
  %v620 = vunpack.c.l.b16 %v148
  %v621 = vunpack.c.l.b16 %v149
  %v622 = vunpack.c.l.b16 %v150
  %v623 = vunpack.c.l.b16 %v151
  %v624 = vunpack.c.l.b16 %v152
  %v625 = vunpack.c.l.b16 %v153
  %v626 = vunpack.c.l.b16 %v154
  %v627 = vunpack.c.l.b16 %v155
  %v628 = vunpack.c.l.b16 %v156
  %v629 = vunpack.c.l.b16 %v157
  %v630 = vunpack.c.l.b16 %v158
  %v631 = vunpack.c.l.b16 %v159
  %v632 = vunpack.c.l.b16 %v160
  %v633 = vunpack.c.l.b16 %v161
  %v634 = vunpack.c.l.b16 %v162
  %v635 = vunpack.c.l.b16 %v163
  %v636 = vunpack.c.l.b16 %v164
  %v637 = vunpack.c.l.b16 %v165
  %v638 = vunpack.c.l.b16 %v166
  %v639 = vunpack.c.l.b16 %v167
  %v640 = vunpack.c.l.b16 %v168
  %v641 = vunpack.c.l.b16 %v169
  %v642 = vunpack.c.l.b16 %v170
  %v643 = vunpack.c.l.b16 %v171
  %v644 = vunpack.c.l.b16 %v172
  %v645 = vunpack.c.l.b16 %v173
  %v646 = vunpack.c.l.b16 %v174
  %v647 = vunpack.c.l.b16 %v175
  %v648 = vunpack.c.l.b16 %v176
  %v649 = vunpack.c.l.b16 %v177
  %v650 = vunpack.c.l.b16 %v178
  %v651 = vunpack.c.l.b16 %v179
  %v652 = vunpack.c.l.b16 %v180
  %v653 = vunpack.c.l.b16 %v181
  %v654 = vunpack.c.l.b16 %v182
  %v655 = vunpack.c.l.b16 %v183
  %v656 = vunpack.c.l.b16 %v184
  %v657 = vunpack.c.l.b16 %v185
  %v658 = vunpack.c.l.b16 %v186
  %v659 = vunpack.c.l.b16 %v187
  %v660 = vunpack.c.l.b16 %v188
  %v661 = vunpack.c.l.b16 %v189
  %v662 = vunpack.c.l.b16 %v190
  %v663 = vunpack.c.l.b16 %v191
  %v664 = vunpack.c.l.b16 %v192
  %v665 = vunpack.c.l.b16 %v193
  %v666 = vunpack.c.l.b16 %v194
  %v667 = vunpack.c.l.b16 %v195
  %v668 = vunpack.c.l.b16 %v196
  %v669 = vunpack.c.l.b16 %v197
  %v670 = vunpack.c.l.b16 %v198
  %v671 = vunpack.c.l.b16 %v199
  %v672 = vunpack.c.l.b16 %v200
  %v673 = vunpack.c.l.b16 %v201
  %v674 = vunpack.c.l.b16 %v202
  %v675 = vunpack.c.l.b16 %v203
  %v676 = vunpack.c.l.b16 %v204
  %v677 = vunpack.c.l.b16 %v205
  %v678 = vunpack.c.l.b16 %v206
  %v679 = vunpack.c.l.b16 %v207
  %v680 = vunpack.c.l.b16 %v208
  %v681 = vunpack.c.l.b16 %v209
  %v682 = vunpack.c.l.b16 %v210
  %v683 = vunpack.c.l.b16 %v211
  %v684 = vunpack.c.l.b16 %v212
  %v685 = vunpack.c.l.b16 %v213
  %v686 = vpack.c.b16 %v543, %v542
  %v687 = vpack.c.b16 %v545, %v544
  %v688 = vpack.c.b16 %v547, %v546
  %v689 = vpack.c.b16 %v549, %v548
  %v690 = vpack.c.b16 %v551, %v550
  %v691 = vpack.c.b16 %v553, %v552
  %v692 = vpack.c.b16 %v555, %v554
  %v693 = vpack.c.b16 %v557, %v556
  %v694 = vpack.c.b16 %v559, %v558
  %v695 = vpack.c.b16 %v561, %v560
  %v696 = vpack.c.b16 %v563, %v562
  %v697 = vpack.c.b16 %v565, %v564
  %v698 = vpack.c.b16 %v567, %v566
  %v699 = vpack.c.b16 %v569, %v568
  %v700 = vpack.c.b16 %v571, %v570
  %v701 = vpack.c.b16 %v573, %v572
  %v702 = vpack.c.b16 %v575, %v574
  %v703 = vpack.c.b16 %v577, %v576
  %v704 = vpack.c.b16 %v579, %v578
  %v705 = vpack.c.b16 %v581, %v580
  %v706 = vpack.c.b16 %v583, %v582
  %v707 = vpack.c.b16 %v585, %v584
  %v708 = vpack.c.b16 %v587, %v586
  %v709 = vpack.c.b16 %v589, %v588
  %v710 = vpack.c.b16 %v591, %v590
  %v711 = vpack.c.b16 %v593, %v592
  %v712 = vpack.c.b16 %v595, %v594
  %v713 = vpack.c.b16 %v597, %v596
  %v714 = vpack.c.b16 %v599, %v598
  %v715 = vpack.c.b16 %v601, %v600
  %v716 = vpack.c.b16 %v603, %v602
  %v717 = vpack.c.b16 %v605, %v604
  %v718 = vpack.c.b16 %v607, %v606
  %v719 = vpack.c.b16 %v609, %v608
  %v720 = vpack.c.b16 %v611, %v610
  %v721 = vpack.c.b16 %v613, %v612
  %v722 = vpack.c.b16 %v615, %v614
  %v723 = vpack.c.b16 %v617, %v616
  %v724 = vpack.c.b16 %v619, %v618
  %v725 = vpack.c.b16 %v621, %v620
  %v726 = vpack.c.b16 %v623, %v622
  %v727 = vpack.c.b16 %v625, %v624
  %v728 = vpack.c.b16 %v627, %v626
  %v729 = vpack.c.b16 %v629, %v628
  %v730 = vpack.c.b16 %v631, %v630
  %v731 = vpack.c.b16 %v633, %v632
  %v732 = vpack.c.b16 %v635, %v634
  %v733 = vpack.c.b16 %v637, %v636
  %v734 = vpack.c.b16 %v639, %v638
  %v735 = vpack.c.b16 %v641, %v640
  %v736 = vpack.c.b16 %v643, %v642
  %v737 = vpack.c.b16 %v645, %v644
  %v738 = vpack.c.b16 %v647, %v646
  %v739 = vpack.c.b16 %v649, %v648
  %v740 = vpack.c.b16 %v651, %v650
  %v741 = vpack.c.b16 %v653, %v652
  %v742 = vpack.c.b16 %v655, %v654
  %v743 = vpack.c.b16 %v657, %v656
  %v744 = vpack.c.b16 %v659, %v658
  %v745 = vpack.c.b16 %v661, %v660
  %v746 = vpack.c.b16 %v663, %v662
  %v747 = vpack.c.b16 %v665, %v664
  %v748 = vpack.c.b16 %v667, %v666
  %v749 = vpack.c.b16 %v669, %v668
  %v750 = vpack.c.b16 %v671, %v670
  %v751 = vpack.c.b16 %v673, %v672
  %v752 = vpack.c.b16 %v675, %v674
  %v753 = vpack.c.b16 %v677, %v676
  %v754 = vpack.c.b16 %v679, %v678
  %v755 = vpack.c.b16 %v681, %v680
  %v756 = vpack.c.b16 %v683, %v682
  %v757 = vpack.c.b16 %v685, %v684
  %830 = vmatprep.subr.bf16.mxu0 0
  %831 = vmatpush1.bf16.msra.mxu0 %v686
  %832 = vmatprep.subr.bf16.mxu0 0
  %833 = vmatpush1.bf16.msra.mxu0 %v687
  %834 = vmatprep.subr.bf16.mxu0 0
  %835 = vmatpush1.bf16.msra.mxu0 %v688
  %836 = vmatprep.subr.bf16.mxu0 0
  %837 = vmatpush1.bf16.msra.mxu0 %v689
  %838 = vmatprep.subr.bf16.mxu0 0
  %839 = vmatpush1.bf16.msra.mxu0 %v690
  %840 = vmatprep.subr.bf16.mxu0 0
  %841 = vmatpush1.bf16.msra.mxu0 %v691
  %842 = vmatprep.subr.bf16.mxu0 0
  %843 = vmatpush1.bf16.msra.mxu0 %v692
  %844 = vmatprep.subr.bf16.mxu0 0
  %845 = vmatpush1.bf16.msra.mxu0 %v693
  %846 = vmatprep.subr.bf16.mxu0 0
  %847 = vmatpush1.bf16.msra.mxu0 %v694
  %848 = vmatprep.subr.bf16.mxu0 0
  %849 = vmatpush1.bf16.msra.mxu0 %v695
  %850 = vmatprep.subr.bf16.mxu0 0
  %851 = vmatpush1.bf16.msra.mxu0 %v696
  %852 = vmatprep.subr.bf16.mxu0 0
  %853 = vmatpush1.bf16.msra.mxu0 %v697
  %854 = vmatprep.subr.bf16.mxu0 0
  %855 = vmatpush1.bf16.msra.mxu0 %v698
  %856 = vmatprep.subr.bf16.mxu0 0
  %857 = vmatpush1.bf16.msra.mxu0 %v699
  %858 = vmatprep.subr.bf16.mxu0 0
  %859 = vmatpush1.bf16.msra.mxu0 %v700
  %860 = vmatprep.subr.bf16.mxu0 0
  %861 = vmatpush1.bf16.msra.mxu0 %v701
  %862 = vmatprep.mubr.bf16.mxu0 %v327
  %863 = vmatmul.mubr.bf16.gmra.mrb[0].mxu0 %v326
  %v864 = vpop.f32.mrb[0].mxu0
  %v865 = vadd.f32 0.0, %v864
  %v866 = vpop.f32.mrb[0].mxu0
  %v867 = vpop.f32.mrb[0].mxu0
  %v868 = vadd.f32 0.0, %v867
  %v869 = vpop.f32.mrb[0].mxu0
  %870 = vmatprep.mubr.bf16.mxu0 %v336
  %871 = vmatmul.mubr.bf16.gmra.mrb[0].mxu0 %v335
  %v872 = vpop.f32.mrb[0].mxu0
  %v873 = vadd.f32 0.0, %v872
  %v874 = vpop.f32.mrb[0].mxu0
  %v875 = vpop.f32.mrb[0].mxu0
  %v876 = vadd.f32 0.0, %v875
  %v877 = vpop.f32.mrb[0].mxu0
  %878 = vmatprep.mubr.bf16.mxu0 %v345
  %879 = vmatmul.mubr.bf16.gmra.mrb[0].mxu0 %v344
  %v880 = vpop.f32.mrb[0].mxu0
  %v881 = vadd.f32 0.0, %v880
  %v882 = vpop.f32.mrb[0].mxu0
  %v883 = vpop.f32.mrb[0].mxu0
  %v884 = vadd.f32 0.0, %v883
  %v885 = vpop.f32.mrb[0].mxu0
  %886 = vmatprep.mubr.bf16.mxu0 %v354
  %887 = vmatmul.mubr.bf16.gmra.mrb[0].mxu0 %v353
  %v888 = vpop.f32.mrb[0].mxu0
  %v889 = vadd.f32 0.0, %v888
  %v890 = vpop.f32.mrb[0].mxu0
  %v891 = vpop.f32.mrb[0].mxu0
  %v892 = vadd.f32 0.0, %v891
  %v893 = vpop.f32.mrb[0].mxu0
  %894 = vdwg.mxu0
  %895 = vmatprep.subr.bf16.mxu0 0
  %896 = vmatpush1.bf16.msra.mxu0 %v702
  %897 = vmatprep.subr.bf16.mxu0 0
  %898 = vmatpush1.bf16.msra.mxu0 %v703
  %899 = vmatprep.subr.bf16.mxu0 0
  %900 = vmatpush1.bf16.msra.mxu0 %v704
  %901 = vmatprep.subr.bf16.mxu0 0
  %902 = vmatpush1.bf16.msra.mxu0 %v705
  %903 = vmatprep.subr.bf16.mxu0 0
  %904 = vmatpush1.bf16.msra.mxu0 %v706
  %905 = vmatprep.subr.bf16.mxu0 0
  %906 = vmatpush1.bf16.msra.mxu0 %v707
  %907 = vmatprep.subr.bf16.mxu0 0
  %908 = vmatpush1.bf16.msra.mxu0 %v708
  %909 = vmatprep.subr.bf16.mxu0 0
  %910 = vmatpush1.bf16.msra.mxu0 %v709
  %911 = vmatprep.subr.bf16.mxu0 0
  %912 = vmatpush1.bf16.msra.mxu0 %v710
  %913 = vmatprep.subr.bf16.mxu0 0
  %914 = vmatpush1.bf16.msra.mxu0 %v711
  %915 = vmatprep.subr.bf16.mxu0 0
  %916 = vmatpush1.bf16.msra.mxu0 %v712
  %917 = vmatprep.subr.bf16.mxu0 0
  %918 = vmatpush1.bf16.msra.mxu0 %v713
  %919 = vmatprep.subr.bf16.mxu0 0
  %920 = vmatpush1.bf16.msra.mxu0 %v714
  %921 = vmatprep.subr.bf16.mxu0 0
  %922 = vmatpush1.bf16.msra.mxu0 %v715
  %923 = vmatprep.subr.bf16.mxu0 0
  %924 = vmatpush1.bf16.msra.mxu0 %v716
  %925 = vmatprep.subr.bf16.mxu0 0
  %926 = vmatpush1.bf16.msra.mxu0 %v717
  %927 = vmatprep.mubr.bf16.mxu0 %v329
  %928 = vmatmul.mubr.bf16.gmra.mrb[0].mxu0 %v328
  %v929 = vpop.f32.mrb[0].mxu0
  %v930 = vadd.f32 %v865, %v929
  %v931 = vpop.f32.mrb[0].mxu0
  %v932 = vpop.f32.mrb[0].mxu0
  %v933 = vadd.f32 %v868, %v932
  %v934 = vpop.f32.mrb[0].mxu0
  %935 = vmatprep.mubr.bf16.mxu0 %v338
  %936 = vmatmul.mubr.bf16.gmra.mrb[0].mxu0 %v337
  %v937 = vpop.f32.mrb[0].mxu0
  %v938 = vadd.f32 %v873, %v937
  %v939 = vpop.f32.mrb[0].mxu0
  %v940 = vpop.f32.mrb[0].mxu0
  %v941 = vadd.f32 %v876, %v940
  %v942 = vpop.f32.mrb[0].mxu0
  %943 = vmatprep.mubr.bf16.mxu0 %v347
  %944 = vmatmul.mubr.bf16.gmra.mrb[0].mxu0 %v346
  %v945 = vpop.f32.mrb[0].mxu0
  %v946 = vadd.f32 %v881, %v945
  %v947 = vpop.f32.mrb[0].mxu0
  %v948 = vpop.f32.mrb[0].mxu0
  %v949 = vadd.f32 %v884, %v948
  %v950 = vpop.f32.mrb[0].mxu0
  %951 = vmatprep.mubr.bf16.mxu0 %v356
  %952 = vmatmul.mubr.bf16.gmra.mrb[0].mxu0 %v355
  %v953 = vpop.f32.mrb[0].mxu0
  %v954 = vadd.f32 %v889, %v953
  %v955 = vpop.f32.mrb[0].mxu0
  %v956 = vpop.f32.mrb[0].mxu0
  %v957 = vadd.f32 %v892, %v956
  %v958 = vpop.f32.mrb[0].mxu0
  %959 = vdwg.mxu0
  %960 = vmatprep.subr.bf16.mxu0 0
  %961 = vmatpush1.bf16.msra.mxu0 %v718
  %962 = vmatprep.subr.bf16.mxu0 0
  %963 = vmatpush1.bf16.msra.mxu0 %v719
  %964 = vmatprep.subr.bf16.mxu0 0
  %965 = vmatpush1.bf16.msra.mxu0 %v720
  %966 = vmatprep.subr.bf16.mxu0 0
  %967 = vmatpush1.bf16.msra.mxu0 %v721
  %968 = vmatprep.subr.bf16.mxu0 0
  %969 = vmatpush1.bf16.msra.mxu0 %v722
  %970 = vmatprep.subr.bf16.mxu0 0
  %971 = vmatpush1.bf16.msra.mxu0 %v723
  %972 = vmatprep.subr.bf16.mxu0 0
  %973 = vmatpush1.bf16.msra.mxu0 %v724
  %974 = vmatprep.subr.bf16.mxu0 0
  %975 = vmatpush1.bf16.msra.mxu0 %v725
  %976 = vmatprep.subr.bf16.mxu0 0
  %977 = vmatpush1.bf16.msra.mxu0 %v726
  %978 = vmatprep.subr.bf16.mxu0 0
  %979 = vmatpush1.bf16.msra.mxu0 %v727
  %980 = vmatprep.subr.bf16.mxu0 0
  %981 = vmatpush1.bf16.msra.mxu0 %v728
  %982 = vmatprep.subr.bf16.mxu0 0
  %983 = vmatpush1.bf16.msra.mxu0 %v729
  %984 = vmatprep.subr.bf16.mxu0 0
  %985 = vmatpush1.bf16.msra.mxu0 %v730
  %986 = vmatprep.subr.bf16.mxu0 0
  %987 = vmatpush1.bf16.msra.mxu0 %v731
  %988 = vmatprep.subr.bf16.mxu0 0
  %989 = vmatpush1.bf16.msra.mxu0 %v732
  %990 = vmatprep.subr.bf16.mxu0 0
  %991 = vmatpush1.bf16.msra.mxu0 %v733
  %992 = vmatprep.mubr.bf16.mxu0 %v331
  %993 = vmatmul.mubr.bf16.gmra.mrb[0].mxu0 %v330
  %v994 = vpop.f32.mrb[0].mxu0
  %v995 = vadd.f32 %v930, %v994
  %v996 = vpop.f32.mrb[0].mxu0
  %v997 = vpop.f32.mrb[0].mxu0
  %v998 = vadd.f32 %v933, %v997
  %v999 = vpop.f32.mrb[0].mxu0
  %1000 = vmatprep.mubr.bf16.mxu0 %v340
  %1001 = vmatmul.mubr.bf16.gmra.mrb[0].mxu0 %v339
  %v1002 = vpop.f32.mrb[0].mxu0
  %v1003 = vadd.f32 %v938, %v1002
  %v1004 = vpop.f32.mrb[0].mxu0
  %v1005 = vpop.f32.mrb[0].mxu0
  %v1006 = vadd.f32 %v941, %v1005
  %v1007 = vpop.f32.mrb[0].mxu0
  %1008 = vmatprep.mubr.bf16.mxu0 %v349
  %1009 = vmatmul.mubr.bf16.gmra.mrb[0].mxu0 %v348
  %v1010 = vpop.f32.mrb[0].mxu0
  %v1011 = vadd.f32 %v946, %v1010
  %v1012 = vpop.f32.mrb[0].mxu0
  %v1013 = vpop.f32.mrb[0].mxu0
  %v1014 = vadd.f32 %v949, %v1013
  %v1015 = vpop.f32.mrb[0].mxu0
  %1016 = vmatprep.mubr.bf16.mxu0 %v358
  %1017 = vmatmul.mubr.bf16.gmra.mrb[0].mxu0 %v357
  %v1018 = vpop.f32.mrb[0].mxu0
  %v1019 = vadd.f32 %v954, %v1018
  %v1020 = vpop.f32.mrb[0].mxu0
  %v1021 = vpop.f32.mrb[0].mxu0
  %v1022 = vadd.f32 %v957, %v1021
  %v1023 = vpop.f32.mrb[0].mxu0
  %1024 = vdwg.mxu0
  %1025 = vmatprep.subr.bf16.mxu0 0
  %1026 = vmatpush1.bf16.msra.mxu0 %v734
  %1027 = vmatprep.subr.bf16.mxu0 0
  %1028 = vmatpush1.bf16.msra.mxu0 %v735
  %1029 = vmatprep.subr.bf16.mxu0 0
  %1030 = vmatpush1.bf16.msra.mxu0 %v736
  %1031 = vmatprep.subr.bf16.mxu0 0
  %1032 = vmatpush1.bf16.msra.mxu0 %v737
  %1033 = vmatprep.subr.bf16.mxu0 0
  %1034 = vmatpush1.bf16.msra.mxu0 %v738
  %1035 = vmatprep.subr.bf16.mxu0 0
  %1036 = vmatpush1.bf16.msra.mxu0 %v739
  %1037 = vmatprep.subr.bf16.mxu0 0
  %1038 = vmatpush1.bf16.msra.mxu0 %v740
  %1039 = vmatprep.subr.bf16.mxu0 0
  %1040 = vmatpush1.bf16.msra.mxu0 %v741
  %1041 = vmatprep.subr.bf16.mxu0 0
  %1042 = vmatpush1.bf16.msra.mxu0 %v742
  %1043 = vmatprep.subr.bf16.mxu0 0
  %1044 = vmatpush1.bf16.msra.mxu0 %v743
  %1045 = vmatprep.subr.bf16.mxu0 0
  %1046 = vmatpush1.bf16.msra.mxu0 %v744
  %1047 = vmatprep.subr.bf16.mxu0 0
  %1048 = vmatpush1.bf16.msra.mxu0 %v745
  %1049 = vmatprep.subr.bf16.mxu0 0
  %1050 = vmatpush1.bf16.msra.mxu0 %v746
  %1051 = vmatprep.subr.bf16.mxu0 0
  %1052 = vmatpush1.bf16.msra.mxu0 %v747
  %1053 = vmatprep.subr.bf16.mxu0 0
  %1054 = vmatpush1.bf16.msra.mxu0 %v748
  %1055 = vmatprep.subr.bf16.mxu0 0
  %1056 = vmatpush1.bf16.msra.mxu0 %v749
  %1057 = vmatprep.mubr.bf16.mxu0 %v333
  %1058 = vmatmul.mubr.bf16.gmra.mrb[0].mxu0 %v332
  %v1059 = vpop.f32.mrb[0].mxu0
  %v1060 = vadd.f32 %v995, %v1059
  %v1061 = vpop.f32.mrb[0].mxu0
  %v1062 = vpop.f32.mrb[0].mxu0
  %v1063 = vadd.f32 %v998, %v1062
  %v1064 = vpop.f32.mrb[0].mxu0
  %1065 = vmatprep.mubr.bf16.mxu0 %v342
  %1066 = vmatmul.mubr.bf16.gmra.mrb[0].mxu0 %v341
  %v1067 = vpop.f32.mrb[0].mxu0
  %v1068 = vadd.f32 %v1003, %v1067
  %v1069 = vpop.f32.mrb[0].mxu0
  %v1070 = vpop.f32.mrb[0].mxu0
  %v1071 = vadd.f32 %v1006, %v1070
  %v1072 = vpop.f32.mrb[0].mxu0
  %1073 = vmatprep.mubr.bf16.mxu0 %v351
  %1074 = vmatmul.mubr.bf16.gmra.mrb[0].mxu0 %v350
  %v1075 = vpop.f32.mrb[0].mxu0
  %v1076 = vadd.f32 %v1011, %v1075
  %v1077 = vpop.f32.mrb[0].mxu0
  %v1078 = vpop.f32.mrb[0].mxu0
  %v1079 = vadd.f32 %v1014, %v1078
  %v1080 = vpop.f32.mrb[0].mxu0
  %1081 = vmatprep.mubr.bf16.mxu0 %v360
  %1082 = vmatmul.mubr.bf16.gmra.mrb[0].mxu0 %v359
  %v1083 = vpop.f32.mrb[0].mxu0
  %v1084 = vadd.f32 %v1019, %v1083
  %v1085 = vpop.f32.mrb[0].mxu0
  %v1086 = vpop.f32.mrb[0].mxu0
  %v1087 = vadd.f32 %v1022, %v1086
  %v1088 = vpop.f32.mrb[0].mxu0
  %1089 = vdwg.mxu0
  %1090 = vmatprep.subr.bf16.mxu0 0
  %1091 = vmatpush1.bf16.msra.mxu0 %v750
  %1092 = vmatprep.subr.bf16.mxu0 0
  %1093 = vmatpush1.bf16.msra.mxu0 %v751
  %1094 = vmatprep.subr.bf16.mxu0 0
  %1095 = vmatpush1.bf16.msra.mxu0 %v752
  %1096 = vmatprep.subr.bf16.mxu0 0
  %1097 = vmatpush1.bf16.msra.mxu0 %v753
  %1098 = vmatprep.subr.bf16.mxu0 0
  %1099 = vmatpush1.bf16.msra.mxu0 %v754
  %1100 = vmatprep.subr.bf16.mxu0 0
  %1101 = vmatpush1.bf16.msra.mxu0 %v755
  %1102 = vmatprep.subr.bf16.mxu0 0
  %1103 = vmatpush1.bf16.msra.mxu0 %v756
  %1104 = vmatprep.subr.bf16.mxu0 0
  %1105 = vmatpush1.bf16.msra.mxu0 %v757
  %1106 = vmatprep.subr.bf16.mxu0 0
  %1107 = vmatpush1.bf16.msra.mxu0 0
  %1108 = vmatprep.subr.bf16.mxu0 0
  %1109 = vmatpush1.bf16.msra.mxu0 0
  %1110 = vmatprep.subr.bf16.mxu0 0
  %1111 = vmatpush1.bf16.msra.mxu0 0
  %1112 = vmatprep.subr.bf16.mxu0 0
  %1113 = vmatpush1.bf16.msra.mxu0 0
  %1114 = vmatprep.subr.bf16.mxu0 0
  %1115 = vmatpush1.bf16.msra.mxu0 0
  %1116 = vmatprep.subr.bf16.mxu0 0
  %1117 = vmatpush1.bf16.msra.mxu0 0
  %1118 = vmatprep.subr.bf16.mxu0 0
  %1119 = vmatpush1.bf16.msra.mxu0 0
  %1120 = vmatprep.subr.bf16.mxu0 0
  %1121 = vmatpush1.bf16.msra.mxu0 0
  %1122 = vmatprep.mubr.bf16.mxu0 0
  %1123 = vmatmul.mubr.bf16.gmra.mrb[0].mxu0 %v334
  %v1124 = vpop.f32.mrb[0].mxu0
  %v1125 = vadd.f32 %v1060, %v1124
  %v1126 = vpop.f32.mrb[0].mxu0
  %v1127 = vpop.f32.mrb[0].mxu0
  %v1128 = vadd.f32 %v1063, %v1127
  %v1129 = vpop.f32.mrb[0].mxu0
  %1130 = vmatprep.mubr.bf16.mxu0 0
  %1131 = vmatmul.mubr.bf16.gmra.mrb[0].mxu0 %v343
  %v1132 = vpop.f32.mrb[0].mxu0
  %v1133 = vadd.f32 %v1068, %v1132
  %v1134 = vpop.f32.mrb[0].mxu0
  %v1135 = vpop.f32.mrb[0].mxu0
  %v1136 = vadd.f32 %v1071, %v1135
  %v1137 = vpop.f32.mrb[0].mxu0
  %1138 = vmatprep.mubr.bf16.mxu0 0
  %1139 = vmatmul.mubr.bf16.gmra.mrb[0].mxu0 %v352
  %v1140 = vpop.f32.mrb[0].mxu0
  %v1141 = vadd.f32 %v1076, %v1140
  %v1142 = vpop.f32.mrb[0].mxu0
  %v1143 = vpop.f32.mrb[0].mxu0
  %v1144 = vadd.f32 %v1079, %v1143
  %v1145 = vpop.f32.mrb[0].mxu0
  %1146 = vmatprep.mubr.bf16.mxu0 0
  %1147 = vmatmul.mubr.bf16.gmra.mrb[0].mxu0 %v361
  %v1148 = vpop.f32.mrb[0].mxu0
  %v1149 = vadd.f32 %v1084, %v1148
  %v1150 = vpop.f32.mrb[0].mxu0
  %v1151 = vpop.f32.mrb[0].mxu0
  %v1152 = vadd.f32 %v1087, %v1151
  %v1153 = vpop.f32.mrb[0].mxu0
  %1154 = vdwg.mxu0
  %v1155 = vld [vmem:[%s2] sm:$0x1]
  %v1157 = vlaneseq
  %v1158 = vshrl.u32 %v1157, 7
  %v1159 = vsub.s32 0, %v1158
  %v1160 = vrot.slane %v1155, %v1159
  %v1162 = vmul.f32 %v1125, %v1160
  %v1163 = vmul.f32 %v1128, %v1160
  %v1164 = vmul.f32 %v1133, %v1160
  %v1165 = vmul.f32 %v1136, %v1160
  %v1166 = vmul.f32 %v1141, %v1160
  %v1167 = vmul.f32 %v1144, %v1160
  %v1168 = vmul.f32 %v1149, %v1160
  %v1169 = vmul.f32 %v1152, %v1160
  %v1170 = vld [vmem:[%s3] sm:$0x1]
  %v1172 = vlaneseq
  %v1173 = vshrl.u32 %v1172, 7
  %v1174 = vsub.s32 0, %v1173
  %v1175 = vrot.slane %v1170, %v1174
  %v1177 = vadd.f32 %v1162, %v1175
  %v1178 = vadd.f32 %v1163, %v1175
  %v1179 = vadd.f32 %v1164, %v1175
  %v1180 = vadd.f32 %v1165, %v1175
  %v1181 = vadd.f32 %v1166, %v1175
  %v1182 = vadd.f32 %v1167, %v1175
  %v1183 = vadd.f32 %v1168, %v1175
  %v1184 = vadd.f32 %v1169, %v1175
  %v1185 = vld [vmem:[%s4] sm:$0xf]
  %v1186 = vld [vmem:[%s4 + $0x4] sm:$0xf]
  %v1187 = vld [vmem:[%s4 + $0x8] sm:$0xf]
  %v1188 = vld [vmem:[%s4 + $0xc] sm:$0xf]
  %v1189 = vld [vmem:[%s4 + $0x10] sm:$0xf]
  %v1190 = vld [vmem:[%s4 + $0x14] sm:$0xf]
  %v1191 = vld [vmem:[%s4 + $0x18] sm:$0xf]
  %v1192 = vld [vmem:[%s4 + $0x1c] sm:$0xf]
  %v1193 = vld [vmem:[%s5] sm:$0xf]
  %v1194 = vld [vmem:[%s5 + $0x4] sm:$0xf]
  %v1195 = vld [vmem:[%s5 + $0x8] sm:$0xf]
  %v1196 = vld [vmem:[%s5 + $0xc] sm:$0xf]
  %v1205 = vunpack.c.l.b16 %v1185
  %v1206 = vunpack.c.l.b16 %v1186
  %v1207 = vunpack.c.l.b16 %v1187
  %v1208 = vunpack.c.l.b16 %v1188
  %v1209 = vunpack.c.l.b16 %v1189
  %v1210 = vunpack.c.l.b16 %v1190
  %v1211 = vunpack.c.l.b16 %v1191
  %v1212 = vunpack.c.l.b16 %v1192
  %v1213 = vpack.c.b16 %v1206, %v1205
  %v1214 = vpack.c.b16 %v1208, %v1207
  %v1215 = vpack.c.b16 %v1210, %v1209
  %v1216 = vpack.c.b16 %v1212, %v1211
  %v1221 = vunpack.c.l.b16 %v1193
  %v1222 = vunpack.c.l.b16 %v1194
  %v1223 = vunpack.c.l.b16 %v1195
  %v1224 = vunpack.c.l.b16 %v1196
  %v1225 = vpack.c.b16 %v1222, %v1221
  %v1226 = vpack.c.b16 %v1224, %v1223
  %vm1229 = vcmask 261120
  %v1231 = vsel %vm1229, %v1213, 0
  %v1234 = vsel %vm1229, %v1214, 0
  %v1237 = vsel %vm1229, %v1215, 0
  %v1240 = vsel %vm1229, %v1216, 0
  %1242 = vmatprep.subr.bf16.mxu0 0
  %1243 = vmatpush1.bf16.msra.mxu0 %v1225
  %1244 = vmatprep.subr.bf16.mxu0 0
  %1245 = vmatpush1.bf16.msra.mxu0 %v1226
  %1246 = vmatprep.subr.bf16.mxu0 0
  %1247 = vmatpush1.bf16.msra.mxu0 0
  %1248 = vmatprep.subr.bf16.mxu0 0
  %1249 = vmatpush1.bf16.msra.mxu0 0
  %1250 = vmatprep.subr.bf16.mxu0 0
  %1251 = vmatpush1.bf16.msra.mxu0 0
  %1252 = vmatprep.subr.bf16.mxu0 0
  %1253 = vmatpush1.bf16.msra.mxu0 0
  %1254 = vmatprep.subr.bf16.mxu0 0
  %1255 = vmatpush1.bf16.msra.mxu0 0
  %1256 = vmatprep.subr.bf16.mxu0 0
  %1257 = vmatpush1.bf16.msra.mxu0 0
  %1258 = vmatprep.subr.bf16.mxu0 0
  %1259 = vmatpush1.bf16.msra.mxu0 0
  %1260 = vmatprep.subr.bf16.mxu0 0
  %1261 = vmatpush1.bf16.msra.mxu0 0
  %1262 = vmatprep.subr.bf16.mxu0 0
  %1263 = vmatpush1.bf16.msra.mxu0 0
  %1264 = vmatprep.subr.bf16.mxu0 0
  %1265 = vmatpush1.bf16.msra.mxu0 0
  %1266 = vmatprep.subr.bf16.mxu0 0
  %1267 = vmatpush1.bf16.msra.mxu0 0
  %1268 = vmatprep.subr.bf16.mxu0 0
  %1269 = vmatpush1.bf16.msra.mxu0 0
  %1270 = vmatprep.subr.bf16.mxu0 0
  %1271 = vmatpush1.bf16.msra.mxu0 0
  %1272 = vmatprep.subr.bf16.mxu0 0
  %1273 = vmatpush1.bf16.msra.mxu0 0
  %1274 = vmatprep.mubr.bf16.mxu0 0
  %1275 = vmatmul.mubr.bf16.gmra.mrb[0].mxu0 %v1231
  %v1276 = vpop.f32.mrb[0].mxu0
  %v1277 = vadd.f32 0.0, %v1276
  %v1278 = vpop.f32.mrb[0].mxu0
  %v1279 = vpop.f32.mrb[0].mxu0
  %v1280 = vadd.f32 0.0, %v1279
  %v1281 = vpop.f32.mrb[0].mxu0
  %1282 = vmatprep.mubr.bf16.mxu0 0
  %1283 = vmatmul.mubr.bf16.gmra.mrb[0].mxu0 %v1234
  %v1284 = vpop.f32.mrb[0].mxu0
  %v1285 = vadd.f32 0.0, %v1284
  %v1286 = vpop.f32.mrb[0].mxu0
  %v1287 = vpop.f32.mrb[0].mxu0
  %v1288 = vadd.f32 0.0, %v1287
  %v1289 = vpop.f32.mrb[0].mxu0
  %1290 = vmatprep.mubr.bf16.mxu0 0
  %1291 = vmatmul.mubr.bf16.gmra.mrb[0].mxu0 %v1237
  %v1292 = vpop.f32.mrb[0].mxu0
  %v1293 = vadd.f32 0.0, %v1292
  %v1294 = vpop.f32.mrb[0].mxu0
  %v1295 = vpop.f32.mrb[0].mxu0
  %v1296 = vadd.f32 0.0, %v1295
  %v1297 = vpop.f32.mrb[0].mxu0
  %1298 = vmatprep.mubr.bf16.mxu0 0
  %1299 = vmatmul.mubr.bf16.gmra.mrb[0].mxu0 %v1240
  %v1300 = vpop.f32.mrb[0].mxu0
  %v1301 = vadd.f32 0.0, %v1300
  %v1302 = vpop.f32.mrb[0].mxu0
  %v1303 = vpop.f32.mrb[0].mxu0
  %v1304 = vadd.f32 0.0, %v1303
  %v1305 = vpop.f32.mrb[0].mxu0
  %1306 = vdwg.mxu0
  %v1307 = vld [vmem:[%s6] sm:$0x1]
  %v1309 = vlaneseq
  %v1310 = vshrl.u32 %v1309, 7
  %v1311 = vsub.s32 0, %v1310
  %v1312 = vrot.slane %v1307, %v1311
  %v1314 = vmul.f32 %v1277, %v1312
  %v1315 = vmul.f32 %v1280, %v1312
  %v1316 = vmul.f32 %v1285, %v1312
  %v1317 = vmul.f32 %v1288, %v1312
  %v1318 = vmul.f32 %v1293, %v1312
  %v1319 = vmul.f32 %v1296, %v1312
  %v1320 = vmul.f32 %v1301, %v1312
  %v1321 = vmul.f32 %v1304, %v1312
  %v1322 = vld [vmem:[%s7] sm:$0x1]
  %v1324 = vlaneseq
  %v1325 = vshrl.u32 %v1324, 7
  %v1326 = vsub.s32 0, %v1325
  %v1327 = vrot.slane %v1322, %v1326
  %v1329 = vadd.f32 %v1314, %v1327
  %v1330 = vadd.f32 %v1315, %v1327
  %v1331 = vadd.f32 %v1316, %v1327
  %v1332 = vadd.f32 %v1317, %v1327
  %v1333 = vadd.f32 %v1318, %v1327
  %v1334 = vadd.f32 %v1319, %v1327
  %v1335 = vadd.f32 %v1320, %v1327
  %v1336 = vadd.f32 %v1321, %v1327
  %v1337 = vadd.f32 %v1177, %v1329
  %v1338 = vadd.f32 %v1178, %v1330
  %v1339 = vadd.f32 %v1179, %v1331
  %v1340 = vadd.f32 %v1180, %v1332
  %v1341 = vadd.f32 %v1181, %v1333
  %v1342 = vadd.f32 %v1182, %v1334
  %v1343 = vadd.f32 %v1183, %v1335
  %v1344 = vadd.f32 %v1184, %v1336
  %v1345 = vmax.f32 %v1337, 0.0
  %v1346 = vmax.f32 %v1338, 0.0
  %v1347 = vmax.f32 %v1339, 0.0
  %v1348 = vmax.f32 %v1340, 0.0
  %v1349 = vmax.f32 %v1341, 0.0
  %v1350 = vmax.f32 %v1342, 0.0
  %v1351 = vmax.f32 %v1343, 0.0
  %v1352 = vmax.f32 %v1344, 0.0
  %v1353 = vpack.c.bf16 %v1346, %v1345
  %v1354 = vpack.c.bf16 %v1348, %v1347
  %v1355 = vpack.c.bf16 %v1350, %v1349
  %v1356 = vpack.c.bf16 %v1352, %v1351
  %v1361 = vunpack.c.l.b16 %v1353
  %v1362 = vunpack.c.h.b16 %v1353
  %v1363 = vunpack.c.l.b16 %v1354
  %v1364 = vunpack.c.h.b16 %v1354
  %v1365 = vunpack.c.l.b16 %v1355
  %v1366 = vunpack.c.h.b16 %v1355
  %v1367 = vunpack.c.l.b16 %v1356
  %v1368 = vunpack.c.h.b16 %v1356
  %v1369 = vpack.c.b16 %v1361, %v1361
  %v1370 = vpack.c.b16 %v1362, %v1362
  %v1371 = vpack.c.b16 %v1363, %v1363
  %v1372 = vpack.c.b16 %v1364, %v1364
  %v1373 = vpack.c.b16 %v1365, %v1365
  %v1374 = vpack.c.b16 %v1366, %v1366
  %v1375 = vpack.c.b16 %v1367, %v1367
  %v1376 = vpack.c.b16 %v1368, %v1368
  %1385 = vst [vmem:[%s8] sm:$0xf] %v1369
  %1386 = vst [vmem:[%s8 + $0x4] sm:$0xf] %v1370
  %1387 = vst [vmem:[%s8 + $0x8] sm:$0xf] %v1371
  %1388 = vst [vmem:[%s8 + $0xc] sm:$0xf] %v1372
  %1389 = vst [vmem:[%s8 + $0x10] sm:$0xf] %v1373
  %1390 = vst [vmem:[%s8 + $0x14] sm:$0xf] %v1374
  %1391 = vst [vmem:[%s8 + $0x18] sm:$0xf] %v1375
  %1392 = vst [vmem:[%s8 + $0x1c] sm:$0xf] %v1376
  // Predicated region
  $region34: #{pool_to_feature_vector.5} parent=0 // pred_check
    _
  $region35: #{pool_to_feature_vector.5} parent=0 // pred_check_branch
    %1394 = sbr.rel (0) target = $region37
  $region36: #{pool_to_feature_vector.5} parent=0 // pred_region
    _
  $region37: #{pool_to_feature_vector.5} parent=0 // pred_fallthru
    _
  // Predicated region
  $region38: #{pool_to_feature_vector.5} parent=0 // pred_check
    _
  $region39: #{pool_to_feature_vector.5} parent=0 // pred_check_branch
    %1396 = sbr.rel (0) target = $region41
  $region40: #{pool_to_feature_vector.5} parent=0 // pred_region
    _
  $region41: #{pool_to_feature_vector.5} parent=0 // pred_fallthru
    _

// kernel: pool_to_feature_vector.7
$region0: #{pool_to_feature_vector.7}
  #allocation0 [shape = 'u32[]', space=smem, size = 0x4, offset = 0x4, fixed_abs, tag = 'smem constant byte address 0x4 - core index']
  #allocation1 [shape = 'u32[144,128]{1,0:T(1,128)}', space=vmem, size = 0x12000, scoped, tag = 'internal scratch']
  %s0 = inlined_call_operand.vmem [shape: bf16[64,1152], index: 0, kind: input, shape index: {}]
  %s1 = inlined_call_operand.vmem [shape: bf16[1152,128], index: 1, kind: input, shape index: {}]
  %s2 = inlined_call_operand.vmem [shape: f32[1,128], index: 2, kind: input, shape index: {}]
  %s3 = inlined_call_operand.vmem [shape: f32[1,128], index: 3, kind: input, shape index: {}]
  %s4 = inlined_call_operand.vmem [shape: bf16[64,128], index: 4, kind: input, shape index: {}]
  %s5 = inlined_call_operand.hbm [shape: f32[1,4,128], index: 5, kind: output, shape index: {}]
  %s6 = sld [smem:[#allocation0]]
  $region30: #{pool_to_feature_vector.7} parent=0
    _
  %s8 = ssub.s32 1, %s6
  %s9 = scalar_select 0, %s8, %s6
  $region1: #{pool_to_feature_vector.7} parent=0
    #allocation2 [shape = 'u8[2048]{0}', space=vmem, size = 0x800, scoped, tag = 'output window, operand 0, single buffered']
    #allocation3 [shape = 's32[1]{0}', space=sflag, size = 0x4, scoped, tag = 'scoped memory for pool_to_feature_vector.7']
    %10 = vsyncpa [#allocation3], 0
    // Predicated region
    $region2: #{pool_to_feature_vector.7} parent=1 // pred_check
      _
    $region3: #{pool_to_feature_vector.7} parent=1 // pred_check_branch
      %12 = sbr.rel (0) target = $region5
    $region4: #{pool_to_feature_vector.7} parent=1 // pred_region
      _
    $region5: #{pool_to_feature_vector.7} parent=1 // pred_fallthru
      _
    // Predicated region
    $region6: #{pool_to_feature_vector.7} parent=1 // pred_check
      _
    $region7: #{pool_to_feature_vector.7} parent=1 // pred_check_branch
      %14 = sbr.rel (0) target = $region9
    $region8: #{pool_to_feature_vector.7} parent=1 // pred_region
      _
    $region9: #{pool_to_feature_vector.7} parent=1 // pred_fallthru
      _
    // Predicated region
    $region10: #{pool_to_feature_vector.7} parent=1 // pred_check
      _
    $region11: #{pool_to_feature_vector.7} parent=1 // pred_check_branch
      %16 = sbr.rel (0) target = $region13
    $region12: #{pool_to_feature_vector.7} parent=1 // pred_region
      _
    $region13: #{pool_to_feature_vector.7} parent=1 // pred_fallthru
      _
    // Predicated region
    $region14: #{pool_to_feature_vector.7} parent=1 // pred_check
      _
    $region15: #{pool_to_feature_vector.7} parent=1 // pred_check_branch
      %18 = sbr.rel (0) target = $region17
    $region16: #{pool_to_feature_vector.7} parent=1 // pred_region
      _
    $region17: #{pool_to_feature_vector.7} parent=1 // pred_fallthru
      _
    // Predicated region
    $region18: #{pool_to_feature_vector.7} parent=1 // pred_check
      _
    $region19: #{pool_to_feature_vector.7} parent=1 // pred_check_branch
      %20 = sbr.rel (0) target = $region21
    $region20: #{pool_to_feature_vector.7} parent=1 // pred_region
      _
    $region21: #{pool_to_feature_vector.7} parent=1 // pred_fallthru
      _
    %v22 = vld [vmem:[%s0] sm:$0xff]
    %v23 = vld [vmem:[%s0 + $0x8] sm:$0xff]
    %v24 = vld [vmem:[%s0 + $0x10] sm:$0xff]
    %v25 = vld [vmem:[%s0 + $0x18] sm:$0xff]
    %v26 = vld [vmem:[%s0 + $0x20] sm:$0xf]
    %v27 = vld [vmem:[%s0 + $0x24] sm:$0xff]
    %v28 = vld [vmem:[%s0 + $0x2c] sm:$0xff]
    %v29 = vld [vmem:[%s0 + $0x34] sm:$0xff]
    %v30 = vld [vmem:[%s0 + $0x3c] sm:$0xff]
    %v31 = vld [vmem:[%s0 + $0x44] sm:$0xf]
    %v32 = vld [vmem:[%s0 + $0x48] sm:$0xff]
    %v33 = vld [vmem:[%s0 + $0x50] sm:$0xff]
    %v34 = vld [vmem:[%s0 + $0x58] sm:$0xff]
    %v35 = vld [vmem:[%s0 + $0x60] sm:$0xff]
    %v36 = vld [vmem:[%s0 + $0x68] sm:$0xf]
    %v37 = vld [vmem:[%s0 + $0x6c] sm:$0xff]
    %v38 = vld [vmem:[%s0 + $0x74] sm:$0xff]
    %v39 = vld [vmem:[%s0 + $0x7c] sm:$0xff]
    %v40 = vld [vmem:[%s0 + $0x84] sm:$0xff]
    %v41 = vld [vmem:[%s0 + $0x8c] sm:$0xf]
    %v42 = vld [vmem:[%s0 + $0x90] sm:$0xff]
    %v43 = vld [vmem:[%s0 + $0x98] sm:$0xff]
    %v44 = vld [vmem:[%s0 + $0xa0] sm:$0xff]
    %v45 = vld [vmem:[%s0 + $0xa8] sm:$0xff]
    %v46 = vld [vmem:[%s0 + $0xb0] sm:$0xf]
    %v47 = vld [vmem:[%s0 + $0xb4] sm:$0xff]
    %v48 = vld [vmem:[%s0 + $0xbc] sm:$0xff]
    %v49 = vld [vmem:[%s0 + $0xc4] sm:$0xff]
    %v50 = vld [vmem:[%s0 + $0xcc] sm:$0xff]
    %v51 = vld [vmem:[%s0 + $0xd4] sm:$0xf]
    %v52 = vld [vmem:[%s0 + $0xd8] sm:$0xff]
    %v53 = vld [vmem:[%s0 + $0xe0] sm:$0xff]
    %v54 = vld [vmem:[%s0 + $0xe8] sm:$0xff]
    %v55 = vld [vmem:[%s0 + $0xf0] sm:$0xff]
    %v56 = vld [vmem:[%s0 + $0xf8] sm:$0xf]
    %v57 = vld [vmem:[%s0 + $0xfc] sm:$0xff]
    %v58 = vld [vmem:[%s0 + $0x104] sm:$0xff]
    %v59 = vld [vmem:[%s0 + $0x10c] sm:$0xff]
    %v60 = vld [vmem:[%s0 + $0x114] sm:$0xff]
    %v61 = vld [vmem:[%s0 + $0x11c] sm:$0xf]
    %v62 = vld [vmem:[%s1] sm:$0xf]
    %v63 = vld [vmem:[%s1 + $0x4] sm:$0xf]
    %v64 = vld [vmem:[%s1 + $0x8] sm:$0xf]
    %v65 = vld [vmem:[%s1 + $0xc] sm:$0xf]
    %v66 = vld [vmem:[%s1 + $0x10] sm:$0xf]
    %v67 = vld [vmem:[%s1 + $0x14] sm:$0xf]
    %v68 = vld [vmem:[%s1 + $0x18] sm:$0xf]
    %v69 = vld [vmem:[%s1 + $0x1c] sm:$0xf]
    %v70 = vld [vmem:[%s1 + $0x20] sm:$0xf]
    %v71 = vld [vmem:[%s1 + $0x24] sm:$0xf]
    %v72 = vld [vmem:[%s1 + $0x28] sm:$0xf]
    %v73 = vld [vmem:[%s1 + $0x2c] sm:$0xf]
    %v74 = vld [vmem:[%s1 + $0x30] sm:$0xf]
    %v75 = vld [vmem:[%s1 + $0x34] sm:$0xf]
    %v76 = vld [vmem:[%s1 + $0x38] sm:$0xf]
    %v77 = vld [vmem:[%s1 + $0x3c] sm:$0xf]
    %v78 = vld [vmem:[%s1 + $0x40] sm:$0xf]
    %v79 = vld [vmem:[%s1 + $0x44] sm:$0xf]
    %v80 = vld [vmem:[%s1 + $0x48] sm:$0xf]
    %v81 = vld [vmem:[%s1 + $0x4c] sm:$0xf]
    %v82 = vld [vmem:[%s1 + $0x50] sm:$0xf]
    %v83 = vld [vmem:[%s1 + $0x54] sm:$0xf]
    %v84 = vld [vmem:[%s1 + $0x58] sm:$0xf]
    %v85 = vld [vmem:[%s1 + $0x5c] sm:$0xf]
    %v86 = vld [vmem:[%s1 + $0x60] sm:$0xf]
    %v87 = vld [vmem:[%s1 + $0x64] sm:$0xf]
    %v88 = vld [vmem:[%s1 + $0x68] sm:$0xf]
    %v89 = vld [vmem:[%s1 + $0x6c] sm:$0xf]
    %v90 = vld [vmem:[%s1 + $0x70] sm:$0xf]
    %v91 = vld [vmem:[%s1 + $0x74] sm:$0xf]
    %v92 = vld [vmem:[%s1 + $0x78] sm:$0xf]
    %v93 = vld [vmem:[%s1 + $0x7c] sm:$0xf]
    %v94 = vld [vmem:[%s1 + $0x80] sm:$0xf]
    %v95 = vld [vmem:[%s1 + $0x84] sm:$0xf]
    %v96 = vld [vmem:[%s1 + $0x88] sm:$0xf]
    %v97 = vld [vmem:[%s1 + $0x8c] sm:$0xf]
    %v98 = vld [vmem:[%s1 + $0x90] sm:$0xf]
    %v99 = vld [vmem:[%s1 + $0x94] sm:$0xf]
    %v100 = vld [vmem:[%s1 + $0x98] sm:$0xf]
    %v101 = vld [vmem:[%s1 + $0x9c] sm:$0xf]
    %v102 = vld [vmem:[%s1 + $0xa0] sm:$0xf]
    %v103 = vld [vmem:[%s1 + $0xa4] sm:$0xf]
    %v104 = vld [vmem:[%s1 + $0xa8] sm:$0xf]
    %v105 = vld [vmem:[%s1 + $0xac] sm:$0xf]
    %v106 = vld [vmem:[%s1 + $0xb0] sm:$0xf]
    %v107 = vld [vmem:[%s1 + $0xb4] sm:$0xf]
    %v108 = vld [vmem:[%s1 + $0xb8] sm:$0xf]
    %v109 = vld [vmem:[%s1 + $0xbc] sm:$0xf]
    %v110 = vld [vmem:[%s1 + $0xc0] sm:$0xf]
    %v111 = vld [vmem:[%s1 + $0xc4] sm:$0xf]
    %v112 = vld [vmem:[%s1 + $0xc8] sm:$0xf]
    %v113 = vld [vmem:[%s1 + $0xcc] sm:$0xf]
    %v114 = vld [vmem:[%s1 + $0xd0] sm:$0xf]
    %v115 = vld [vmem:[%s1 + $0xd4] sm:$0xf]
    %v116 = vld [vmem:[%s1 + $0xd8] sm:$0xf]
    %v117 = vld [vmem:[%s1 + $0xdc] sm:$0xf]
    %v118 = vld [vmem:[%s1 + $0xe0] sm:$0xf]
    %v119 = vld [vmem:[%s1 + $0xe4] sm:$0xf]
    %v120 = vld [vmem:[%s1 + $0xe8] sm:$0xf]
    %v121 = vld [vmem:[%s1 + $0xec] sm:$0xf]
    %v122 = vld [vmem:[%s1 + $0xf0] sm:$0xf]
    %v123 = vld [vmem:[%s1 + $0xf4] sm:$0xf]
    %v124 = vld [vmem:[%s1 + $0xf8] sm:$0xf]
    %v125 = vld [vmem:[%s1 + $0xfc] sm:$0xf]
    %v126 = vld [vmem:[%s1 + $0x100] sm:$0xf]
    %v127 = vld [vmem:[%s1 + $0x104] sm:$0xf]
    %v128 = vld [vmem:[%s1 + $0x108] sm:$0xf]
    %v129 = vld [vmem:[%s1 + $0x10c] sm:$0xf]
    %v130 = vld [vmem:[%s1 + $0x110] sm:$0xf]
    %v131 = vld [vmem:[%s1 + $0x114] sm:$0xf]
    %v132 = vld [vmem:[%s1 + $0x118] sm:$0xf]
    %v133 = vld [vmem:[%s1 + $0x11c] sm:$0xf]
    %v134 = vld [vmem:[%s1 + $0x120] sm:$0xf]
    %v135 = vld [vmem:[%s1 + $0x124] sm:$0xf]
    %v136 = vld [vmem:[%s1 + $0x128] sm:$0xf]
    %v137 = vld [vmem:[%s1 + $0x12c] sm:$0xf]
    %v138 = vld [vmem:[%s1 + $0x130] sm:$0xf]
    %v139 = vld [vmem:[%s1 + $0x134] sm:$0xf]
    %v140 = vld [vmem:[%s1 + $0x138] sm:$0xf]
    %v141 = vld [vmem:[%s1 + $0x13c] sm:$0xf]
    %v142 = vld [vmem:[%s1 + $0x140] sm:$0xf]
    %v143 = vld [vmem:[%s1 + $0x144] sm:$0xf]
    %v144 = vld [vmem:[%s1 + $0x148] sm:$0xf]
    %v145 = vld [vmem:[%s1 + $0x14c] sm:$0xf]
    %v146 = vld [vmem:[%s1 + $0x150] sm:$0xf]
    %v147 = vld [vmem:[%s1 + $0x154] sm:$0xf]
    %v148 = vld [vmem:[%s1 + $0x158] sm:$0xf]
    %v149 = vld [vmem:[%s1 + $0x15c] sm:$0xf]
    %v150 = vld [vmem:[%s1 + $0x160] sm:$0xf]
    %v151 = vld [vmem:[%s1 + $0x164] sm:$0xf]
    %v152 = vld [vmem:[%s1 + $0x168] sm:$0xf]
    %v153 = vld [vmem:[%s1 + $0x16c] sm:$0xf]
    %v154 = vld [vmem:[%s1 + $0x170] sm:$0xf]
    %v155 = vld [vmem:[%s1 + $0x174] sm:$0xf]
    %v156 = vld [vmem:[%s1 + $0x178] sm:$0xf]
    %v157 = vld [vmem:[%s1 + $0x17c] sm:$0xf]
    %v158 = vld [vmem:[%s1 + $0x180] sm:$0xf]
    %v159 = vld [vmem:[%s1 + $0x184] sm:$0xf]
    %v160 = vld [vmem:[%s1 + $0x188] sm:$0xf]
    %v161 = vld [vmem:[%s1 + $0x18c] sm:$0xf]
    %v162 = vld [vmem:[%s1 + $0x190] sm:$0xf]
    %v163 = vld [vmem:[%s1 + $0x194] sm:$0xf]
    %v164 = vld [vmem:[%s1 + $0x198] sm:$0xf]
    %v165 = vld [vmem:[%s1 + $0x19c] sm:$0xf]
    %v166 = vld [vmem:[%s1 + $0x1a0] sm:$0xf]
    %v167 = vld [vmem:[%s1 + $0x1a4] sm:$0xf]
    %v168 = vld [vmem:[%s1 + $0x1a8] sm:$0xf]
    %v169 = vld [vmem:[%s1 + $0x1ac] sm:$0xf]
    %v170 = vld [vmem:[%s1 + $0x1b0] sm:$0xf]
    %v171 = vld [vmem:[%s1 + $0x1b4] sm:$0xf]
    %v172 = vld [vmem:[%s1 + $0x1b8] sm:$0xf]
    %v173 = vld [vmem:[%s1 + $0x1bc] sm:$0xf]
    %v174 = vld [vmem:[%s1 + $0x1c0] sm:$0xf]
    %v175 = vld [vmem:[%s1 + $0x1c4] sm:$0xf]
    %v176 = vld [vmem:[%s1 + $0x1c8] sm:$0xf]
    %v177 = vld [vmem:[%s1 + $0x1cc] sm:$0xf]
    %v178 = vld [vmem:[%s1 + $0x1d0] sm:$0xf]
    %v179 = vld [vmem:[%s1 + $0x1d4] sm:$0xf]
    %v180 = vld [vmem:[%s1 + $0x1d8] sm:$0xf]
    %v181 = vld [vmem:[%s1 + $0x1dc] sm:$0xf]
    %v182 = vld [vmem:[%s1 + $0x1e0] sm:$0xf]
    %v183 = vld [vmem:[%s1 + $0x1e4] sm:$0xf]
    %v184 = vld [vmem:[%s1 + $0x1e8] sm:$0xf]
    %v185 = vld [vmem:[%s1 + $0x1ec] sm:$0xf]
    %v186 = vld [vmem:[%s1 + $0x1f0] sm:$0xf]
    %v187 = vld [vmem:[%s1 + $0x1f4] sm:$0xf]
    %v188 = vld [vmem:[%s1 + $0x1f8] sm:$0xf]
    %v189 = vld [vmem:[%s1 + $0x1fc] sm:$0xf]
    %v190 = vld [vmem:[%s1 + $0x200] sm:$0xf]
    %v191 = vld [vmem:[%s1 + $0x204] sm:$0xf]
    %v192 = vld [vmem:[%s1 + $0x208] sm:$0xf]
    %v193 = vld [vmem:[%s1 + $0x20c] sm:$0xf]
    %v194 = vld [vmem:[%s1 + $0x210] sm:$0xf]
    %v195 = vld [vmem:[%s1 + $0x214] sm:$0xf]
    %v196 = vld [vmem:[%s1 + $0x218] sm:$0xf]
    %v197 = vld [vmem:[%s1 + $0x21c] sm:$0xf]
    %v198 = vld [vmem:[%s1 + $0x220] sm:$0xf]
    %v199 = vld [vmem:[%s1 + $0x224] sm:$0xf]
    %v200 = vld [vmem:[%s1 + $0x228] sm:$0xf]
    %v201 = vld [vmem:[%s1 + $0x22c] sm:$0xf]
    %v202 = vld [vmem:[%s1 + $0x230] sm:$0xf]
    %v203 = vld [vmem:[%s1 + $0x234] sm:$0xf]
    %v204 = vld [vmem:[%s1 + $0x238] sm:$0xf]
    %v205 = vld [vmem:[%s1 + $0x23c] sm:$0xf]
    %v246 = vunpack.c.l.b16 %v22
    %v247 = vunpack.c.h.b16 %v22
    %v248 = vunpack.c.l.b16 %v23
    %v249 = vunpack.c.h.b16 %v23
    %v250 = vunpack.c.l.b16 %v24
    %v251 = vunpack.c.h.b16 %v24
    %v252 = vunpack.c.l.b16 %v25
    %v253 = vunpack.c.h.b16 %v25
    %v254 = vunpack.c.l.b16 %v26
    %v255 = vunpack.c.l.b16 %v27
    %v256 = vunpack.c.h.b16 %v27
    %v257 = vunpack.c.l.b16 %v28
    %v258 = vunpack.c.h.b16 %v28
    %v259 = vunpack.c.l.b16 %v29
    %v260 = vunpack.c.h.b16 %v29
    %v261 = vunpack.c.l.b16 %v30
    %v262 = vunpack.c.h.b16 %v30
    %v263 = vunpack.c.l.b16 %v31
    %v264 = vunpack.c.l.b16 %v32
    %v265 = vunpack.c.h.b16 %v32
    %v266 = vunpack.c.l.b16 %v33
    %v267 = vunpack.c.h.b16 %v33
    %v268 = vunpack.c.l.b16 %v34
    %v269 = vunpack.c.h.b16 %v34
    %v270 = vunpack.c.l.b16 %v35
    %v271 = vunpack.c.h.b16 %v35
    %v272 = vunpack.c.l.b16 %v36
    %v273 = vunpack.c.l.b16 %v37
    %v274 = vunpack.c.h.b16 %v37
    %v275 = vunpack.c.l.b16 %v38
    %v276 = vunpack.c.h.b16 %v38
    %v277 = vunpack.c.l.b16 %v39
    %v278 = vunpack.c.h.b16 %v39
    %v279 = vunpack.c.l.b16 %v40
    %v280 = vunpack.c.h.b16 %v40
    %v281 = vunpack.c.l.b16 %v41
    %v282 = vunpack.c.l.b16 %v42
    %v283 = vunpack.c.h.b16 %v42
    %v284 = vunpack.c.l.b16 %v43
    %v285 = vunpack.c.h.b16 %v43
    %v286 = vunpack.c.l.b16 %v44
    %v287 = vunpack.c.h.b16 %v44
    %v288 = vunpack.c.l.b16 %v45
    %v289 = vunpack.c.h.b16 %v45
    %v290 = vunpack.c.l.b16 %v46
    %v291 = vunpack.c.l.b16 %v47
    %v292 = vunpack.c.h.b16 %v47
    %v293 = vunpack.c.l.b16 %v48
    %v294 = vunpack.c.h.b16 %v48
    %v295 = vunpack.c.l.b16 %v49
    %v296 = vunpack.c.h.b16 %v49
    %v297 = vunpack.c.l.b16 %v50
    %v298 = vunpack.c.h.b16 %v50
    %v299 = vunpack.c.l.b16 %v51
    %v300 = vunpack.c.l.b16 %v52
    %v301 = vunpack.c.h.b16 %v52
    %v302 = vunpack.c.l.b16 %v53
    %v303 = vunpack.c.h.b16 %v53
    %v304 = vunpack.c.l.b16 %v54
    %v305 = vunpack.c.h.b16 %v54
    %v306 = vunpack.c.l.b16 %v55
    %v307 = vunpack.c.h.b16 %v55
    %v308 = vunpack.c.l.b16 %v56
    %v309 = vunpack.c.l.b16 %v57
    %v310 = vunpack.c.h.b16 %v57
    %v311 = vunpack.c.l.b16 %v58
    %v312 = vunpack.c.h.b16 %v58
    %v313 = vunpack.c.l.b16 %v59
    %v314 = vunpack.c.h.b16 %v59
    %v315 = vunpack.c.l.b16 %v60
    %v316 = vunpack.c.h.b16 %v60
    %v317 = vunpack.c.l.b16 %v61
    %v318 = vpack.c.b16 %v255, %v246
    %v319 = vpack.c.b16 %v256, %v247
    %v320 = vpack.c.b16 %v257, %v248
    %v321 = vpack.c.b16 %v258, %v249
    %v322 = vpack.c.b16 %v259, %v250
    %v323 = vpack.c.b16 %v260, %v251
    %v324 = vpack.c.b16 %v261, %v252
    %v325 = vpack.c.b16 %v262, %v253
    %v326 = vpack.c.b16 %v263, %v254
    %v327 = vpack.c.b16 %v273, %v264
    %v328 = vpack.c.b16 %v274, %v265
    %v329 = vpack.c.b16 %v275, %v266
    %v330 = vpack.c.b16 %v276, %v267
    %v331 = vpack.c.b16 %v277, %v268
    %v332 = vpack.c.b16 %v278, %v269
    %v333 = vpack.c.b16 %v279, %v270
    %v334 = vpack.c.b16 %v280, %v271
    %v335 = vpack.c.b16 %v281, %v272
    %v336 = vpack.c.b16 %v291, %v282
    %v337 = vpack.c.b16 %v292, %v283
    %v338 = vpack.c.b16 %v293, %v284
    %v339 = vpack.c.b16 %v294, %v285
    %v340 = vpack.c.b16 %v295, %v286
    %v341 = vpack.c.b16 %v296, %v287
    %v342 = vpack.c.b16 %v297, %v288
    %v343 = vpack.c.b16 %v298, %v289
    %v344 = vpack.c.b16 %v299, %v290
    %v345 = vpack.c.b16 %v309, %v300
    %v346 = vpack.c.b16 %v310, %v301
    %v347 = vpack.c.b16 %v311, %v302
    %v348 = vpack.c.b16 %v312, %v303
    %v349 = vpack.c.b16 %v313, %v304
    %v350 = vpack.c.b16 %v314, %v305
    %v351 = vpack.c.b16 %v315, %v306
    %v352 = vpack.c.b16 %v316, %v307
    %v353 = vpack.c.b16 %v317, %v308
    %v534 = vunpack.c.l.b16 %v62
    %v535 = vunpack.c.l.b16 %v63
    %v536 = vunpack.c.l.b16 %v64
    %v537 = vunpack.c.l.b16 %v65
    %v538 = vunpack.c.l.b16 %v66
    %v539 = vunpack.c.l.b16 %v67
    %v540 = vunpack.c.l.b16 %v68
    %v541 = vunpack.c.l.b16 %v69
    %v542 = vunpack.c.l.b16 %v70
    %v543 = vunpack.c.l.b16 %v71
    %v544 = vunpack.c.l.b16 %v72
    %v545 = vunpack.c.l.b16 %v73
    %v546 = vunpack.c.l.b16 %v74
    %v547 = vunpack.c.l.b16 %v75
    %v548 = vunpack.c.l.b16 %v76
    %v549 = vunpack.c.l.b16 %v77
    %v550 = vunpack.c.l.b16 %v78
    %v551 = vunpack.c.l.b16 %v79
    %v552 = vunpack.c.l.b16 %v80
    %v553 = vunpack.c.l.b16 %v81
    %v554 = vunpack.c.l.b16 %v82
    %v555 = vunpack.c.l.b16 %v83
    %v556 = vunpack.c.l.b16 %v84
    %v557 = vunpack.c.l.b16 %v85
    %v558 = vunpack.c.l.b16 %v86
    %v559 = vunpack.c.l.b16 %v87
    %v560 = vunpack.c.l.b16 %v88
    %v561 = vunpack.c.l.b16 %v89
    %v562 = vunpack.c.l.b16 %v90
    %v563 = vunpack.c.l.b16 %v91
    %v564 = vunpack.c.l.b16 %v92
    %v565 = vunpack.c.l.b16 %v93
    %v566 = vunpack.c.l.b16 %v94
    %v567 = vunpack.c.l.b16 %v95
    %v568 = vunpack.c.l.b16 %v96
    %v569 = vunpack.c.l.b16 %v97
    %v570 = vunpack.c.l.b16 %v98
    %v571 = vunpack.c.l.b16 %v99
    %v572 = vunpack.c.l.b16 %v100
    %v573 = vunpack.c.l.b16 %v101
    %v574 = vunpack.c.l.b16 %v102
    %v575 = vunpack.c.l.b16 %v103
    %v576 = vunpack.c.l.b16 %v104
    %v577 = vunpack.c.l.b16 %v105
    %v578 = vunpack.c.l.b16 %v106
    %v579 = vunpack.c.l.b16 %v107
    %v580 = vunpack.c.l.b16 %v108
    %v581 = vunpack.c.l.b16 %v109
    %v582 = vunpack.c.l.b16 %v110
    %v583 = vunpack.c.l.b16 %v111
    %v584 = vunpack.c.l.b16 %v112
    %v585 = vunpack.c.l.b16 %v113
    %v586 = vunpack.c.l.b16 %v114
    %v587 = vunpack.c.l.b16 %v115
    %v588 = vunpack.c.l.b16 %v116
    %v589 = vunpack.c.l.b16 %v117
    %v590 = vunpack.c.l.b16 %v118
    %v591 = vunpack.c.l.b16 %v119
    %v592 = vunpack.c.l.b16 %v120
    %v593 = vunpack.c.l.b16 %v121
    %v594 = vunpack.c.l.b16 %v122
    %v595 = vunpack.c.l.b16 %v123
    %v596 = vunpack.c.l.b16 %v124
    %v597 = vunpack.c.l.b16 %v125
    %v598 = vunpack.c.l.b16 %v126
    %v599 = vunpack.c.l.b16 %v127
    %v600 = vunpack.c.l.b16 %v128
    %v601 = vunpack.c.l.b16 %v129
    %v602 = vunpack.c.l.b16 %v130
    %v603 = vunpack.c.l.b16 %v131
    %v604 = vunpack.c.l.b16 %v132
    %v605 = vunpack.c.l.b16 %v133
    %v606 = vunpack.c.l.b16 %v134
    %v607 = vunpack.c.l.b16 %v135
    %v608 = vunpack.c.l.b16 %v136
    %v609 = vunpack.c.l.b16 %v137
    %v610 = vunpack.c.l.b16 %v138
    %v611 = vunpack.c.l.b16 %v139
    %v612 = vunpack.c.l.b16 %v140
    %v613 = vunpack.c.l.b16 %v141
    %v614 = vunpack.c.l.b16 %v142
    %v615 = vunpack.c.l.b16 %v143
    %v616 = vunpack.c.l.b16 %v144
    %v617 = vunpack.c.l.b16 %v145
    %v618 = vunpack.c.l.b16 %v146
    %v619 = vunpack.c.l.b16 %v147
    %v620 = vunpack.c.l.b16 %v148
    %v621 = vunpack.c.l.b16 %v149
    %v622 = vunpack.c.l.b16 %v150
    %v623 = vunpack.c.l.b16 %v151
    %v624 = vunpack.c.l.b16 %v152
    %v625 = vunpack.c.l.b16 %v153
    %v626 = vunpack.c.l.b16 %v154
    %v627 = vunpack.c.l.b16 %v155
    %v628 = vunpack.c.l.b16 %v156
    %v629 = vunpack.c.l.b16 %v157
    %v630 = vunpack.c.l.b16 %v158
    %v631 = vunpack.c.l.b16 %v159
    %v632 = vunpack.c.l.b16 %v160
    %v633 = vunpack.c.l.b16 %v161
    %v634 = vunpack.c.l.b16 %v162
    %v635 = vunpack.c.l.b16 %v163
    %v636 = vunpack.c.l.b16 %v164
    %v637 = vunpack.c.l.b16 %v165
    %v638 = vunpack.c.l.b16 %v166
    %v639 = vunpack.c.l.b16 %v167
    %v640 = vunpack.c.l.b16 %v168
    %v641 = vunpack.c.l.b16 %v169
    %v642 = vunpack.c.l.b16 %v170
    %v643 = vunpack.c.l.b16 %v171
    %v644 = vunpack.c.l.b16 %v172
    %v645 = vunpack.c.l.b16 %v173
    %v646 = vunpack.c.l.b16 %v174
    %v647 = vunpack.c.l.b16 %v175
    %v648 = vunpack.c.l.b16 %v176
    %v649 = vunpack.c.l.b16 %v177
    %v650 = vunpack.c.l.b16 %v178
    %v651 = vunpack.c.l.b16 %v179
    %v652 = vunpack.c.l.b16 %v180
    %v653 = vunpack.c.l.b16 %v181
    %v654 = vunpack.c.l.b16 %v182
    %v655 = vunpack.c.l.b16 %v183
    %v656 = vunpack.c.l.b16 %v184
    %v657 = vunpack.c.l.b16 %v185
    %v658 = vunpack.c.l.b16 %v186
    %v659 = vunpack.c.l.b16 %v187
    %v660 = vunpack.c.l.b16 %v188
    %v661 = vunpack.c.l.b16 %v189
    %v662 = vunpack.c.l.b16 %v190
    %v663 = vunpack.c.l.b16 %v191
    %v664 = vunpack.c.l.b16 %v192
    %v665 = vunpack.c.l.b16 %v193
    %v666 = vunpack.c.l.b16 %v194
    %v667 = vunpack.c.l.b16 %v195
    %v668 = vunpack.c.l.b16 %v196
    %v669 = vunpack.c.l.b16 %v197
    %v670 = vunpack.c.l.b16 %v198
    %v671 = vunpack.c.l.b16 %v199
    %v672 = vunpack.c.l.b16 %v200
    %v673 = vunpack.c.l.b16 %v201
    %v674 = vunpack.c.l.b16 %v202
    %v675 = vunpack.c.l.b16 %v203
    %v676 = vunpack.c.l.b16 %v204
    %v677 = vunpack.c.l.b16 %v205
    %v678 = vpack.c.b16 %v535, %v534
    %v679 = vpack.c.b16 %v537, %v536
    %v680 = vpack.c.b16 %v539, %v538
    %v681 = vpack.c.b16 %v541, %v540
    %v682 = vpack.c.b16 %v543, %v542
    %v683 = vpack.c.b16 %v545, %v544
    %v684 = vpack.c.b16 %v547, %v546
    %v685 = vpack.c.b16 %v549, %v548
    %v686 = vpack.c.b16 %v551, %v550
    %v687 = vpack.c.b16 %v553, %v552
    %v688 = vpack.c.b16 %v555, %v554
    %v689 = vpack.c.b16 %v557, %v556
    %v690 = vpack.c.b16 %v559, %v558
    %v691 = vpack.c.b16 %v561, %v560
    %v692 = vpack.c.b16 %v563, %v562
    %v693 = vpack.c.b16 %v565, %v564
    %v694 = vpack.c.b16 %v567, %v566
    %v695 = vpack.c.b16 %v569, %v568
    %v696 = vpack.c.b16 %v571, %v570
    %v697 = vpack.c.b16 %v573, %v572
    %v698 = vpack.c.b16 %v575, %v574
    %v699 = vpack.c.b16 %v577, %v576
    %v700 = vpack.c.b16 %v579, %v578
    %v701 = vpack.c.b16 %v581, %v580
    %v702 = vpack.c.b16 %v583, %v582
    %v703 = vpack.c.b16 %v585, %v584
    %v704 = vpack.c.b16 %v587, %v586
    %v705 = vpack.c.b16 %v589, %v588
    %v706 = vpack.c.b16 %v591, %v590
    %v707 = vpack.c.b16 %v593, %v592
    %v708 = vpack.c.b16 %v595, %v594
    %v709 = vpack.c.b16 %v597, %v596
    %v710 = vpack.c.b16 %v599, %v598
    %v711 = vpack.c.b16 %v601, %v600
    %v712 = vpack.c.b16 %v603, %v602
    %v713 = vpack.c.b16 %v605, %v604
    %v714 = vpack.c.b16 %v607, %v606
    %v715 = vpack.c.b16 %v609, %v608
    %v716 = vpack.c.b16 %v611, %v610
    %v717 = vpack.c.b16 %v613, %v612
    %v718 = vpack.c.b16 %v615, %v614
    %v719 = vpack.c.b16 %v617, %v616
    %v720 = vpack.c.b16 %v619, %v618
    %v721 = vpack.c.b16 %v621, %v620
    %v722 = vpack.c.b16 %v623, %v622
    %v723 = vpack.c.b16 %v625, %v624
    %v724 = vpack.c.b16 %v627, %v626
    %v725 = vpack.c.b16 %v629, %v628
    %v726 = vpack.c.b16 %v631, %v630
    %v727 = vpack.c.b16 %v633, %v632
    %v728 = vpack.c.b16 %v635, %v634
    %v729 = vpack.c.b16 %v637, %v636
    %v730 = vpack.c.b16 %v639, %v638
    %v731 = vpack.c.b16 %v641, %v640
    %v732 = vpack.c.b16 %v643, %v642
    %v733 = vpack.c.b16 %v645, %v644
    %v734 = vpack.c.b16 %v647, %v646
    %v735 = vpack.c.b16 %v649, %v648
    %v736 = vpack.c.b16 %v651, %v650
    %v737 = vpack.c.b16 %v653, %v652
    %v738 = vpack.c.b16 %v655, %v654
    %v739 = vpack.c.b16 %v657, %v656
    %v740 = vpack.c.b16 %v659, %v658
    %v741 = vpack.c.b16 %v661, %v660
    %v742 = vpack.c.b16 %v663, %v662
    %v743 = vpack.c.b16 %v665, %v664
    %v744 = vpack.c.b16 %v667, %v666
    %v745 = vpack.c.b16 %v669, %v668
    %v746 = vpack.c.b16 %v671, %v670
    %v747 = vpack.c.b16 %v673, %v672
    %v748 = vpack.c.b16 %v675, %v674
    %v749 = vpack.c.b16 %v677, %v676
    %822 = vmatprep.subr.bf16.mxu0 0
    %823 = vmatpush1.bf16.msra.mxu0 %v678
    %824 = vmatprep.subr.bf16.mxu0 0
    %825 = vmatpush1.bf16.msra.mxu0 %v679
    %826 = vmatprep.subr.bf16.mxu0 0
    %827 = vmatpush1.bf16.msra.mxu0 %v680
    %828 = vmatprep.subr.bf16.mxu0 0
    %829 = vmatpush1.bf16.msra.mxu0 %v681
    %830 = vmatprep.subr.bf16.mxu0 0
    %831 = vmatpush1.bf16.msra.mxu0 %v682
    %832 = vmatprep.subr.bf16.mxu0 0
    %833 = vmatpush1.bf16.msra.mxu0 %v683
    %834 = vmatprep.subr.bf16.mxu0 0
    %835 = vmatpush1.bf16.msra.mxu0 %v684
    %836 = vmatprep.subr.bf16.mxu0 0
    %837 = vmatpush1.bf16.msra.mxu0 %v685
    %838 = vmatprep.subr.bf16.mxu0 0
    %839 = vmatpush1.bf16.msra.mxu0 %v686
    %840 = vmatprep.subr.bf16.mxu0 0
    %841 = vmatpush1.bf16.msra.mxu0 %v687
    %842 = vmatprep.subr.bf16.mxu0 0
    %843 = vmatpush1.bf16.msra.mxu0 %v688
    %844 = vmatprep.subr.bf16.mxu0 0
    %845 = vmatpush1.bf16.msra.mxu0 %v689
    %846 = vmatprep.subr.bf16.mxu0 0
    %847 = vmatpush1.bf16.msra.mxu0 %v690
    %848 = vmatprep.subr.bf16.mxu0 0
    %849 = vmatpush1.bf16.msra.mxu0 %v691
    %850 = vmatprep.subr.bf16.mxu0 0
    %851 = vmatpush1.bf16.msra.mxu0 %v692
    %852 = vmatprep.subr.bf16.mxu0 0
    %853 = vmatpush1.bf16.msra.mxu0 %v693
    %854 = vmatprep.mubr.bf16.mxu0 %v319
    %855 = vmatmul.mubr.bf16.gmra.mrb[0].mxu0 %v318
    %v856 = vpop.f32.mrb[0].mxu0
    %v857 = vadd.f32 0.0, %v856
    %v858 = vpop.f32.mrb[0].mxu0
    %v859 = vpop.f32.mrb[0].mxu0
    %v860 = vadd.f32 0.0, %v859
    %v861 = vpop.f32.mrb[0].mxu0
    %862 = vmatprep.mubr.bf16.mxu0 %v328
    %863 = vmatmul.mubr.bf16.gmra.mrb[0].mxu0 %v327
    %v864 = vpop.f32.mrb[0].mxu0
    %v865 = vadd.f32 0.0, %v864
    %v866 = vpop.f32.mrb[0].mxu0
    %v867 = vpop.f32.mrb[0].mxu0
    %v868 = vadd.f32 0.0, %v867
    %v869 = vpop.f32.mrb[0].mxu0
    %870 = vmatprep.mubr.bf16.mxu0 %v337
    %871 = vmatmul.mubr.bf16.gmra.mrb[0].mxu0 %v336
    %v872 = vpop.f32.mrb[0].mxu0
    %v873 = vadd.f32 0.0, %v872
    %v874 = vpop.f32.mrb[0].mxu0
    %v875 = vpop.f32.mrb[0].mxu0
    %v876 = vadd.f32 0.0, %v875
    %v877 = vpop.f32.mrb[0].mxu0
    %878 = vmatprep.mubr.bf16.mxu0 %v346
    %879 = vmatmul.mubr.bf16.gmra.mrb[0].mxu0 %v345
    %v880 = vpop.f32.mrb[0].mxu0
    %v881 = vadd.f32 0.0, %v880
    %v882 = vpop.f32.mrb[0].mxu0
    %v883 = vpop.f32.mrb[0].mxu0
    %v884 = vadd.f32 0.0, %v883
    %v885 = vpop.f32.mrb[0].mxu0
    %886 = vdwg.mxu0
    %887 = vmatprep.subr.bf16.mxu0 0
    %888 = vmatpush1.bf16.msra.mxu0 %v694
    %889 = vmatprep.subr.bf16.mxu0 0
    %890 = vmatpush1.bf16.msra.mxu0 %v695
    %891 = vmatprep.subr.bf16.mxu0 0
    %892 = vmatpush1.bf16.msra.mxu0 %v696
    %893 = vmatprep.subr.bf16.mxu0 0
    %894 = vmatpush1.bf16.msra.mxu0 %v697
    %895 = vmatprep.subr.bf16.mxu0 0
    %896 = vmatpush1.bf16.msra.mxu0 %v698
    %897 = vmatprep.subr.bf16.mxu0 0
    %898 = vmatpush1.bf16.msra.mxu0 %v699
    %899 = vmatprep.subr.bf16.mxu0 0
    %900 = vmatpush1.bf16.msra.mxu0 %v700
    %901 = vmatprep.subr.bf16.mxu0 0
    %902 = vmatpush1.bf16.msra.mxu0 %v701
    %903 = vmatprep.subr.bf16.mxu0 0
    %904 = vmatpush1.bf16.msra.mxu0 %v702
    %905 = vmatprep.subr.bf16.mxu0 0
    %906 = vmatpush1.bf16.msra.mxu0 %v703
    %907 = vmatprep.subr.bf16.mxu0 0
    %908 = vmatpush1.bf16.msra.mxu0 %v704
    %909 = vmatprep.subr.bf16.mxu0 0
    %910 = vmatpush1.bf16.msra.mxu0 %v705
    %911 = vmatprep.subr.bf16.mxu0 0
    %912 = vmatpush1.bf16.msra.mxu0 %v706
    %913 = vmatprep.subr.bf16.mxu0 0
    %914 = vmatpush1.bf16.msra.mxu0 %v707
    %915 = vmatprep.subr.bf16.mxu0 0
    %916 = vmatpush1.bf16.msra.mxu0 %v708
    %917 = vmatprep.subr.bf16.mxu0 0
    %918 = vmatpush1.bf16.msra.mxu0 %v709
    %919 = vmatprep.mubr.bf16.mxu0 %v321
    %920 = vmatmul.mubr.bf16.gmra.mrb[0].mxu0 %v320
    %v921 = vpop.f32.mrb[0].mxu0
    %v922 = vadd.f32 %v857, %v921
    %v923 = vpop.f32.mrb[0].mxu0
    %v924 = vpop.f32.mrb[0].mxu0
    %v925 = vadd.f32 %v860, %v924
    %v926 = vpop.f32.mrb[0].mxu0
    %927 = vmatprep.mubr.bf16.mxu0 %v330
    %928 = vmatmul.mubr.bf16.gmra.mrb[0].mxu0 %v329
    %v929 = vpop.f32.mrb[0].mxu0
    %v930 = vadd.f32 %v865, %v929
    %v931 = vpop.f32.mrb[0].mxu0
    %v932 = vpop.f32.mrb[0].mxu0
    %v933 = vadd.f32 %v868, %v932
    %v934 = vpop.f32.mrb[0].mxu0
    %935 = vmatprep.mubr.bf16.mxu0 %v339
    %936 = vmatmul.mubr.bf16.gmra.mrb[0].mxu0 %v338
    %v937 = vpop.f32.mrb[0].mxu0
    %v938 = vadd.f32 %v873, %v937
    %v939 = vpop.f32.mrb[0].mxu0
    %v940 = vpop.f32.mrb[0].mxu0
    %v941 = vadd.f32 %v876, %v940
    %v942 = vpop.f32.mrb[0].mxu0
    %943 = vmatprep.mubr.bf16.mxu0 %v348
    %944 = vmatmul.mubr.bf16.gmra.mrb[0].mxu0 %v347
    %v945 = vpop.f32.mrb[0].mxu0
    %v946 = vadd.f32 %v881, %v945
    %v947 = vpop.f32.mrb[0].mxu0
    %v948 = vpop.f32.mrb[0].mxu0
    %v949 = vadd.f32 %v884, %v948
    %v950 = vpop.f32.mrb[0].mxu0
    %951 = vdwg.mxu0
    %952 = vmatprep.subr.bf16.mxu0 0
    %953 = vmatpush1.bf16.msra.mxu0 %v710
    %954 = vmatprep.subr.bf16.mxu0 0
    %955 = vmatpush1.bf16.msra.mxu0 %v711
    %956 = vmatprep.subr.bf16.mxu0 0
    %957 = vmatpush1.bf16.msra.mxu0 %v712
    %958 = vmatprep.subr.bf16.mxu0 0
    %959 = vmatpush1.bf16.msra.mxu0 %v713
    %960 = vmatprep.subr.bf16.mxu0 0
    %961 = vmatpush1.bf16.msra.mxu0 %v714
    %962 = vmatprep.subr.bf16.mxu0 0
    %963 = vmatpush1.bf16.msra.mxu0 %v715
    %964 = vmatprep.subr.bf16.mxu0 0
    %965 = vmatpush1.bf16.msra.mxu0 %v716
    %966 = vmatprep.subr.bf16.mxu0 0
    %967 = vmatpush1.bf16.msra.mxu0 %v717
    %968 = vmatprep.subr.bf16.mxu0 0
    %969 = vmatpush1.bf16.msra.mxu0 %v718
    %970 = vmatprep.subr.bf16.mxu0 0
    %971 = vmatpush1.bf16.msra.mxu0 %v719
    %972 = vmatprep.subr.bf16.mxu0 0
    %973 = vmatpush1.bf16.msra.mxu0 %v720
    %974 = vmatprep.subr.bf16.mxu0 0
    %975 = vmatpush1.bf16.msra.mxu0 %v721
    %976 = vmatprep.subr.bf16.mxu0 0
    %977 = vmatpush1.bf16.msra.mxu0 %v722
    %978 = vmatprep.subr.bf16.mxu0 0
    %979 = vmatpush1.bf16.msra.mxu0 %v723
    %980 = vmatprep.subr.bf16.mxu0 0
    %981 = vmatpush1.bf16.msra.mxu0 %v724
    %982 = vmatprep.subr.bf16.mxu0 0
    %983 = vmatpush1.bf16.msra.mxu0 %v725
    %984 = vmatprep.mubr.bf16.mxu0 %v323
    %985 = vmatmul.mubr.bf16.gmra.mrb[0].mxu0 %v322
    %v986 = vpop.f32.mrb[0].mxu0
    %v987 = vadd.f32 %v922, %v986
    %v988 = vpop.f32.mrb[0].mxu0
    %v989 = vpop.f32.mrb[0].mxu0
    %v990 = vadd.f32 %v925, %v989
    %v991 = vpop.f32.mrb[0].mxu0
    %992 = vmatprep.mubr.bf16.mxu0 %v332
    %993 = vmatmul.mubr.bf16.gmra.mrb[0].mxu0 %v331
    %v994 = vpop.f32.mrb[0].mxu0
    %v995 = vadd.f32 %v930, %v994
    %v996 = vpop.f32.mrb[0].mxu0
    %v997 = vpop.f32.mrb[0].mxu0
    %v998 = vadd.f32 %v933, %v997
    %v999 = vpop.f32.mrb[0].mxu0
    %1000 = vmatprep.mubr.bf16.mxu0 %v341
    %1001 = vmatmul.mubr.bf16.gmra.mrb[0].mxu0 %v340
    %v1002 = vpop.f32.mrb[0].mxu0
    %v1003 = vadd.f32 %v938, %v1002
    %v1004 = vpop.f32.mrb[0].mxu0
    %v1005 = vpop.f32.mrb[0].mxu0
    %v1006 = vadd.f32 %v941, %v1005
    %v1007 = vpop.f32.mrb[0].mxu0
    %1008 = vmatprep.mubr.bf16.mxu0 %v350
    %1009 = vmatmul.mubr.bf16.gmra.mrb[0].mxu0 %v349
    %v1010 = vpop.f32.mrb[0].mxu0
    %v1011 = vadd.f32 %v946, %v1010
    %v1012 = vpop.f32.mrb[0].mxu0
    %v1013 = vpop.f32.mrb[0].mxu0
    %v1014 = vadd.f32 %v949, %v1013
    %v1015 = vpop.f32.mrb[0].mxu0
    %1016 = vdwg.mxu0
    %1017 = vmatprep.subr.bf16.mxu0 0
    %1018 = vmatpush1.bf16.msra.mxu0 %v726
    %1019 = vmatprep.subr.bf16.mxu0 0
    %1020 = vmatpush1.bf16.msra.mxu0 %v727
    %1021 = vmatprep.subr.bf16.mxu0 0
    %1022 = vmatpush1.bf16.msra.mxu0 %v728
    %1023 = vmatprep.subr.bf16.mxu0 0
    %1024 = vmatpush1.bf16.msra.mxu0 %v729
    %1025 = vmatprep.subr.bf16.mxu0 0
    %1026 = vmatpush1.bf16.msra.mxu0 %v730
    %1027 = vmatprep.subr.bf16.mxu0 0
    %1028 = vmatpush1.bf16.msra.mxu0 %v731
    %1029 = vmatprep.subr.bf16.mxu0 0
    %1030 = vmatpush1.bf16.msra.mxu0 %v732
    %1031 = vmatprep.subr.bf16.mxu0 0
    %1032 = vmatpush1.bf16.msra.mxu0 %v733
    %1033 = vmatprep.subr.bf16.mxu0 0
    %1034 = vmatpush1.bf16.msra.mxu0 %v734
    %1035 = vmatprep.subr.bf16.mxu0 0
    %1036 = vmatpush1.bf16.msra.mxu0 %v735
    %1037 = vmatprep.subr.bf16.mxu0 0
    %1038 = vmatpush1.bf16.msra.mxu0 %v736
    %1039 = vmatprep.subr.bf16.mxu0 0
    %1040 = vmatpush1.bf16.msra.mxu0 %v737
    %1041 = vmatprep.subr.bf16.mxu0 0
    %1042 = vmatpush1.bf16.msra.mxu0 %v738
    %1043 = vmatprep.subr.bf16.mxu0 0
    %1044 = vmatpush1.bf16.msra.mxu0 %v739
    %1045 = vmatprep.subr.bf16.mxu0 0
    %1046 = vmatpush1.bf16.msra.mxu0 %v740
    %1047 = vmatprep.subr.bf16.mxu0 0
    %1048 = vmatpush1.bf16.msra.mxu0 %v741
    %1049 = vmatprep.mubr.bf16.mxu0 %v325
    %1050 = vmatmul.mubr.bf16.gmra.mrb[0].mxu0 %v324
    %v1051 = vpop.f32.mrb[0].mxu0
    %v1052 = vadd.f32 %v987, %v1051
    %v1053 = vpop.f32.mrb[0].mxu0
    %v1054 = vpop.f32.mrb[0].mxu0
    %v1055 = vadd.f32 %v990, %v1054
    %v1056 = vpop.f32.mrb[0].mxu0
    %1057 = vmatprep.mubr.bf16.mxu0 %v334
    %1058 = vmatmul.mubr.bf16.gmra.mrb[0].mxu0 %v333
    %v1059 = vpop.f32.mrb[0].mxu0
    %v1060 = vadd.f32 %v995, %v1059
    %v1061 = vpop.f32.mrb[0].mxu0
    %v1062 = vpop.f32.mrb[0].mxu0
    %v1063 = vadd.f32 %v998, %v1062
    %v1064 = vpop.f32.mrb[0].mxu0
    %1065 = vmatprep.mubr.bf16.mxu0 %v343
    %1066 = vmatmul.mubr.bf16.gmra.mrb[0].mxu0 %v342
    %v1067 = vpop.f32.mrb[0].mxu0
    %v1068 = vadd.f32 %v1003, %v1067
    %v1069 = vpop.f32.mrb[0].mxu0
    %v1070 = vpop.f32.mrb[0].mxu0
    %v1071 = vadd.f32 %v1006, %v1070
    %v1072 = vpop.f32.mrb[0].mxu0
    %1073 = vmatprep.mubr.bf16.mxu0 %v352
    %1074 = vmatmul.mubr.bf16.gmra.mrb[0].mxu0 %v351
    %v1075 = vpop.f32.mrb[0].mxu0
    %v1076 = vadd.f32 %v1011, %v1075
    %v1077 = vpop.f32.mrb[0].mxu0
    %v1078 = vpop.f32.mrb[0].mxu0
    %v1079 = vadd.f32 %v1014, %v1078
    %v1080 = vpop.f32.mrb[0].mxu0
    %1081 = vdwg.mxu0
    %1082 = vmatprep.subr.bf16.mxu0 0
    %1083 = vmatpush1.bf16.msra.mxu0 %v742
    %1084 = vmatprep.subr.bf16.mxu0 0
    %1085 = vmatpush1.bf16.msra.mxu0 %v743
    %1086 = vmatprep.subr.bf16.mxu0 0
    %1087 = vmatpush1.bf16.msra.mxu0 %v744
    %1088 = vmatprep.subr.bf16.mxu0 0
    %1089 = vmatpush1.bf16.msra.mxu0 %v745
    %1090 = vmatprep.subr.bf16.mxu0 0
    %1091 = vmatpush1.bf16.msra.mxu0 %v746
    %1092 = vmatprep.subr.bf16.mxu0 0
    %1093 = vmatpush1.bf16.msra.mxu0 %v747
    %1094 = vmatprep.subr.bf16.mxu0 0
    %1095 = vmatpush1.bf16.msra.mxu0 %v748
    %1096 = vmatprep.subr.bf16.mxu0 0
    %1097 = vmatpush1.bf16.msra.mxu0 %v749
    %1098 = vmatprep.subr.bf16.mxu0 0
    %1099 = vmatpush1.bf16.msra.mxu0 0
    %1100 = vmatprep.subr.bf16.mxu0 0
    %1101 = vmatpush1.bf16.msra.mxu0 0
    %1102 = vmatprep.subr.bf16.mxu0 0
    %1103 = vmatpush1.bf16.msra.mxu0 0
    %1104 = vmatprep.subr.bf16.mxu0 0
    %1105 = vmatpush1.bf16.msra.mxu0 0
    %1106 = vmatprep.subr.bf16.mxu0 0
    %1107 = vmatpush1.bf16.msra.mxu0 0
    %1108 = vmatprep.subr.bf16.mxu0 0
    %1109 = vmatpush1.bf16.msra.mxu0 0
    %1110 = vmatprep.subr.bf16.mxu0 0
    %1111 = vmatpush1.bf16.msra.mxu0 0
    %1112 = vmatprep.subr.bf16.mxu0 0
    %1113 = vmatpush1.bf16.msra.mxu0 0
    %1114 = vmatprep.mubr.bf16.mxu0 0
    %1115 = vmatmul.mubr.bf16.gmra.mrb[0].mxu0 %v326
    %v1116 = vpop.f32.mrb[0].mxu0
    %v1117 = vadd.f32 %v1052, %v1116
    %v1118 = vpop.f32.mrb[0].mxu0
    %v1119 = vpop.f32.mrb[0].mxu0
    %v1120 = vadd.f32 %v1055, %v1119
    %v1121 = vpop.f32.mrb[0].mxu0
    %1122 = vmatprep.mubr.bf16.mxu0 0
    %1123 = vmatmul.mubr.bf16.gmra.mrb[0].mxu0 %v335
    %v1124 = vpop.f32.mrb[0].mxu0
    %v1125 = vadd.f32 %v1060, %v1124
    %v1126 = vpop.f32.mrb[0].mxu0
    %v1127 = vpop.f32.mrb[0].mxu0
    %v1128 = vadd.f32 %v1063, %v1127
    %v1129 = vpop.f32.mrb[0].mxu0
    %1130 = vmatprep.mubr.bf16.mxu0 0
    %1131 = vmatmul.mubr.bf16.gmra.mrb[0].mxu0 %v344
    %v1132 = vpop.f32.mrb[0].mxu0
    %v1133 = vadd.f32 %v1068, %v1132
    %v1134 = vpop.f32.mrb[0].mxu0
    %v1135 = vpop.f32.mrb[0].mxu0
    %v1136 = vadd.f32 %v1071, %v1135
    %v1137 = vpop.f32.mrb[0].mxu0
    %1138 = vmatprep.mubr.bf16.mxu0 0
    %1139 = vmatmul.mubr.bf16.gmra.mrb[0].mxu0 %v353
    %v1140 = vpop.f32.mrb[0].mxu0
    %v1141 = vadd.f32 %v1076, %v1140
    %v1142 = vpop.f32.mrb[0].mxu0
    %v1143 = vpop.f32.mrb[0].mxu0
    %v1144 = vadd.f32 %v1079, %v1143
    %v1145 = vpop.f32.mrb[0].mxu0
    %1146 = vdwg.mxu0
    %v1147 = vld [vmem:[%s2] sm:$0x1]
    %v1149 = vlaneseq
    %v1150 = vshrl.u32 %v1149, 7
    %v1151 = vsub.s32 0, %v1150
    %v1152 = vrot.slane %v1147, %v1151
    %v1154 = vmul.f32 %v1117, %v1152
    %v1155 = vmul.f32 %v1120, %v1152
    %v1156 = vmul.f32 %v1125, %v1152
    %v1157 = vmul.f32 %v1128, %v1152
    %v1158 = vmul.f32 %v1133, %v1152
    %v1159 = vmul.f32 %v1136, %v1152
    %v1160 = vmul.f32 %v1141, %v1152
    %v1161 = vmul.f32 %v1144, %v1152
    %v1162 = vld [vmem:[%s3] sm:$0x1]
    %v1164 = vlaneseq
    %v1165 = vshrl.u32 %v1164, 7
    %v1166 = vsub.s32 0, %v1165
    %v1167 = vrot.slane %v1162, %v1166
    %v1169 = vadd.f32 %v1154, %v1167
    %v1170 = vadd.f32 %v1155, %v1167
    %v1171 = vadd.f32 %v1156, %v1167
    %v1172 = vadd.f32 %v1157, %v1167
    %v1173 = vadd.f32 %v1158, %v1167
    %v1174 = vadd.f32 %v1159, %v1167
    %v1175 = vadd.f32 %v1160, %v1167
    %v1176 = vadd.f32 %v1161, %v1167
    %v1177 = vld [vmem:[%s4] sm:$0xf]
    %v1178 = vld [vmem:[%s4 + $0x4] sm:$0xf]
    %v1179 = vld [vmem:[%s4 + $0x8] sm:$0xf]
    %v1180 = vld [vmem:[%s4 + $0xc] sm:$0xf]
    %v1181 = vld [vmem:[%s4 + $0x10] sm:$0xf]
    %v1182 = vld [vmem:[%s4 + $0x14] sm:$0xf]
    %v1183 = vld [vmem:[%s4 + $0x18] sm:$0xf]
    %v1184 = vld [vmem:[%s4 + $0x1c] sm:$0xf]
    %v1185 = vunpack.c.l.bf16 %v1177
    %v1186 = vunpack.c.l.bf16 %v1178
    %v1187 = vunpack.c.l.bf16 %v1179
    %v1188 = vunpack.c.l.bf16 %v1180
    %v1189 = vunpack.c.l.bf16 %v1181
    %v1190 = vunpack.c.l.bf16 %v1182
    %v1191 = vunpack.c.l.bf16 %v1183
    %v1192 = vunpack.c.l.bf16 %v1184
    %v1193 = vadd.f32 %v1169, %v1185
    %v1194 = vadd.f32 %v1170, %v1186
    %v1195 = vadd.f32 %v1171, %v1187
    %v1196 = vadd.f32 %v1172, %v1188
    %v1197 = vadd.f32 %v1173, %v1189
    %v1198 = vadd.f32 %v1174, %v1190
    %v1199 = vadd.f32 %v1175, %v1191
    %v1200 = vadd.f32 %v1176, %v1192
    %v1201 = vmax.f32 %v1193, 0.0
    %v1202 = vmax.f32 %v1194, 0.0
    %v1203 = vmax.f32 %v1195, 0.0
    %v1204 = vmax.f32 %v1196, 0.0
    %v1205 = vmax.f32 %v1197, 0.0
    %v1206 = vmax.f32 %v1198, 0.0
    %v1207 = vmax.f32 %v1199, 0.0
    %v1208 = vmax.f32 %v1200, 0.0
    %v1209 = vlaneseq
    %v1210 = vshrl.u32 %v1209, 7
    %v1211 = vadd.s32 %v1210, 8
    %vm1212 = vcmp.lt.s32.totalorder %v1210, 9
    %vm1213 = vcmp.lt.s32.totalorder %v1211, 9
    %v1214 = vsel %vm1212, 1, 0
    %v1215 = vsel %vm1213, 1, 0
    %vm1216 = vcmp.eq.s32.totalorder %v1214, 1
    %vm1217 = vcmp.eq.s32.totalorder %v1215, 1
    %v1218 = vsel %vm1216, %v1201, 0.0
    %v1219 = vsel %vm1217, %v1202, 0.0
    %v1220 = vsel %vm1216, %v1203, 0.0
    %v1221 = vsel %vm1217, %v1204, 0.0
    %v1222 = vsel %vm1216, %v1205, 0.0
    %v1223 = vsel %vm1217, %v1206, 0.0
    %v1224 = vsel %vm1216, %v1207, 0.0
    %v1225 = vsel %vm1217, %v1208, 0.0
    %v1226 = vadd.f32 %v1218, %v1219
    %v1227 = vrot.slane %v1226, 4
    %v1228 = vadd.f32 %v1226, %v1227
    %v1229 = vrot.slane %v1228, 2
    %v1230 = vadd.f32 %v1228, %v1229
    %v1231 = vrot.slane %v1230, 1
    %v1232 = vadd.f32 %v1230, %v1231
    %v1233 = vadd.f32 %v1220, %v1221
    %v1234 = vrot.slane %v1233, 4
    %v1235 = vadd.f32 %v1233, %v1234
    %v1236 = vrot.slane %v1235, 2
    %v1237 = vadd.f32 %v1235, %v1236
    %v1238 = vrot.slane %v1237, 1
    %v1239 = vadd.f32 %v1237, %v1238
    %v1240 = vadd.f32 %v1222, %v1223
    %v1241 = vrot.slane %v1240, 4
    %v1242 = vadd.f32 %v1240, %v1241
    %v1243 = vrot.slane %v1242, 2
    %v1244 = vadd.f32 %v1242, %v1243
    %v1245 = vrot.slane %v1244, 1
    %v1246 = vadd.f32 %v1244, %v1245
    %v1247 = vadd.f32 %v1224, %v1225
    %v1248 = vrot.slane %v1247, 4
    %v1249 = vadd.f32 %v1247, %v1248
    %v1250 = vrot.slane %v1249, 2
    %v1251 = vadd.f32 %v1249, %v1250
    %v1252 = vrot.slane %v1251, 1
    %v1253 = vadd.f32 %v1251, %v1252
    %v1254 = vmul.f32 %v1232, 0.11111111
    %v1255 = vmul.f32 %v1239, 0.11111111
    %v1256 = vmul.f32 %v1246, 0.11111111
    %v1257 = vmul.f32 %v1253, 0.11111111
    %vm1262 = vcmask 1041409
    %v1263 = vsel %vm1262, %v1255, %v1254
    %vm1264 = vcmask 1042434
    %v1265 = vsel %vm1264, %v1256, %v1263
    %vm1266 = vcmask 1043459
    %v1267 = vsel %vm1266, %v1257, %v1265
    %1269 = vst [vmem:[#allocation2] sm:$0xf] %v1267
    // Predicated region
    $region22: #{pool_to_feature_vector.7} parent=1 // pred_check
      _
    $region23: #{pool_to_feature_vector.7} parent=1 // pred_check_branch
      %1271 = sbr.rel (0) target = $region25
    $region24: #{pool_to_feature_vector.7} parent=1 // pred_region
      %s1273 = ssub.s32 64, 64
      %1274 = vsyncadd [#allocation3], %s1273
      %s1276 = sshll.u32 [#allocation2], 4
      %s1277 = int_to_ptr.vmem [resolvable:$true] %s1276
      %1279 = dma.vmem_to_hbm [thread:$0]  %s1277, 64, %s5, [#allocation3]
    $region25: #{pool_to_feature_vector.7} parent=1 // pred_fallthru
      _
    // Predicated region
    $region26: #{pool_to_feature_vector.7} parent=1 // pred_check
      _
    $region27: #{pool_to_feature_vector.7} parent=1 // pred_check_branch
      %1281 = sbr.rel (0) target = $region29
    $region28: #{pool_to_feature_vector.7} parent=1 // pred_region
      %1282 = dma.done [#allocation3], 64
    $region29: #{pool_to_feature_vector.7} parent=1 // pred_fallthru
      _
    %1283 = vsyncpa [#allocation3], 1

</llo_original>
